<compile_context>
chip_gen: v5e
topology: v5e:2x2
jax: 0.10.0
libtpu: 0.0.40
codegen_flags: <defaults>
</compile_context>

<pallas_src>
import jax
import jax.numpy as jnp
import numpy as np
from jax.experimental import pallas as pl
from jax.experimental.pallas import tpu as pltpu


# ------------------------------- fused kernel -------------------------------

def _cnn_fused_kernel(xr_ref, w1_ref, b1_ref, w2_ref, b2_ref, wfc_ref, bfc_ref,
                      out_ref):
    bt = out_ref.shape[0]                          # images in this batch tile
    xr = xr_ref[...].astype(jnp.bfloat16)          # (bt, 28, 28); rows stored
                                                   # as [even h | odd h]

    # ---- conv1: one MXU matmul per output-row parity (K=140, N=512) ----
    # w1_ref is a banded matrix: row = di*28 + j_in,
    # col = pj*256 + j1*16 + co  (output col j = 2*j1 + pj, j1 padded to 16).
    def conv1_rows(p):
        pieces = []
        for di in range(5):
            t = p + di                             # input row = 2*i1 + t
            off = (t % 2) * 14 + t // 2            # row offset in parity layout
            pieces.append(xr[:, off:off + 12, :])  # (bt, 12, 28)
        lhs = jnp.concatenate(pieces, axis=-1).reshape(bt * 12, 140)
        return jnp.dot(lhs, w1_ref[...], preferred_element_type=jnp.float32)

    z1a = conv1_rows(0)                            # conv1 rows i = 2*i1
    z1b = conv1_rows(1)                            # conv1 rows i = 2*i1 + 1

    # ---- maxpool1 (2x2): row-pair max + aligned lane-half max ----
    m1 = jnp.maximum(z1a, z1b)                     # pool over output-row pairs
    m1 = jnp.maximum(m1[:, :256], m1[:, 256:])     # pool over output-col pairs
    # bias + ReLU commute with max (same bias inside every pooling window)
    p1 = jnp.maximum(m1 + b1_ref[...], 0.0)        # (bt*12, 256)
    p1 = p1.reshape(bt, 12, 256).astype(jnp.bfloat16)   # (b, h1, (w1, c))

    # ---- conv2: ONE matmul, K = 5*256 = 1280, N = 256 ----
    # w2_ref: row = di*256 + w1*16 + c, col = pj*128 + j2*32 + co (j = 2*j2+pj)
    lhs2 = jnp.concatenate([p1[:, di:di + 8, :] for di in range(5)], axis=-1)
    lhs2 = lhs2.reshape(bt * 8, 1280)
    z2 = jnp.dot(lhs2, w2_ref[...], preferred_element_type=jnp.float32)  # (bt*8, 256)

    # ---- maxpool2 (2x2) + NCHW flatten ----
    m2 = jnp.maximum(z2[:, :128], z2[:, 128:])     # pool over output-col pairs
    m2 = m2.reshape(bt, 8, 128)                    # rows i = conv2 output row
    feat = jnp.concatenate(
        [jnp.maximum(m2[:, 2 * k, :], m2[:, 2 * k + 1, :]) for k in range(4)],
        axis=-1)                                   # (bt, 512); lane = i2*128 + j2*32 + c
    feat = jnp.maximum(feat + b2_ref[...], 0.0)    # conv2 bias + ReLU (post-pool)

    # ---- fc1 (flatten order folded into wfc_ref host-side) ----
    out_ref[...] = (jnp.dot(feat, wfc_ref[...], preferred_element_type=jnp.float32)
                    + bfc_ref[...])


# ------------------------- host-side weight folding -------------------------

def _fold_conv1_weight(w1):
    """B1[di*28 + jin, pj*256 + j1*16 + co] = w1[co, 0, di, jin - (2*j1 + pj)]."""
    w1c = w1.reshape(16, 5, 5)                      # (co, di, dj)
    r = np.arange(140)[:, None]
    l = np.arange(512)[None, :]
    di, jin = r // 28, r % 28
    pj, j1, co = l // 256, (l % 256) // 16, l % 16
    j = 2 * j1 + pj
    dj = jin - j
    valid = (dj >= 0) & (dj <= 4) & (j <= 23)       # j1 >= 12 columns stay zero
    vals = w1c[co, di, np.clip(dj, 0, 4)]
    return jnp.where(jnp.asarray(valid), vals, 0.0).astype(jnp.bfloat16)


def _fold_conv2_weight(w2):
    """B2[di*256 + w1*16 + c, pj*128 + j2*32 + co] = w2[co, c, di, w1 - (2*j2 + pj)]."""
    r = np.arange(1280)[:, None]
    l = np.arange(256)[None, :]
    di, w1pos, c = r // 256, (r % 256) // 16, r % 16
    pj, j2, co = l // 128, (l % 128) // 32, l % 32
    dj = w1pos - (2 * j2 + pj)
    valid = (dj >= 0) & (dj <= 4)                   # w1 >= 12 (padded) rows stay zero
    vals = w2[co, c, di, np.clip(dj, 0, 4)]
    return jnp.where(jnp.asarray(valid), vals, 0.0).astype(jnp.bfloat16)


def _fold_fc_weight(wfc):
    """Wf[i2*128 + j2*32 + c, o] = wfc[o, c*16 + i2*4 + j2]  (NCHW flatten folded)."""
    r = np.arange(512)[:, None]
    o = np.arange(10)[None, :]
    i2, j2, c = r // 128, (r % 128) // 32, r % 32
    return wfc[o, c * 16 + i2 * 4 + j2].astype(jnp.float32)


def _pick_bt(n):
    # Prefer >= 2 grid steps (v7x has 2 TensorCores), tiles of up to 32 images.
    for bt in (32, 16, 8):
        if n % bt == 0 and n // bt >= 2:
            return bt
    return n


# --------------------------------- wrapper ----------------------------------

def cnn_forward(x_nchw, params):
    w1, b1, w2, b2, wfc, bfc = params
    N = x_nchw.shape[0]
    bt = _pick_bt(N)

    x = x_nchw[:, 0, :, :].astype(jnp.float32)                     # (N, 28, 28)
    # Parity-reorder input rows (even h then odd h) so the kernel's conv1 row
    # slices are contiguous and maxpool1-over-h is a plain elementwise max.
    xr = jnp.concatenate([x[:, 0::2, :], x[:, 1::2, :]], axis=1)   # (N, 28, 28)

    w1m = _fold_conv1_weight(w1)                                   # (140, 512) bf16
    w2m = _fold_conv2_weight(w2)                                   # (1280, 256) bf16
    wfm = _fold_fc_weight(wfc)                                     # (512, 10) f32
    b1m = jnp.tile(b1.astype(jnp.float32), 16).reshape(1, 256)     # lane = j1*16+co
    b2m = jnp.tile(b2.astype(jnp.float32), 16).reshape(1, 512)     # lane = i2*128+j2*32+c
    bfm = bfc.reshape(1, 10).astype(jnp.float32)

    grid = (N // bt,)
    flops = N * (2 * 24 * 140 * 512 + 2 * 8 * 1280 * 256 + 2 * 512 * 10)
    bytes_accessed = int(N * 28 * 28 * 4 + N * 10 * 4
                         + w1m.size * 2 + w2m.size * 2 + wfm.size * 4
                         + b1m.size * 4 + b2m.size * 4 + bfm.size * 4)

    return pl.pallas_call(
        _cnn_fused_kernel,
        out_shape=jax.ShapeDtypeStruct((N, 10), jnp.float32),
        grid=grid,
        in_specs=[
            pl.BlockSpec((bt, 28, 28), lambda i: (i, 0, 0)),
            pl.BlockSpec((140, 512), lambda i: (0, 0)),
            pl.BlockSpec((1, 256), lambda i: (0, 0)),
            pl.BlockSpec((1280, 256), lambda i: (0, 0)),
            pl.BlockSpec((1, 512), lambda i: (0, 0)),
            pl.BlockSpec((512, 10), lambda i: (0, 0)),
            pl.BlockSpec((1, 10), lambda i: (0, 0)),
        ],
        out_specs=pl.BlockSpec((bt, 10), lambda i: (i, 0)),
        compiler_params=pltpu.CompilerParams(
            dimension_semantics=("parallel",),
            vmem_limit_bytes=32 * 1024 * 1024),
        cost_estimate=pl.CostEstimate(flops=flops, transcendentals=0,
                                      bytes_accessed=bytes_accessed),
    )(xr, w1m, b1m, w2m, b2m, wfm, bfm)


# ------------------------- pure-JAX reference (check) -----------------------

def reference_forward(x_nchw, params):
    w1, b1, w2, b2, wfc, bfc = params
    dn = ('NCHW', 'OIHW', 'NCHW')

    def pool(y):
        return jax.lax.reduce_window(y, -jnp.inf, jax.lax.max,
                                     (1, 1, 2, 2), (1, 1, 2, 2), 'VALID')

    y = jax.lax.conv_general_dilated(x_nchw, w1, (1, 1), 'VALID',
                                     dimension_numbers=dn)
    y = pool(jax.nn.relu(y + b1[None, :, None, None]))
    y = jax.lax.conv_general_dilated(y, w2, (1, 1), 'VALID',
                                     dimension_numbers=dn)
    y = pool(jax.nn.relu(y + b2[None, :, None, None]))
    flat = y.reshape(y.shape[0], -1)
    return flat @ wfc.T + bfc


# ---------------------------------- main -------------------------------------

def init_params(key):
    """Deterministic, PyTorch-default-style uniform init."""
    ks = jax.random.split(key, 6)

    def u(k, shape, fan_in):
        bound = 1.0 / np.sqrt(fan_in)
        return jax.random.uniform(k, shape, jnp.float32, -bound, bound)

    w1 = u(ks[0], (16, 1, 5, 5), 1 * 5 * 5)
    b1 = u(ks[1], (16,), 1 * 5 * 5)
    w2 = u(ks[2], (32, 16, 5, 5), 16 * 5 * 5)
    b2 = u(ks[3], (32,), 16 * 5 * 5)
    wfc = u(ks[4], (10, 32 * 4 * 4), 32 * 4 * 4)
    bfc = u(ks[5], (10,), 32 * 4 * 4)
    return (w1, b1, w2, b2, wfc, bfc)


if __name__ == "__main__":
    key = jax.random.PRNGKey(0)
    kx, kp = jax.random.split(key)

    batch = 16                                    # two "parallel" grid steps of 8
    x = jax.random.normal(kx, (batch, 1, 28, 28), jnp.float32)    # NCHW input
    params = init_params(kp)

    out = jax.block_until_ready(jax.jit(cnn_forward)(x, params))
    assert out.shape == (batch, 10)

    ref = jax.block_until_ready(reference_forward(x, params))
    # bf16 MXU operands (f32 accumulate) -> 2e-2 tolerance vs. the all-f32 reference.
    np.testing.assert_allclose(np.asarray(out), np.asarray(ref),
                               rtol=2e-2, atol=2e-2)

    print("KERNEL_OK")
</pallas_src>

<mosaic_0001>
module attributes {stable_mosaic.version = 11 : i64} {
  func.func @_cnn_fused_kernel(%arg0: i32, %arg1: memref<8x28x28xf32, #tpu.memory_space<vmem>>, %arg2: memref<140x512xbf16, #tpu.memory_space<vmem>>, %arg3: memref<1x256xf32, #tpu.memory_space<vmem>>, %arg4: memref<1280x256xbf16, #tpu.memory_space<vmem>>, %arg5: memref<1x512xf32, #tpu.memory_space<vmem>>, %arg6: memref<512x10xf32, #tpu.memory_space<vmem>>, %arg7: memref<1x10xf32, #tpu.memory_space<vmem>>, %arg8: memref<8x10xf32, #tpu.memory_space<vmem>>) attributes {dimension_semantics = [#tpu.dimension_semantics<parallel>], iteration_bounds = array<i64: 2>, scalar_prefetch = 0 : i64, scratch_operands = 0 : i64, tpu.core_type = #tpu.core_type<tc>, window_params = [{transform_indices = @transform_0, window_bounds = array<i64: 8, 28, 28>}, {pipeline_mode = #tpu.pipeline_mode<synchronous>, transform_indices = @transform_1, window_bounds = array<i64: 140, 512>}, {pipeline_mode = #tpu.pipeline_mode<synchronous>, transform_indices = @transform_2, window_bounds = array<i64: 1, 256>}, {pipeline_mode = #tpu.pipeline_mode<synchronous>, transform_indices = @transform_3, window_bounds = array<i64: 1280, 256>}, {pipeline_mode = #tpu.pipeline_mode<synchronous>, transform_indices = @transform_4, window_bounds = array<i64: 1, 512>}, {pipeline_mode = #tpu.pipeline_mode<synchronous>, transform_indices = @transform_5, window_bounds = array<i64: 512, 10>}, {pipeline_mode = #tpu.pipeline_mode<synchronous>, transform_indices = @transform_6, window_bounds = array<i64: 1, 10>}, {transform_indices = @transform_7, window_bounds = array<i64: 8, 10>}]} {
    %c0 = arith.constant 0 : index
    %c0_0 = arith.constant 0 : index
    %c0_1 = arith.constant 0 : index
    %0 = vector.load %arg1[%c0, %c0_0, %c0_1] : memref<8x28x28xf32, #tpu.memory_space<vmem>>, vector<8x28x28xf32>
    %1 = arith.truncf %0 : vector<8x28x28xf32> to vector<8x28x28xbf16>
    %2 = vector.extract_strided_slice %1 {offsets = [0, 0, 0], sizes = [8, 12, 28], strides = [1, 1, 1]} : vector<8x28x28xbf16> to vector<8x12x28xbf16>
    %3 = vector.extract_strided_slice %1 {offsets = [0, 14, 0], sizes = [8, 12, 28], strides = [1, 1, 1]} : vector<8x28x28xbf16> to vector<8x12x28xbf16>
    %4 = vector.extract_strided_slice %1 {offsets = [0, 1, 0], sizes = [8, 12, 28], strides = [1, 1, 1]} : vector<8x28x28xbf16> to vector<8x12x28xbf16>
    %5 = vector.extract_strided_slice %1 {offsets = [0, 15, 0], sizes = [8, 12, 28], strides = [1, 1, 1]} : vector<8x28x28xbf16> to vector<8x12x28xbf16>
    %6 = vector.extract_strided_slice %1 {offsets = [0, 2, 0], sizes = [8, 12, 28], strides = [1, 1, 1]} : vector<8x28x28xbf16> to vector<8x12x28xbf16>
    %7 = tpu.concatenate %2, %3, %4, %5, %6 in 2 : vector<8x12x28xbf16>, vector<8x12x28xbf16>, vector<8x12x28xbf16>, vector<8x12x28xbf16>, vector<8x12x28xbf16> -> vector<8x12x140xbf16>
    %8 = vector.shape_cast %7 : vector<8x12x140xbf16> to vector<96x140xbf16>
    %c0_2 = arith.constant 0 : index
    %c0_3 = arith.constant 0 : index
    %9 = vector.load %arg2[%c0_2, %c0_3] : memref<140x512xbf16, #tpu.memory_space<vmem>>, vector<140x512xbf16>
    %cst = arith.constant dense<0.000000e+00> : vector<96x512xf32>
    %10 = tpu.matmul %8, %9, %cst {dimension_numbers = #tpu.dot_dimension_numbers<[1], [0], [0], [1], [0, 0, 1, 1], [], []>} : vector<96x140xbf16>, vector<140x512xbf16>, vector<96x512xf32> -> vector<96x512xf32>
    %11 = vector.extract_strided_slice %1 {offsets = [0, 14, 0], sizes = [8, 12, 28], strides = [1, 1, 1]} : vector<8x28x28xbf16> to vector<8x12x28xbf16>
    %12 = vector.extract_strided_slice %1 {offsets = [0, 1, 0], sizes = [8, 12, 28], strides = [1, 1, 1]} : vector<8x28x28xbf16> to vector<8x12x28xbf16>
    %13 = vector.extract_strided_slice %1 {offsets = [0, 15, 0], sizes = [8, 12, 28], strides = [1, 1, 1]} : vector<8x28x28xbf16> to vector<8x12x28xbf16>
    %14 = vector.extract_strided_slice %1 {offsets = [0, 2, 0], sizes = [8, 12, 28], strides = [1, 1, 1]} : vector<8x28x28xbf16> to vector<8x12x28xbf16>
    %15 = vector.extract_strided_slice %1 {offsets = [0, 16, 0], sizes = [8, 12, 28], strides = [1, 1, 1]} : vector<8x28x28xbf16> to vector<8x12x28xbf16>
    %16 = tpu.concatenate %11, %12, %13, %14, %15 in 2 : vector<8x12x28xbf16>, vector<8x12x28xbf16>, vector<8x12x28xbf16>, vector<8x12x28xbf16>, vector<8x12x28xbf16> -> vector<8x12x140xbf16>
    %17 = vector.shape_cast %16 : vector<8x12x140xbf16> to vector<96x140xbf16>
    %c0_4 = arith.constant 0 : index
    %c0_5 = arith.constant 0 : index
    %18 = vector.load %arg2[%c0_4, %c0_5] : memref<140x512xbf16, #tpu.memory_space<vmem>>, vector<140x512xbf16>
    %cst_6 = arith.constant dense<0.000000e+00> : vector<96x512xf32>
    %19 = tpu.matmul %17, %18, %cst_6 {dimension_numbers = #tpu.dot_dimension_numbers<[1], [0], [0], [1], [0, 0, 1, 1], [], []>} : vector<96x140xbf16>, vector<140x512xbf16>, vector<96x512xf32> -> vector<96x512xf32>
    %20 = arith.maximumf %10, %19 : vector<96x512xf32>
    %21 = vector.extract_strided_slice %20 {offsets = [0, 0], sizes = [96, 256], strides = [1, 1]} : vector<96x512xf32> to vector<96x256xf32>
    %22 = vector.extract_strided_slice %20 {offsets = [0, 256], sizes = [96, 256], strides = [1, 1]} : vector<96x512xf32> to vector<96x256xf32>
    %23 = arith.maximumf %21, %22 : vector<96x256xf32>
    %c0_7 = arith.constant 0 : index
    %c0_8 = arith.constant 0 : index
    %24 = vector.load %arg3[%c0_7, %c0_8] : memref<1x256xf32, #tpu.memory_space<vmem>>, vector<1x256xf32>
    %25 = vector.broadcast %24 : vector<1x256xf32> to vector<96x256xf32>
    %26 = arith.addf %23, %25 : vector<96x256xf32>
    %cst_9 = arith.constant 0.000000e+00 : f32
    %27 = vector.broadcast %cst_9 : f32 to vector<96x256xf32>
    %28 = arith.maximumf %26, %27 : vector<96x256xf32>
    %29 = vector.shape_cast %28 : vector<96x256xf32> to vector<8x12x256xf32>
    %30 = arith.truncf %29 : vector<8x12x256xf32> to vector<8x12x256xbf16>
    %31 = vector.extract_strided_slice %30 {offsets = [0, 0, 0], sizes = [8, 8, 256], strides = [1, 1, 1]} : vector<8x12x256xbf16> to vector<8x8x256xbf16>
    %32 = vector.extract_strided_slice %30 {offsets = [0, 1, 0], sizes = [8, 8, 256], strides = [1, 1, 1]} : vector<8x12x256xbf16> to vector<8x8x256xbf16>
    %33 = vector.extract_strided_slice %30 {offsets = [0, 2, 0], sizes = [8, 8, 256], strides = [1, 1, 1]} : vector<8x12x256xbf16> to vector<8x8x256xbf16>
    %34 = vector.extract_strided_slice %30 {offsets = [0, 3, 0], sizes = [8, 8, 256], strides = [1, 1, 1]} : vector<8x12x256xbf16> to vector<8x8x256xbf16>
    %35 = vector.extract_strided_slice %30 {offsets = [0, 4, 0], sizes = [8, 8, 256], strides = [1, 1, 1]} : vector<8x12x256xbf16> to vector<8x8x256xbf16>
    %36 = tpu.concatenate %31, %32, %33, %34, %35 in 2 : vector<8x8x256xbf16>, vector<8x8x256xbf16>, vector<8x8x256xbf16>, vector<8x8x256xbf16>, vector<8x8x256xbf16> -> vector<8x8x1280xbf16>
    %37 = vector.shape_cast %36 : vector<8x8x1280xbf16> to vector<64x1280xbf16>
    %c0_10 = arith.constant 0 : index
    %c0_11 = arith.constant 0 : index
    %38 = vector.load %arg4[%c0_10, %c0_11] : memref<1280x256xbf16, #tpu.memory_space<vmem>>, vector<1280x256xbf16>
    %cst_12 = arith.constant dense<0.000000e+00> : vector<64x256xf32>
    %39 = tpu.matmul %37, %38, %cst_12 {dimension_numbers = #tpu.dot_dimension_numbers<[1], [0], [0], [1], [0, 0, 1, 1], [], []>} : vector<64x1280xbf16>, vector<1280x256xbf16>, vector<64x256xf32> -> vector<64x256xf32>
    %40 = vector.extract_strided_slice %39 {offsets = [0, 0], sizes = [64, 128], strides = [1, 1]} : vector<64x256xf32> to vector<64x128xf32>
    %41 = vector.extract_strided_slice %39 {offsets = [0, 128], sizes = [64, 128], strides = [1, 1]} : vector<64x256xf32> to vector<64x128xf32>
    %42 = arith.maximumf %40, %41 : vector<64x128xf32>
    %43 = vector.shape_cast %42 : vector<64x128xf32> to vector<8x8x128xf32>
    %44 = vector.extract_strided_slice %43 {offsets = [0, 0, 0], sizes = [8, 1, 128], strides = [1, 1, 1]} : vector<8x8x128xf32> to vector<8x1x128xf32>
    %45 = vector.shape_cast %44 : vector<8x1x128xf32> to vector<8x128xf32>
    %46 = vector.extract_strided_slice %43 {offsets = [0, 1, 0], sizes = [8, 1, 128], strides = [1, 1, 1]} : vector<8x8x128xf32> to vector<8x1x128xf32>
    %47 = vector.shape_cast %46 : vector<8x1x128xf32> to vector<8x128xf32>
    %48 = arith.maximumf %45, %47 : vector<8x128xf32>
    %49 = vector.extract_strided_slice %43 {offsets = [0, 2, 0], sizes = [8, 1, 128], strides = [1, 1, 1]} : vector<8x8x128xf32> to vector<8x1x128xf32>
    %50 = vector.shape_cast %49 : vector<8x1x128xf32> to vector<8x128xf32>
    %51 = vector.extract_strided_slice %43 {offsets = [0, 3, 0], sizes = [8, 1, 128], strides = [1, 1, 1]} : vector<8x8x128xf32> to vector<8x1x128xf32>
    %52 = vector.shape_cast %51 : vector<8x1x128xf32> to vector<8x128xf32>
    %53 = arith.maximumf %50, %52 : vector<8x128xf32>
    %54 = vector.extract_strided_slice %43 {offsets = [0, 4, 0], sizes = [8, 1, 128], strides = [1, 1, 1]} : vector<8x8x128xf32> to vector<8x1x128xf32>
    %55 = vector.shape_cast %54 : vector<8x1x128xf32> to vector<8x128xf32>
    %56 = vector.extract_strided_slice %43 {offsets = [0, 5, 0], sizes = [8, 1, 128], strides = [1, 1, 1]} : vector<8x8x128xf32> to vector<8x1x128xf32>
    %57 = vector.shape_cast %56 : vector<8x1x128xf32> to vector<8x128xf32>
    %58 = arith.maximumf %55, %57 : vector<8x128xf32>
    %59 = vector.extract_strided_slice %43 {offsets = [0, 6, 0], sizes = [8, 1, 128], strides = [1, 1, 1]} : vector<8x8x128xf32> to vector<8x1x128xf32>
    %60 = vector.shape_cast %59 : vector<8x1x128xf32> to vector<8x128xf32>
    %61 = vector.extract_strided_slice %43 {offsets = [0, 7, 0], sizes = [8, 1, 128], strides = [1, 1, 1]} : vector<8x8x128xf32> to vector<8x1x128xf32>
    %62 = vector.shape_cast %61 : vector<8x1x128xf32> to vector<8x128xf32>
    %63 = arith.maximumf %60, %62 : vector<8x128xf32>
    %64 = tpu.concatenate %48, %53, %58, %63 in 1 : vector<8x128xf32>, vector<8x128xf32>, vector<8x128xf32>, vector<8x128xf32> -> vector<8x512xf32>
    %c0_13 = arith.constant 0 : index
    %c0_14 = arith.constant 0 : index
    %65 = vector.load %arg5[%c0_13, %c0_14] : memref<1x512xf32, #tpu.memory_space<vmem>>, vector<1x512xf32>
    %66 = vector.broadcast %65 : vector<1x512xf32> to vector<8x512xf32>
    %67 = arith.addf %64, %66 : vector<8x512xf32>
    %cst_15 = arith.constant 0.000000e+00 : f32
    %68 = vector.broadcast %cst_15 : f32 to vector<8x512xf32>
    %69 = arith.maximumf %67, %68 : vector<8x512xf32>
    %c0_16 = arith.constant 0 : index
    %c0_17 = arith.constant 0 : index
    %70 = vector.load %arg6[%c0_16, %c0_17] : memref<512x10xf32, #tpu.memory_space<vmem>>, vector<512x10xf32>
    %cst_18 = arith.constant dense<0.000000e+00> : vector<8x10xf32>
    %71 = tpu.matmul %69, %70, %cst_18 {dimension_numbers = #tpu.dot_dimension_numbers<[1], [0], [0], [1], [0, 0, 1, 1], [], []>} : vector<8x512xf32>, vector<512x10xf32>, vector<8x10xf32> -> vector<8x10xf32>
    %c0_19 = arith.constant 0 : index
    %c0_20 = arith.constant 0 : index
    %72 = vector.load %arg7[%c0_19, %c0_20] : memref<1x10xf32, #tpu.memory_space<vmem>>, vector<1x10xf32>
    %73 = vector.broadcast %72 : vector<1x10xf32> to vector<8x10xf32>
    %74 = arith.addf %71, %73 : vector<8x10xf32>
    %c0_21 = arith.constant 0 : index
    %c0_22 = arith.constant 0 : index
    %75 = vector.load %arg8[%c0_21, %c0_22] : memref<8x10xf32, #tpu.memory_space<vmem>>, vector<8x10xf32>
    tpu.vector_store %arg8[%c0_21, %c0_22], %74 {strides = array<i32>} : memref<8x10xf32, #tpu.memory_space<vmem>>, vector<8x10xf32>,
    return
  }
  func.func @transform_0(%arg0: i32) -> (i32, i32, i32) {
    %c0_i32 = arith.constant 0 : i32
    %c0_i32_0 = arith.constant 0 : i32
    %c0_i32_1 = arith.constant 0 : i32
    return %arg0, %c0_i32, %c0_i32_0 : i32, i32, i32
  }
  func.func @transform_1(%arg0: i32) -> (i32, i32) {
    %c0_i32 = arith.constant 0 : i32
    %c0_i32_0 = arith.constant 0 : i32
    %c0_i32_1 = arith.constant 0 : i32
    return %c0_i32, %c0_i32_0 : i32, i32
  }
  func.func @transform_2(%arg0: i32) -> (i32, i32) {
    %c0_i32 = arith.constant 0 : i32
    %c0_i32_0 = arith.constant 0 : i32
    %c0_i32_1 = arith.constant 0 : i32
    return %c0_i32, %c0_i32_0 : i32, i32
  }
  func.func @transform_3(%arg0: i32) -> (i32, i32) {
    %c0_i32 = arith.constant 0 : i32
    %c0_i32_0 = arith.constant 0 : i32
    %c0_i32_1 = arith.constant 0 : i32
    return %c0_i32, %c0_i32_0 : i32, i32
  }
  func.func @transform_4(%arg0: i32) -> (i32, i32) {
    %c0_i32 = arith.constant 0 : i32
    %c0_i32_0 = arith.constant 0 : i32
    %c0_i32_1 = arith.constant 0 : i32
    return %c0_i32, %c0_i32_0 : i32, i32
  }
  func.func @transform_5(%arg0: i32) -> (i32, i32) {
    %c0_i32 = arith.constant 0 : i32
    %c0_i32_0 = arith.constant 0 : i32
    %c0_i32_1 = arith.constant 0 : i32
    return %c0_i32, %c0_i32_0 : i32, i32
  }
  func.func @transform_6(%arg0: i32) -> (i32, i32) {
    %c0_i32 = arith.constant 0 : i32
    %c0_i32_0 = arith.constant 0 : i32
    %c0_i32_1 = arith.constant 0 : i32
    return %c0_i32, %c0_i32_0 : i32, i32
  }
  func.func @transform_7(%arg0: i32) -> (i32, i32) {
    %c0_i32 = arith.constant 0 : i32
    %c0_i32_0 = arith.constant 0 : i32
    return %arg0, %c0_i32 : i32, i32
  }
}

</mosaic_0001>

<llo_original>
// kernel: tile.18
$region0: #{tile.18}
  #allocation0 [shape = 's32[1]{0}', space=sflag, size = 0x4, scoped, tag = 'scoped memory for tile.18']
  %s0 = inlined_call_operand.vmem [shape: f32[32], index: 0, kind: input, shape index: {}]
  %s1 = inlined_call_operand.vmem [shape: f32[16,32], index: 1, kind: output, shape index: {}]
  // Predicated region
  $region2: #{tile.18} parent=0 // pred_check
    _
  $region3: #{tile.18} parent=0 // pred_check_branch
    %3 = sbr.rel (0) target = $region5
  $region4: #{tile.18} parent=0 // pred_region
    _
  $region5: #{tile.18} parent=0 // pred_fallthru
    _
  %v4 = vld [vmem:[%s0] ss:$0 sm:$0xff]
  %5 = vst [vmem:[%s1] sm:$0xff] %v4
  %s6 = scalar_lea.vmem %s1, 8
  %7 = vst [vmem:[%s6] sm:$0xff] %v4

// kernel: tile.19
$region0: #{tile.19}
  %s0 = inlined_call_operand.vmem [shape: f32[16,32], index: 0, kind: input, shape index: {}]
  %s1 = inlined_call_operand.vmem [shape: f32[1,512], index: 1, kind: output, shape index: {}]
  $region1: #{tile.19} parent=0
    #allocation0 [shape = 'u8[16384]{0}', space=vmem, size = 0x4000, scoped, tag = 'scoped mem for output reshape']
    %v2 = vld [vmem:[%s0] ss:$4 sm:$0xf]
    %vm3 = vcmask 261120
    %4 = vst.msk [vmem:[#allocation0] ss:$8 sm:$0xf] %vm3, %v2
    %s5 = scalar_lea.vmem %s0, 3
    %v6 = vld [vmem:[%s5] ss:$4 sm:$0xf]
    %7 = vrot.lane.b32.xlu0 %v6, 96
    %v8 = vpop.permute.xlu0 %7
    %vm9 = vcmask 1048320
    %10 = vst.msk [vmem:[#allocation0] ss:$8 sm:$0xf] %vm9, %v8
    %s11 = scalar_lea.vmem %s0, 2
    %v12 = vld [vmem:[%s11] ss:$4 sm:$0xf]
    %13 = vrot.lane.b32.xlu0 %v12, 64
    %v14 = vpop.permute.xlu0 %13
    %vm15 = vcmask 785920
    %16 = vst.msk [vmem:[#allocation0] ss:$8 sm:$0xf] %vm15, %v14
    %s17 = scalar_lea.vmem %s0, 1
    %v18 = vld [vmem:[%s17] ss:$4 sm:$0xf]
    %19 = vrot.lane.b32.xlu0 %v18, 32
    %v20 = vpop.permute.xlu0 %19
    %vm21 = vcmask 523520
    %22 = vst.msk [vmem:[#allocation0] ss:$8 sm:$0xf] %vm21, %v20
    %s24 = ssub.s32 2, 1
    %v25 = vld [vmem:[#allocation0] sm:%s24]
    %s27 = ssub.s32 2, 1
    %28 = vst [vmem:[%s1] sm:%s27] %v25
    %s29 = scalar_lea.vmem [#allocation0], 8
    %v30 = vld [vmem:[%s29] sm:%s24]
    %s32 = ssub.s32 2, 1
    %s33 = scalar_lea.vmem %s1, 1
    %34 = vst [vmem:[%s33] sm:%s32] %v30
    %s35 = scalar_lea.vmem [#allocation0], 16
    %v36 = vld [vmem:[%s35] sm:%s24]
    %s38 = ssub.s32 2, 1
    %s39 = scalar_lea.vmem %s1, 2
    %40 = vst [vmem:[%s39] sm:%s38] %v36
    %s41 = scalar_lea.vmem [#allocation0], 24
    %v42 = vld [vmem:[%s41] sm:%s24]
    %s44 = ssub.s32 2, 1
    %s45 = scalar_lea.vmem %s1, 3
    %46 = vst [vmem:[%s45] sm:%s44] %v42

// kernel: tile.14
$region0: #{tile.14}
  %s0 = inlined_call_operand.vmem [shape: f32[16,16], index: 0, kind: input, shape index: {}]
  %s1 = inlined_call_operand.vmem [shape: f32[1,256], index: 1, kind: output, shape index: {}]
  $region1: #{tile.14} parent=0
    #allocation0 [shape = 'u8[8192]{0}', space=vmem, size = 0x2000, scoped, tag = 'scoped mem for output reshape']
    %s2 = smov 3
    %v3 = vld [vmem:[%s0] ss:$8 sm:%s2]
    %vm4 = vcmask 130048
    %5 = vst.msk [vmem:[#allocation0] ss:$8 sm:$0x3] %vm4, %v3
    %s6 = scalar_lea.vmem %s0, 7
    %s7 = smov 3
    %v8 = vld [vmem:[%s6] ss:$8 sm:%s7]
    %9 = vrot.lane.b32.xlu0 %v8, 112
    %v10 = vpop.permute.xlu0 %9
    %vm11 = vcmask 1048448
    %12 = vst.msk [vmem:[#allocation0] ss:$8 sm:$0x3] %vm11, %v10
    %s13 = scalar_lea.vmem %s0, 6
    %s14 = smov 3
    %v15 = vld [vmem:[%s13] ss:$8 sm:%s14]
    %16 = vrot.lane.b32.xlu0 %v15, 96
    %v17 = vpop.permute.xlu0 %16
    %vm18 = vcmask 917248
    %19 = vst.msk [vmem:[#allocation0] ss:$8 sm:$0x3] %vm18, %v17
    %s20 = scalar_lea.vmem %s0, 5
    %s21 = smov 3
    %v22 = vld [vmem:[%s20] ss:$8 sm:%s21]
    %23 = vrot.lane.b32.xlu0 %v22, 80
    %v24 = vpop.permute.xlu0 %23
    %vm25 = vcmask 786048
    %26 = vst.msk [vmem:[#allocation0] ss:$8 sm:$0x3] %vm25, %v24
    %s27 = scalar_lea.vmem %s0, 4
    %s28 = smov 3
    %v29 = vld [vmem:[%s27] ss:$8 sm:%s28]
    %30 = vrot.lane.b32.xlu0 %v29, 64
    %v31 = vpop.permute.xlu0 %30
    %vm32 = vcmask 654848
    %33 = vst.msk [vmem:[#allocation0] ss:$8 sm:$0x3] %vm32, %v31
    %s34 = scalar_lea.vmem %s0, 3
    %s35 = smov 3
    %v36 = vld [vmem:[%s34] ss:$8 sm:%s35]
    %37 = vrot.lane.b32.xlu0 %v36, 48
    %v38 = vpop.permute.xlu0 %37
    %vm39 = vcmask 523648
    %40 = vst.msk [vmem:[#allocation0] ss:$8 sm:$0x3] %vm39, %v38
    %s41 = scalar_lea.vmem %s0, 2
    %s42 = smov 3
    %v43 = vld [vmem:[%s41] ss:$8 sm:%s42]
    %44 = vrot.lane.b32.xlu0 %v43, 32
    %v45 = vpop.permute.xlu0 %44
    %vm46 = vcmask 392448
    %47 = vst.msk [vmem:[#allocation0] ss:$8 sm:$0x3] %vm46, %v45
    %s48 = scalar_lea.vmem %s0, 1
    %s49 = smov 3
    %v50 = vld [vmem:[%s48] ss:$8 sm:%s49]
    %51 = vrot.lane.b32.xlu0 %v50, 16
    %v52 = vpop.permute.xlu0 %51
    %vm53 = vcmask 261248
    %54 = vst.msk [vmem:[#allocation0] ss:$8 sm:$0x3] %vm53, %v52
    %s56 = ssub.s32 2, 1
    %v57 = vld [vmem:[#allocation0] sm:%s56]
    %s59 = ssub.s32 2, 1
    %60 = vst [vmem:[%s1] sm:%s59] %v57
    %s61 = scalar_lea.vmem [#allocation0], 8
    %v62 = vld [vmem:[%s61] sm:%s56]
    %s64 = ssub.s32 2, 1
    %s65 = scalar_lea.vmem %s1, 1
    %66 = vst [vmem:[%s65] sm:%s64] %v62

// kernel: tile.13
$region0: #{tile.13}
  #allocation0 [shape = 's32[1]{0}', space=sflag, size = 0x4, scoped, tag = 'scoped memory for tile.13']
  %s0 = inlined_call_operand.vmem [shape: f32[16], index: 0, kind: input, shape index: {}]
  %s1 = inlined_call_operand.vmem [shape: f32[16,16], index: 1, kind: output, shape index: {}]
  // Predicated region
  $region2: #{tile.13} parent=0 // pred_check
    _
  $region3: #{tile.13} parent=0 // pred_check_branch
    %3 = sbr.rel (0) target = $region5
  $region4: #{tile.13} parent=0 // pred_region
    _
  $region5: #{tile.13} parent=0 // pred_fallthru
    _
  %v4 = vld [vmem:[%s0] ss:$0 sm:$0xff]
  %5 = vst [vmem:[%s1] sm:$0xff] %v4
  %s6 = scalar_lea.vmem %s1, 8
  %7 = vst [vmem:[%s6] sm:$0xff] %v4

// kernel: cnn_forward.1
$region0: #{cnn_forward.1}
  #allocation0 [shape = 'u32[]', space=smem, size = 0x4, offset = 0x4, fixed_abs, tag = 'smem constant byte address 0x4 - core index']
  #allocation1 [shape = 'u32[72,128]{1,0:T(1,128)}', space=vmem, size = 0x9000, scoped, tag = 'internal scratch']
  %s0 = inlined_call_operand.vmem [shape: f32[16,28,28], index: 0, kind: input, shape index: {}]
  %s1 = inlined_call_operand.vmem [shape: bf16[140,512], index: 1, kind: input, shape index: {}]
  %s2 = inlined_call_operand.vmem [shape: f32[1,256], index: 2, kind: input, shape index: {}]
  %s3 = inlined_call_operand.vmem [shape: bf16[1280,256], index: 3, kind: input, shape index: {}]
  %s4 = inlined_call_operand.vmem [shape: f32[1,512], index: 4, kind: input, shape index: {}]
  %s5 = inlined_call_operand.vmem [shape: f32[512,10], index: 5, kind: input, shape index: {}]
  %s6 = inlined_call_operand.vmem [shape: f32[1,10], index: 6, kind: input, shape index: {}]
  %s7 = inlined_call_operand.hbm [shape: f32[16,10], index: 7, kind: output, shape index: {}]
  %s8 = sld [smem:[#allocation0]]
  $region61: #{cnn_forward.1} parent=0
    _
  %s10 = ssub.s32 1, %s8
  %s11 = scalar_select 0, %s10, %s8
  $region1: #{cnn_forward.1} parent=0
    #allocation2 [shape = 'u8[8192]{0}', space=vmem, size = 0x2000, scoped, tag = 'output window, operand 0']
    #allocation3 [shape = 's32[2]{0}', space=sflag, size = 0x8, scoped, tag = 'scoped memory for cnn_forward.1']
    %12 = vsyncpa [#allocation3], 0
    %s13 = scalar_lea.sflag [#allocation3], 1
    %14 = vsyncpa %s13, 0
    loop: start=0, step=1, limit=4
    $region2: #{cnn_forward.1} parent=1 // loop_pre_header
      _
    $region3: #{cnn_forward.1} parent=1 // loop_header
      %s16 = sphi 0, %s20
      %p17 = scmp.ge.s32.totalorder %s16, 4
      %s26 = sphi 0, %s28
      %s29 = sphi 0, %s26
      %s30 = sphi 0, %s29
      %s46 = sphi 0, %s30
      %s50 = sphi 0, %s50
      %s52 = sphi 0, %s50
      %s53 = sphi 0, %s52
      %s67 = sphi 0, %s53
      %s71 = sphi 0, %s71
      %s73 = sphi 0, %s71
      %s74 = sphi 0, %s73
      %s88 = sphi 0, %s74
      %s92 = sphi 0, %s92
      %s94 = sphi 0, %s92
      %s95 = sphi 0, %s94
      %s109 = sphi 0, %s95
      %s113 = sphi 0, %s113
      %s115 = sphi 0, %s113
      %s116 = sphi 0, %s115
      %s130 = sphi 0, %s116
      %s134 = sphi 0, %s134
      %s136 = sphi 0, %s134
      %s137 = sphi 0, %s136
      %s151 = sphi 0, %s137
      %s155 = sphi 0, %s155
      %s157 = sphi 0, %s155
      %s158 = sphi 0, %s157
      %s172 = sphi 0, %s158
      %s178 = sphi 0, %s180
      %s181 = sphi 0, %s178
      %s182 = sphi 0, %s181
      %s198 = sphi 0, %s182
    $region4: #{cnn_forward.1} parent=1 // loop_header_branch
      %19 = sbr.rel (%p17) target = $region8
    $region5: #{cnn_forward.1} parent=1 // loop_body
      %s21 = ssub.s32 %s16, 1
      %s22 = ssub.s32 %s16, 2
      %s23 = sadd.s32 %s16, 1
      %s24 = ssub.s32 %s16, %s23
      %p25 = scmp.eq.s32.totalorder %s24, 0
      %s27 = sadd.s32 %s26, 1
      %s28 = scalar_select %p25, %s26, %s27
      %p31 = pneg %p25
      %p32 = scmp.eq.s32.totalorder %s16, 1
      %p33 = por %p31, %p32
      %p34 = scmp.ne.s32.totalorder %s26, %s29
      %p35 = scmp.eq.s32.totalorder %s16, 0
      %p36 = por %p34, %p35
      %p37 = scmp.ne.s32.totalorder %s26, %s29
      %p38 = scmp.eq.s32.totalorder %s21, 1
      %p39 = por %p37, %p38
      %p40 = scmp.ne.s32.totalorder %s29, %s30
      %p41 = scmp.eq.s32.totalorder %s21, 0
      %p42 = por %p40, %p41
      %p43 = scmp.ne.s32.totalorder %s29, %s30
      %p44 = scmp.eq.s32.totalorder %s22, 1
      %p45 = por %p43, %p44
      %p47 = scmp.ne.s32.totalorder %s30, %s46
      %p48 = scmp.eq.s32.totalorder %s22, 0
      %p49 = por %p47, %p48
      %s51 = sadd.s32 %s50, 1
      %p54 = scmp.eq.s32.totalorder %s16, 1
      %p55 = scmp.ne.s32.totalorder %s50, %s52
      %p56 = scmp.eq.s32.totalorder %s16, 0
      %p57 = por %p55, %p56
      %p58 = scmp.ne.s32.totalorder %s50, %s52
      %p59 = scmp.eq.s32.totalorder %s21, 1
      %p60 = por %p58, %p59
      %p61 = scmp.ne.s32.totalorder %s52, %s53
      %p62 = scmp.eq.s32.totalorder %s21, 0
      %p63 = por %p61, %p62
      %p64 = scmp.ne.s32.totalorder %s52, %s53
      %p65 = scmp.eq.s32.totalorder %s22, 1
      %p66 = por %p64, %p65
      %p68 = scmp.ne.s32.totalorder %s53, %s67
      %p69 = scmp.eq.s32.totalorder %s22, 0
      %p70 = por %p68, %p69
      %s72 = sadd.s32 %s71, 1
      %p75 = scmp.eq.s32.totalorder %s16, 1
      %p76 = scmp.ne.s32.totalorder %s71, %s73
      %p77 = scmp.eq.s32.totalorder %s16, 0
      %p78 = por %p76, %p77
      %p79 = scmp.ne.s32.totalorder %s71, %s73
      %p80 = scmp.eq.s32.totalorder %s21, 1
      %p81 = por %p79, %p80
      %p82 = scmp.ne.s32.totalorder %s73, %s74
      %p83 = scmp.eq.s32.totalorder %s21, 0
      %p84 = por %p82, %p83
      %p85 = scmp.ne.s32.totalorder %s73, %s74
      %p86 = scmp.eq.s32.totalorder %s22, 1
      %p87 = por %p85, %p86
      %p89 = scmp.ne.s32.totalorder %s74, %s88
      %p90 = scmp.eq.s32.totalorder %s22, 0
      %p91 = por %p89, %p90
      %s93 = sadd.s32 %s92, 1
      %p96 = scmp.eq.s32.totalorder %s16, 1
      %p97 = scmp.ne.s32.totalorder %s92, %s94
      %p98 = scmp.eq.s32.totalorder %s16, 0
      %p99 = por %p97, %p98
      %p100 = scmp.ne.s32.totalorder %s92, %s94
      %p101 = scmp.eq.s32.totalorder %s21, 1
      %p102 = por %p100, %p101
      %p103 = scmp.ne.s32.totalorder %s94, %s95
      %p104 = scmp.eq.s32.totalorder %s21, 0
      %p105 = por %p103, %p104
      %p106 = scmp.ne.s32.totalorder %s94, %s95
      %p107 = scmp.eq.s32.totalorder %s22, 1
      %p108 = por %p106, %p107
      %p110 = scmp.ne.s32.totalorder %s95, %s109
      %p111 = scmp.eq.s32.totalorder %s22, 0
      %p112 = por %p110, %p111
      %s114 = sadd.s32 %s113, 1
      %p117 = scmp.eq.s32.totalorder %s16, 1
      %p118 = scmp.ne.s32.totalorder %s113, %s115
      %p119 = scmp.eq.s32.totalorder %s16, 0
      %p120 = por %p118, %p119
      %p121 = scmp.ne.s32.totalorder %s113, %s115
      %p122 = scmp.eq.s32.totalorder %s21, 1
      %p123 = por %p121, %p122
      %p124 = scmp.ne.s32.totalorder %s115, %s116
      %p125 = scmp.eq.s32.totalorder %s21, 0
      %p126 = por %p124, %p125
      %p127 = scmp.ne.s32.totalorder %s115, %s116
      %p128 = scmp.eq.s32.totalorder %s22, 1
      %p129 = por %p127, %p128
      %p131 = scmp.ne.s32.totalorder %s116, %s130
      %p132 = scmp.eq.s32.totalorder %s22, 0
      %p133 = por %p131, %p132
      %s135 = sadd.s32 %s134, 1
      %p138 = scmp.eq.s32.totalorder %s16, 1
      %p139 = scmp.ne.s32.totalorder %s134, %s136
      %p140 = scmp.eq.s32.totalorder %s16, 0
      %p141 = por %p139, %p140
      %p142 = scmp.ne.s32.totalorder %s134, %s136
      %p143 = scmp.eq.s32.totalorder %s21, 1
      %p144 = por %p142, %p143
      %p145 = scmp.ne.s32.totalorder %s136, %s137
      %p146 = scmp.eq.s32.totalorder %s21, 0
      %p147 = por %p145, %p146
      %p148 = scmp.ne.s32.totalorder %s136, %s137
      %p149 = scmp.eq.s32.totalorder %s22, 1
      %p150 = por %p148, %p149
      %p152 = scmp.ne.s32.totalorder %s137, %s151
      %p153 = scmp.eq.s32.totalorder %s22, 0
      %p154 = por %p152, %p153
      %s156 = sadd.s32 %s155, 1
      %p159 = scmp.eq.s32.totalorder %s16, 1
      %p160 = scmp.ne.s32.totalorder %s155, %s157
      %p161 = scmp.eq.s32.totalorder %s16, 0
      %p162 = por %p160, %p161
      %p163 = scmp.ne.s32.totalorder %s155, %s157
      %p164 = scmp.eq.s32.totalorder %s21, 1
      %p165 = por %p163, %p164
      %p166 = scmp.ne.s32.totalorder %s157, %s158
      %p167 = scmp.eq.s32.totalorder %s21, 0
      %p168 = por %p166, %p167
      %p169 = scmp.ne.s32.totalorder %s157, %s158
      %p170 = scmp.eq.s32.totalorder %s22, 1
      %p171 = por %p169, %p170
      %p173 = scmp.ne.s32.totalorder %s158, %s172
      %p174 = scmp.eq.s32.totalorder %s22, 0
      %p175 = por %p173, %p174
      %s176 = ssub.s32 %s16, %s23
      %p177 = scmp.eq.s32.totalorder %s176, 0
      %s179 = sadd.s32 %s178, 1
      %s180 = scalar_select %p177, %s178, %s179
      %p183 = pneg %p177
      %p184 = scmp.eq.s32.totalorder %s16, 1
      %p185 = por %p183, %p184
      %p186 = scmp.ne.s32.totalorder %s178, %s181
      %p187 = scmp.eq.s32.totalorder %s16, 0
      %p188 = por %p186, %p187
      %p189 = scmp.ne.s32.totalorder %s178, %s181
      %p190 = scmp.eq.s32.totalorder %s21, 1
      %p191 = por %p189, %p190
      %p192 = scmp.ne.s32.totalorder %s181, %s182
      %p193 = scmp.eq.s32.totalorder %s21, 0
      %p194 = por %p192, %p193
      %p195 = scmp.ne.s32.totalorder %s181, %s182
      %p196 = scmp.eq.s32.totalorder %s22, 1
      %p197 = por %p195, %p196
      %p199 = scmp.ne.s32.totalorder %s182, %s198
      %p200 = scmp.eq.s32.totalorder %s22, 0
      %p201 = por %p199, %p200
      %p202 = scmp.le.s32.totalorder 1, %s16
      %p203 = scmp.lt.s32.totalorder %s16, 3
      %p204 = pnand %p202, %p203
      %p205 = pneg %p204
      // Predicated region
      $region9: #{cnn_forward.1} parent=5 // pred_check
        _
      $region10: #{cnn_forward.1} parent=5 // pred_check_branch
        %207 = sbr.rel (%p204) target = $region12
      $region11: #{cnn_forward.1} parent=5 // pred_region
        %s208 = ssub.s32 %s16, 1
        // Predicated region
        $region13: #{cnn_forward.1} parent=11 // pred_check
          %p209 = pneg %p63
        $region14: #{cnn_forward.1} parent=11 // pred_check_branch
          %211 = sbr.rel (%p209) target = $region16
        $region15: #{cnn_forward.1} parent=11 // pred_region
          _
        $region16: #{cnn_forward.1} parent=11 // pred_fallthru
          _
        // Predicated region
        $region17: #{cnn_forward.1} parent=11 // pred_check
          %p212 = pneg %p84
        $region18: #{cnn_forward.1} parent=11 // pred_check_branch
          %214 = sbr.rel (%p212) target = $region20
        $region19: #{cnn_forward.1} parent=11 // pred_region
          _
        $region20: #{cnn_forward.1} parent=11 // pred_fallthru
          _
        // Predicated region
        $region21: #{cnn_forward.1} parent=11 // pred_check
          %p215 = pneg %p105
        $region22: #{cnn_forward.1} parent=11 // pred_check_branch
          %217 = sbr.rel (%p215) target = $region24
        $region23: #{cnn_forward.1} parent=11 // pred_region
          _
        $region24: #{cnn_forward.1} parent=11 // pred_fallthru
          _
        // Predicated region
        $region25: #{cnn_forward.1} parent=11 // pred_check
          %p218 = pneg %p126
        $region26: #{cnn_forward.1} parent=11 // pred_check_branch
          %220 = sbr.rel (%p218) target = $region28
        $region27: #{cnn_forward.1} parent=11 // pred_region
          _
        $region28: #{cnn_forward.1} parent=11 // pred_fallthru
          _
        // Predicated region
        $region29: #{cnn_forward.1} parent=11 // pred_check
          %p221 = pneg %p147
        $region30: #{cnn_forward.1} parent=11 // pred_check_branch
          %223 = sbr.rel (%p221) target = $region32
        $region31: #{cnn_forward.1} parent=11 // pred_region
          _
        $region32: #{cnn_forward.1} parent=11 // pred_fallthru
          _
        // Predicated region
        $region33: #{cnn_forward.1} parent=11 // pred_check
          %p224 = pneg %p168
        $region34: #{cnn_forward.1} parent=11 // pred_check_branch
          %226 = sbr.rel (%p224) target = $region36
        $region35: #{cnn_forward.1} parent=11 // pred_region
          _
        $region36: #{cnn_forward.1} parent=11 // pred_fallthru
          _
      $region12: #{cnn_forward.1} parent=5 // pred_fallthru
        _
      %p227 = scmp.lt.s32.totalorder %s16, 2
      // Predicated region
      $region37: #{cnn_forward.1} parent=5 // pred_check
        %p228 = pneg %p227
      $region38: #{cnn_forward.1} parent=5 // pred_check_branch
        %230 = sbr.rel (%p228) target = $region40
      $region39: #{cnn_forward.1} parent=5 // pred_region
        // Predicated region
        $region41: #{cnn_forward.1} parent=39 // pred_check
          %p231 = pneg %p36
        $region42: #{cnn_forward.1} parent=39 // pred_check_branch
          %233 = sbr.rel (%p231) target = $region44
        $region43: #{cnn_forward.1} parent=39 // pred_region
          %s234 = smul.u32 8, %s16
          %p235 = scmp.lt.s32.totalorder %s234, 15
          %s236 = scalar_select %p235, %s234, 15
          %s237 = smul.addr %s236, 4
          %s238 = smul.addr %s237, 8
          %s239 = scalar_lea.vmem %s0, %s238
          %s240 = smul.u32 8, %s16
        $region44: #{cnn_forward.1} parent=39 // pred_fallthru
          _
      $region40: #{cnn_forward.1} parent=5 // pred_fallthru
        _
      %p241 = scmp.le.s32.totalorder 1, %s16
      %p242 = scmp.lt.s32.totalorder %s16, 3
      %p243 = pnand %p241, %p242
      %p244 = pneg %p243
      // Predicated region
      $region45: #{cnn_forward.1} parent=5 // pred_check
        _
      $region46: #{cnn_forward.1} parent=5 // pred_check_branch
        %246 = sbr.rel (%p243) target = $region48
      $region47: #{cnn_forward.1} parent=5 // pred_region
        %s247 = ssub.s32 %s16, 1
        %s248 = smul.u32 8, %s21
        %p249 = scmp.lt.s32.totalorder %s248, 15
        %s250 = scalar_select %p249, %s248, 15
        %s251 = smul.addr %s250, 4
        %s252 = smul.addr %s251, 8
        %s253 = scalar_lea.vmem %s0, %s252
        %p254 = pneg %p42
        %p255 = pneg %p39
        %p256 = pneg %p63
        %p257 = pneg %p60
        %p258 = pneg %p84
        %p259 = pneg %p81
        %p260 = pneg %p105
        %p261 = pneg %p102
        %p262 = pneg %p126
        %p263 = pneg %p123
        %p264 = pneg %p147
        %p265 = pneg %p144
        %p266 = pneg %p168
        %p267 = pneg %p165
        %p268 = pneg %p194
        %p269 = pneg %p191
        %s270 = sand.u32 %s181, 1
        %s271 = scalar_lea.sflag [#allocation3], %s270
        %s272 = sand.u32 %s181, 1
        %s273 = smul.addr %s272, 8
        %s274 = scalar_lea.vmem [#allocation2], %s273
        %s275 = smul.u32 8, %s21
        %p276 = scmp.lt.s32.totalorder %s275, 15
        %s277 = scalar_select %p276, %s275, 15
        %s278 = smul.addr %s277, 4
        %s279 = smul.addr %s278, 8
        %s280 = scalar_lea.vmem %s0, %s279
        %s281 = smul.u32 8, %s21
        %v283 = vld [vmem:[%s280] sm:$0xff]
        %v284 = vld [vmem:[%s280 + $0x8] sm:$0xff]
        %v285 = vld [vmem:[%s280 + $0x10] sm:$0xff]
        %v286 = vld [vmem:[%s280 + $0x18] sm:$0xf]
        %v287 = vld [vmem:[%s280 + $0x20] sm:$0xff]
        %v288 = vld [vmem:[%s280 + $0x28] sm:$0xff]
        %v289 = vld [vmem:[%s280 + $0x30] sm:$0xff]
        %v290 = vld [vmem:[%s280 + $0x38] sm:$0xf]
        %v291 = vld [vmem:[%s280 + $0x40] sm:$0xff]
        %v292 = vld [vmem:[%s280 + $0x48] sm:$0xff]
        %v293 = vld [vmem:[%s280 + $0x50] sm:$0xff]
        %v294 = vld [vmem:[%s280 + $0x58] sm:$0xf]
        %v295 = vld [vmem:[%s280 + $0x60] sm:$0xff]
        %v296 = vld [vmem:[%s280 + $0x68] sm:$0xff]
        %v297 = vld [vmem:[%s280 + $0x70] sm:$0xff]
        %v298 = vld [vmem:[%s280 + $0x78] sm:$0xf]
        %v299 = vld [vmem:[%s280 + $0x80] sm:$0xff]
        %v300 = vld [vmem:[%s280 + $0x88] sm:$0xff]
        %v301 = vld [vmem:[%s280 + $0x90] sm:$0xff]
        %v302 = vld [vmem:[%s280 + $0x98] sm:$0xf]
        %v303 = vld [vmem:[%s280 + $0xa0] sm:$0xff]
        %v304 = vld [vmem:[%s280 + $0xa8] sm:$0xff]
        %v305 = vld [vmem:[%s280 + $0xb0] sm:$0xff]
        %v306 = vld [vmem:[%s280 + $0xb8] sm:$0xf]
        %v307 = vld [vmem:[%s280 + $0xc0] sm:$0xff]
        %v308 = vld [vmem:[%s280 + $0xc8] sm:$0xff]
        %v309 = vld [vmem:[%s280 + $0xd0] sm:$0xff]
        %v310 = vld [vmem:[%s280 + $0xd8] sm:$0xf]
        %v311 = vld [vmem:[%s280 + $0xe0] sm:$0xff]
        %v312 = vld [vmem:[%s280 + $0xe8] sm:$0xff]
        %v313 = vld [vmem:[%s280 + $0xf0] sm:$0xff]
        %v314 = vld [vmem:[%s280 + $0xf8] sm:$0xf]
        %v315 = vpack.c.bf16 %v283, %v283
        %v316 = vpack.c.bf16 %v284, %v284
        %v317 = vpack.c.bf16 %v285, %v285
        %v318 = vpack.c.bf16 %v286, %v286
        %v319 = vpack.c.bf16 %v287, %v287
        %v320 = vpack.c.bf16 %v288, %v288
        %v321 = vpack.c.bf16 %v289, %v289
        %v322 = vpack.c.bf16 %v290, %v290
        %v323 = vpack.c.bf16 %v291, %v291
        %v324 = vpack.c.bf16 %v292, %v292
        %v325 = vpack.c.bf16 %v293, %v293
        %v326 = vpack.c.bf16 %v294, %v294
        %v327 = vpack.c.bf16 %v295, %v295
        %v328 = vpack.c.bf16 %v296, %v296
        %v329 = vpack.c.bf16 %v297, %v297
        %v330 = vpack.c.bf16 %v298, %v298
        %v331 = vpack.c.bf16 %v299, %v299
        %v332 = vpack.c.bf16 %v300, %v300
        %v333 = vpack.c.bf16 %v301, %v301
        %v334 = vpack.c.bf16 %v302, %v302
        %v335 = vpack.c.bf16 %v303, %v303
        %v336 = vpack.c.bf16 %v304, %v304
        %v337 = vpack.c.bf16 %v305, %v305
        %v338 = vpack.c.bf16 %v306, %v306
        %v339 = vpack.c.bf16 %v307, %v307
        %v340 = vpack.c.bf16 %v308, %v308
        %v341 = vpack.c.bf16 %v309, %v309
        %v342 = vpack.c.bf16 %v310, %v310
        %v343 = vpack.c.bf16 %v311, %v311
        %v344 = vpack.c.bf16 %v312, %v312
        %v345 = vpack.c.bf16 %v313, %v313
        %v346 = vpack.c.bf16 %v314, %v314
        %v363 = vunpack.c.l.b16 %v315
        %v364 = vunpack.c.l.b16 %v316
        %v365 = vunpack.c.l.b16 %v319
        %v366 = vunpack.c.l.b16 %v320
        %v367 = vunpack.c.l.b16 %v323
        %v368 = vunpack.c.l.b16 %v324
        %v369 = vunpack.c.l.b16 %v327
        %v370 = vunpack.c.l.b16 %v328
        %v371 = vunpack.c.l.b16 %v331
        %v372 = vunpack.c.l.b16 %v332
        %v373 = vunpack.c.l.b16 %v335
        %v374 = vunpack.c.l.b16 %v336
        %v375 = vunpack.c.l.b16 %v339
        %v376 = vunpack.c.l.b16 %v340
        %v377 = vunpack.c.l.b16 %v343
        %v378 = vunpack.c.l.b16 %v344
        %v379 = vpack.c.b16 %v364, %v363
        %v380 = vpack.c.b16 %v366, %v365
        %v381 = vpack.c.b16 %v368, %v367
        %v382 = vpack.c.b16 %v370, %v369
        %v383 = vpack.c.b16 %v372, %v371
        %v384 = vpack.c.b16 %v374, %v373
        %v385 = vpack.c.b16 %v376, %v375
        %v386 = vpack.c.b16 %v378, %v377
        %v403 = vunpack.c.l.b16 %v317
        %v404 = vunpack.c.l.b16 %v318
        %v405 = vunpack.c.l.b16 %v321
        %v406 = vunpack.c.l.b16 %v322
        %v407 = vunpack.c.l.b16 %v325
        %v408 = vunpack.c.l.b16 %v326
        %v409 = vunpack.c.l.b16 %v329
        %v410 = vunpack.c.l.b16 %v330
        %v411 = vunpack.c.l.b16 %v333
        %v412 = vunpack.c.l.b16 %v334
        %v413 = vunpack.c.l.b16 %v337
        %v414 = vunpack.c.l.b16 %v338
        %v415 = vunpack.c.l.b16 %v341
        %v416 = vunpack.c.l.b16 %v342
        %v417 = vunpack.c.l.b16 %v345
        %v418 = vunpack.c.l.b16 %v346
        %v419 = vpack.c.b16 %v403, %v364
        %v420 = vpack.c.b16 %v404, %v404
        %v421 = vpack.c.b16 %v405, %v366
        %v422 = vpack.c.b16 %v406, %v406
        %v423 = vpack.c.b16 %v407, %v368
        %v424 = vpack.c.b16 %v408, %v408
        %v425 = vpack.c.b16 %v409, %v370
        %v426 = vpack.c.b16 %v410, %v410
        %v427 = vpack.c.b16 %v411, %v372
        %v428 = vpack.c.b16 %v412, %v412
        %v429 = vpack.c.b16 %v413, %v374
        %v430 = vpack.c.b16 %v414, %v414
        %v431 = vpack.c.b16 %v415, %v376
        %v432 = vpack.c.b16 %v416, %v416
        %v433 = vpack.c.b16 %v417, %v378
        %v434 = vpack.c.b16 %v418, %v418
        %vm435 = vcmask 1044480
        %v436 = vrot.slane %v419, 3
        %v437 = vrot.slane %v420, 3
        %v438 = vsel %vm435, %v436, %v437
        %v439 = vrot.slane %v421, 3
        %v440 = vrot.slane %v422, 3
        %v441 = vsel %vm435, %v439, %v440
        %v442 = vrot.slane %v423, 3
        %v443 = vrot.slane %v424, 3
        %v444 = vsel %vm435, %v442, %v443
        %v445 = vrot.slane %v425, 3
        %v446 = vrot.slane %v426, 3
        %v447 = vsel %vm435, %v445, %v446
        %v448 = vrot.slane %v427, 3
        %v449 = vrot.slane %v428, 3
        %v450 = vsel %vm435, %v448, %v449
        %v451 = vrot.slane %v429, 3
        %v452 = vrot.slane %v430, 3
        %v453 = vsel %vm435, %v451, %v452
        %v454 = vrot.slane %v431, 3
        %v455 = vrot.slane %v432, 3
        %v456 = vsel %vm435, %v454, %v455
        %v457 = vrot.slane %v433, 3
        %v458 = vrot.slane %v434, 3
        %v459 = vsel %vm435, %v457, %v458
        %460 = vrot.lane.b32.xlu0 %v438, 28
        %v461 = vpop.permute.xlu0 %460
        %462 = vrot.lane.b32.xlu0 %v441, 28
        %v463 = vpop.permute.xlu0 %462
        %464 = vrot.lane.b32.xlu0 %v444, 28
        %v465 = vpop.permute.xlu0 %464
        %466 = vrot.lane.b32.xlu0 %v447, 28
        %v467 = vpop.permute.xlu0 %466
        %468 = vrot.lane.b32.xlu0 %v450, 28
        %v469 = vpop.permute.xlu0 %468
        %470 = vrot.lane.b32.xlu0 %v453, 28
        %v471 = vpop.permute.xlu0 %470
        %472 = vrot.lane.b32.xlu0 %v456, 28
        %v473 = vpop.permute.xlu0 %472
        %474 = vrot.lane.b32.xlu0 %v459, 28
        %v475 = vpop.permute.xlu0 %474
        %v477 = vshrl.u32 %v379, 16
        %v479 = vshll.u32 %v379, 16
        %v481 = vrot.slane %v479, 1
        %v482 = vor.u32 %v477, %v481
        %v484 = vshrl.u32 %v380, 16
        %v486 = vshll.u32 %v380, 16
        %v488 = vrot.slane %v486, 1
        %v489 = vor.u32 %v484, %v488
        %v491 = vshrl.u32 %v381, 16
        %v493 = vshll.u32 %v381, 16
        %v495 = vrot.slane %v493, 1
        %v496 = vor.u32 %v491, %v495
        %v498 = vshrl.u32 %v382, 16
        %v500 = vshll.u32 %v382, 16
        %v502 = vrot.slane %v500, 1
        %v503 = vor.u32 %v498, %v502
        %v505 = vshrl.u32 %v383, 16
        %v507 = vshll.u32 %v383, 16
        %v509 = vrot.slane %v507, 1
        %v510 = vor.u32 %v505, %v509
        %v512 = vshrl.u32 %v384, 16
        %v514 = vshll.u32 %v384, 16
        %v516 = vrot.slane %v514, 1
        %v517 = vor.u32 %v512, %v516
        %v519 = vshrl.u32 %v385, 16
        %v521 = vshll.u32 %v385, 16
        %v523 = vrot.slane %v521, 1
        %v524 = vor.u32 %v519, %v523
        %v526 = vshrl.u32 %v386, 16
        %v528 = vshll.u32 %v386, 16
        %v530 = vrot.slane %v528, 1
        %v531 = vor.u32 %v526, %v530
        %532 = vrot.lane.b32.xlu0 %v482, 56
        %v533 = vpop.permute.xlu0 %532
        %534 = vrot.lane.b32.xlu0 %v489, 56
        %v535 = vpop.permute.xlu0 %534
        %536 = vrot.lane.b32.xlu0 %v496, 56
        %v537 = vpop.permute.xlu0 %536
        %538 = vrot.lane.b32.xlu0 %v503, 56
        %v539 = vpop.permute.xlu0 %538
        %540 = vrot.lane.b32.xlu0 %v510, 56
        %v541 = vpop.permute.xlu0 %540
        %542 = vrot.lane.b32.xlu0 %v517, 56
        %v543 = vpop.permute.xlu0 %542
        %544 = vrot.lane.b32.xlu0 %v524, 56
        %v545 = vpop.permute.xlu0 %544
        %546 = vrot.lane.b32.xlu0 %v531, 56
        %v547 = vpop.permute.xlu0 %546
        %vm548 = vsmask.f32 4352
        %v550 = vshrl.u32 %v419, 16
        %v552 = vrot.slane %v550, 3
        %v553 = vshll.u32 %v419, 16
        %v555 = vrot.slane %v553, 4
        %v556 = vor.u32 %v552, %v555
        %v558 = vshrl.u32 %v420, 16
        %v560 = vrot.slane %v558, 3
        %v561 = vshll.u32 %v420, 16
        %v563 = vrot.slane %v561, 4
        %v564 = vor.u32 %v560, %v563
        %v565 = vsel %vm548, %v556, %v564
        %v567 = vshrl.u32 %v421, 16
        %v569 = vrot.slane %v567, 3
        %v570 = vshll.u32 %v421, 16
        %v572 = vrot.slane %v570, 4
        %v573 = vor.u32 %v569, %v572
        %v575 = vshrl.u32 %v422, 16
        %v577 = vrot.slane %v575, 3
        %v578 = vshll.u32 %v422, 16
        %v580 = vrot.slane %v578, 4
        %v581 = vor.u32 %v577, %v580
        %v582 = vsel %vm548, %v573, %v581
        %v584 = vshrl.u32 %v423, 16
        %v586 = vrot.slane %v584, 3
        %v587 = vshll.u32 %v423, 16
        %v589 = vrot.slane %v587, 4
        %v590 = vor.u32 %v586, %v589
        %v592 = vshrl.u32 %v424, 16
        %v594 = vrot.slane %v592, 3
        %v595 = vshll.u32 %v424, 16
        %v597 = vrot.slane %v595, 4
        %v598 = vor.u32 %v594, %v597
        %v599 = vsel %vm548, %v590, %v598
        %v601 = vshrl.u32 %v425, 16
        %v603 = vrot.slane %v601, 3
        %v604 = vshll.u32 %v425, 16
        %v606 = vrot.slane %v604, 4
        %v607 = vor.u32 %v603, %v606
        %v609 = vshrl.u32 %v426, 16
        %v611 = vrot.slane %v609, 3
        %v612 = vshll.u32 %v426, 16
        %v614 = vrot.slane %v612, 4
        %v615 = vor.u32 %v611, %v614
        %v616 = vsel %vm548, %v607, %v615
        %v618 = vshrl.u32 %v427, 16
        %v620 = vrot.slane %v618, 3
        %v621 = vshll.u32 %v427, 16
        %v623 = vrot.slane %v621, 4
        %v624 = vor.u32 %v620, %v623
        %v626 = vshrl.u32 %v428, 16
        %v628 = vrot.slane %v626, 3
        %v629 = vshll.u32 %v428, 16
        %v631 = vrot.slane %v629, 4
        %v632 = vor.u32 %v628, %v631
        %v633 = vsel %vm548, %v624, %v632
        %v635 = vshrl.u32 %v429, 16
        %v637 = vrot.slane %v635, 3
        %v638 = vshll.u32 %v429, 16
        %v640 = vrot.slane %v638, 4
        %v641 = vor.u32 %v637, %v640
        %v643 = vshrl.u32 %v430, 16
        %v645 = vrot.slane %v643, 3
        %v646 = vshll.u32 %v430, 16
        %v648 = vrot.slane %v646, 4
        %v649 = vor.u32 %v645, %v648
        %v650 = vsel %vm548, %v641, %v649
        %v652 = vshrl.u32 %v431, 16
        %v654 = vrot.slane %v652, 3
        %v655 = vshll.u32 %v431, 16
        %v657 = vrot.slane %v655, 4
        %v658 = vor.u32 %v654, %v657
        %v660 = vshrl.u32 %v432, 16
        %v662 = vrot.slane %v660, 3
        %v663 = vshll.u32 %v432, 16
        %v665 = vrot.slane %v663, 4
        %v666 = vor.u32 %v662, %v665
        %v667 = vsel %vm548, %v658, %v666
        %v669 = vshrl.u32 %v433, 16
        %v671 = vrot.slane %v669, 3
        %v672 = vshll.u32 %v433, 16
        %v674 = vrot.slane %v672, 4
        %v675 = vor.u32 %v671, %v674
        %v677 = vshrl.u32 %v434, 16
        %v679 = vrot.slane %v677, 3
        %v680 = vshll.u32 %v434, 16
        %v682 = vrot.slane %v680, 4
        %v683 = vor.u32 %v679, %v682
        %v684 = vsel %vm548, %v675, %v683
        %685 = vrot.lane.b32.xlu0 %v565, 84
        %v686 = vpop.permute.xlu0 %685
        %687 = vrot.lane.b32.xlu0 %v582, 84
        %v688 = vpop.permute.xlu0 %687
        %689 = vrot.lane.b32.xlu0 %v599, 84
        %v690 = vpop.permute.xlu0 %689
        %691 = vrot.lane.b32.xlu0 %v616, 84
        %v692 = vpop.permute.xlu0 %691
        %693 = vrot.lane.b32.xlu0 %v633, 84
        %v694 = vpop.permute.xlu0 %693
        %695 = vrot.lane.b32.xlu0 %v650, 84
        %v696 = vpop.permute.xlu0 %695
        %697 = vrot.lane.b32.xlu0 %v667, 84
        %v698 = vpop.permute.xlu0 %697
        %699 = vrot.lane.b32.xlu0 %v684, 84
        %v700 = vpop.permute.xlu0 %699
        %v701 = vrot.slane %v379, 1
        %v702 = vrot.slane %v380, 1
        %v703 = vrot.slane %v381, 1
        %v704 = vrot.slane %v382, 1
        %v705 = vrot.slane %v383, 1
        %v706 = vrot.slane %v384, 1
        %v707 = vrot.slane %v385, 1
        %v708 = vrot.slane %v386, 1
        %709 = vrot.lane.b32.xlu0 %v701, 112
        %v710 = vpop.permute.xlu0 %709
        %711 = vrot.lane.b32.xlu0 %v702, 112
        %v712 = vpop.permute.xlu0 %711
        %713 = vrot.lane.b32.xlu0 %v703, 112
        %v714 = vpop.permute.xlu0 %713
        %715 = vrot.lane.b32.xlu0 %v704, 112
        %v716 = vpop.permute.xlu0 %715
        %717 = vrot.lane.b32.xlu0 %v705, 112
        %v718 = vpop.permute.xlu0 %717
        %719 = vrot.lane.b32.xlu0 %v706, 112
        %v720 = vpop.permute.xlu0 %719
        %721 = vrot.lane.b32.xlu0 %v707, 112
        %v722 = vpop.permute.xlu0 %721
        %723 = vrot.lane.b32.xlu0 %v708, 112
        %v724 = vpop.permute.xlu0 %723
        %vm725 = vcmask 228352
        %v727 = vsel %vm725, %v379, %v461
        %v729 = vsel %vm725, %v380, %v463
        %v731 = vsel %vm725, %v381, %v465
        %v733 = vsel %vm725, %v382, %v467
        %v735 = vsel %vm725, %v383, %v469
        %v737 = vsel %vm725, %v384, %v471
        %v739 = vsel %vm725, %v385, %v473
        %v741 = vsel %vm725, %v386, %v475
        %vm742 = vcmask 457728
        %v744 = vsel %vm742, %v727, %v533
        %v746 = vsel %vm742, %v729, %v535
        %v748 = vsel %vm742, %v731, %v537
        %v750 = vsel %vm742, %v733, %v539
        %v752 = vsel %vm742, %v735, %v541
        %v754 = vsel %vm742, %v737, %v543
        %v756 = vsel %vm742, %v739, %v545
        %v758 = vsel %vm742, %v741, %v547
        %vm759 = vcmask 687104
        %v761 = vsel %vm759, %v744, %v686
        %v763 = vsel %vm759, %v746, %v688
        %v765 = vsel %vm759, %v748, %v690
        %v767 = vsel %vm759, %v750, %v692
        %v769 = vsel %vm759, %v752, %v694
        %v771 = vsel %vm759, %v754, %v696
        %v773 = vsel %vm759, %v756, %v698
        %v775 = vsel %vm759, %v758, %v700
        %vm776 = vcmask 916480
        %v778 = vsel %vm776, %v761, %v710
        %v780 = vsel %vm776, %v763, %v712
        %v782 = vsel %vm776, %v765, %v714
        %v784 = vsel %vm776, %v767, %v716
        %v786 = vsel %vm776, %v769, %v718
        %v788 = vsel %vm776, %v771, %v720
        %v790 = vsel %vm776, %v773, %v722
        %v792 = vsel %vm776, %v775, %v724
        %v793 = vrot.slane %v710, 6
        %v794 = vrot.slane %v712, 6
        %v795 = vrot.slane %v714, 6
        %v796 = vrot.slane %v716, 6
        %v797 = vrot.slane %v718, 6
        %v798 = vrot.slane %v720, 6
        %v799 = vrot.slane %v722, 6
        %v800 = vrot.slane %v724, 6
        %vm801 = vcmask 1041408
        %v803 = vsel %vm801, %v778, %v793
        %vm804 = vcmask 1043458
        %v805 = vsel %vm804, %v778, %v793
        %v807 = vrot.slane %v805, 2
        %vm808 = vcmask 1045508
        %v809 = vsel %vm808, %v778, %v793
        %v811 = vrot.slane %v809, 4
        %v813 = vsel %vm801, %v780, %v794
        %v814 = vsel %vm804, %v780, %v794
        %v816 = vrot.slane %v814, 2
        %v817 = vsel %vm808, %v780, %v794
        %v819 = vrot.slane %v817, 4
        %v821 = vsel %vm801, %v782, %v795
        %v822 = vsel %vm804, %v782, %v795
        %v824 = vrot.slane %v822, 2
        %v825 = vsel %vm808, %v782, %v795
        %v827 = vrot.slane %v825, 4
        %v829 = vsel %vm801, %v784, %v796
        %v830 = vsel %vm804, %v784, %v796
        %v832 = vrot.slane %v830, 2
        %v833 = vsel %vm808, %v784, %v796
        %v835 = vrot.slane %v833, 4
        %v837 = vsel %vm801, %v786, %v797
        %v838 = vsel %vm804, %v786, %v797
        %v840 = vrot.slane %v838, 2
        %v841 = vsel %vm808, %v786, %v797
        %v843 = vrot.slane %v841, 4
        %v845 = vsel %vm801, %v788, %v798
        %v846 = vsel %vm804, %v788, %v798
        %v848 = vrot.slane %v846, 2
        %v849 = vsel %vm808, %v788, %v798
        %v851 = vrot.slane %v849, 4
        %v853 = vsel %vm801, %v790, %v799
        %v854 = vsel %vm804, %v790, %v799
        %v856 = vrot.slane %v854, 2
        %v857 = vsel %vm808, %v790, %v799
        %v859 = vrot.slane %v857, 4
        %v861 = vsel %vm801, %v792, %v800
        %v862 = vsel %vm804, %v792, %v800
        %v864 = vrot.slane %v862, 2
        %v865 = vsel %vm808, %v792, %v800
        %v867 = vrot.slane %v865, 4
        %v868 = vld [vmem:[%s1] sm:$0xff]
        %v869 = vld [vmem:[%s1 + $0x8] sm:$0xff]
        %v870 = vld [vmem:[%s1 + $0x10] sm:$0xff]
        %v871 = vld [vmem:[%s1 + $0x18] sm:$0xff]
        %v872 = vld [vmem:[%s1 + $0x20] sm:$0xff]
        %v873 = vld [vmem:[%s1 + $0x28] sm:$0xff]
        %v874 = vld [vmem:[%s1 + $0x30] sm:$0xff]
        %v875 = vld [vmem:[%s1 + $0x38] sm:$0xff]
        %v876 = vld [vmem:[%s1 + $0x40] sm:$0xff]
        %v877 = vld [vmem:[%s1 + $0x48] sm:$0xff]
        %v878 = vld [vmem:[%s1 + $0x50] sm:$0xff]
        %v879 = vld [vmem:[%s1 + $0x58] sm:$0xff]
        %v880 = vld [vmem:[%s1 + $0x60] sm:$0xff]
        %v881 = vld [vmem:[%s1 + $0x68] sm:$0xff]
        %v882 = vld [vmem:[%s1 + $0x70] sm:$0xff]
        %v883 = vld [vmem:[%s1 + $0x78] sm:$0xff]
        %v884 = vld [vmem:[%s1 + $0x80] sm:$0xff]
        %v885 = vld [vmem:[%s1 + $0x88] sm:$0xff]
        %v886 = vld [vmem:[%s1 + $0x90] sm:$0xff]
        %v887 = vld [vmem:[%s1 + $0x98] sm:$0xff]
        %v888 = vld [vmem:[%s1 + $0xa0] sm:$0xff]
        %v889 = vld [vmem:[%s1 + $0xa8] sm:$0xff]
        %v890 = vld [vmem:[%s1 + $0xb0] sm:$0xff]
        %v891 = vld [vmem:[%s1 + $0xb8] sm:$0xff]
        %v892 = vld [vmem:[%s1 + $0xc0] sm:$0xff]
        %v893 = vld [vmem:[%s1 + $0xc8] sm:$0xff]
        %v894 = vld [vmem:[%s1 + $0xd0] sm:$0xff]
        %v895 = vld [vmem:[%s1 + $0xd8] sm:$0xff]
        %v896 = vld [vmem:[%s1 + $0xe0] sm:$0xff]
        %v897 = vld [vmem:[%s1 + $0xe8] sm:$0xff]
        %v898 = vld [vmem:[%s1 + $0xf0] sm:$0xff]
        %v899 = vld [vmem:[%s1 + $0xf8] sm:$0xff]
        %v900 = vld [vmem:[%s1 + $0x100] sm:$0xff]
        %v901 = vld [vmem:[%s1 + $0x108] sm:$0xff]
        %v902 = vld [vmem:[%s1 + $0x110] sm:$0x33]
        %v903 = vld [vmem:[%s1 + $0x118] sm:$0x33]
        %904 = vst [vmem:[#allocation1] ss:$4 sm:$0xff] %v803
        %s906 = scalar_lea.vmem [#allocation1], 1
        %907 = vst [vmem:[%s906] ss:$4 sm:$0xff] %v807
        %s909 = scalar_lea.vmem [#allocation1], 2
        %910 = vst [vmem:[%s909] ss:$4 sm:$0xff] %v811
        %s911 = scalar_lea.vmem [#allocation1], 3
        %912 = vst [vmem:[%s911] ss:$4 sm:$0xff] %v813
        %s914 = scalar_lea.vmem [#allocation1], 32
        %915 = vst [vmem:[%s914] ss:$4 sm:$0xff] %v816
        %s917 = scalar_lea.vmem [#allocation1], 33
        %918 = vst [vmem:[%s917] ss:$4 sm:$0xff] %v819
        %s919 = scalar_lea.vmem [#allocation1], 34
        %920 = vst [vmem:[%s919] ss:$4 sm:$0xff] %v821
        %s922 = scalar_lea.vmem [#allocation1], 35
        %923 = vst [vmem:[%s922] ss:$4 sm:$0xff] %v824
        %v924 = vld.sshfl [vmem:[#allocation1] sm:$0xff pattern:$0x73625140]
        %v925 = vld.sshfl [vmem:[#allocation1 + $0x8] sm:$0xff pattern:$0x73625140]
        %v926 = vld.sshfl [vmem:[#allocation1 + $0x20] sm:$0xff pattern:$0x73625140]
        %v927 = vld.sshfl [vmem:[#allocation1 + $0x28] sm:$0xff pattern:$0x73625140]
        %929 = vst [vmem:[#allocation1] ss:$4 sm:$0xff] %v827
        %930 = vst [vmem:[%s906] ss:$4 sm:$0xff] %v829
        %932 = vst [vmem:[%s909] ss:$4 sm:$0xff] %v832
        %934 = vst [vmem:[%s911] ss:$4 sm:$0xff] %v835
        %935 = vst [vmem:[%s914] ss:$4 sm:$0xff] %v837
        %937 = vst [vmem:[%s917] ss:$4 sm:$0xff] %v840
        %939 = vst [vmem:[%s919] ss:$4 sm:$0xff] %v843
        %940 = vst [vmem:[%s922] ss:$4 sm:$0xff] %v845
        %v941 = vld.sshfl [vmem:[#allocation1] sm:$0xff pattern:$0x73625140]
        %v942 = vld.sshfl [vmem:[#allocation1 + $0x8] sm:$0xff pattern:$0x73625140]
        %v943 = vld.sshfl [vmem:[#allocation1 + $0x20] sm:$0xff pattern:$0x73625140]
        %v944 = vld.sshfl [vmem:[#allocation1 + $0x28] sm:$0xff pattern:$0x73625140]
        %946 = vst [vmem:[#allocation1] ss:$4 sm:$0xff] %v848
        %948 = vst [vmem:[%s906] ss:$4 sm:$0xff] %v851
        %949 = vst [vmem:[%s909] ss:$4 sm:$0xff] %v853
        %951 = vst [vmem:[%s911] ss:$4 sm:$0xff] %v856
        %953 = vst [vmem:[%s914] ss:$4 sm:$0xff] %v859
        %954 = vst [vmem:[%s917] ss:$4 sm:$0xff] %v861
        %956 = vst [vmem:[%s919] ss:$4 sm:$0xff] %v864
        %958 = vst [vmem:[%s922] ss:$4 sm:$0xff] %v867
        %v959 = vld.sshfl [vmem:[#allocation1] sm:$0xff pattern:$0x73625140]
        %v960 = vld.sshfl [vmem:[#allocation1 + $0x8] sm:$0xff pattern:$0x73625140]
        %v961 = vld.sshfl [vmem:[#allocation1 + $0x20] sm:$0xff pattern:$0x73625140]
        %v962 = vld.sshfl [vmem:[#allocation1 + $0x28] sm:$0xff pattern:$0x73625140]
        %v1005 = vunpack.c.l.b16 %v868
        %v1006 = vunpack.c.h.b16 %v868
        %v1007 = vunpack.c.l.b16 %v869
        %v1008 = vunpack.c.h.b16 %v869
        %v1009 = vunpack.c.l.b16 %v870
        %v1010 = vunpack.c.h.b16 %v870
        %v1011 = vunpack.c.l.b16 %v871
        %v1012 = vunpack.c.h.b16 %v871
        %v1013 = vunpack.c.l.b16 %v872
        %v1014 = vunpack.c.h.b16 %v872
        %v1015 = vunpack.c.l.b16 %v873
        %v1016 = vunpack.c.h.b16 %v873
        %v1017 = vunpack.c.l.b16 %v874
        %v1018 = vunpack.c.h.b16 %v874
        %v1019 = vunpack.c.l.b16 %v875
        %v1020 = vunpack.c.h.b16 %v875
        %v1021 = vunpack.c.l.b16 %v876
        %v1022 = vunpack.c.h.b16 %v876
        %v1023 = vunpack.c.l.b16 %v877
        %v1024 = vunpack.c.h.b16 %v877
        %v1025 = vunpack.c.l.b16 %v878
        %v1026 = vunpack.c.h.b16 %v878
        %v1027 = vunpack.c.l.b16 %v879
        %v1028 = vunpack.c.h.b16 %v879
        %v1029 = vunpack.c.l.b16 %v880
        %v1030 = vunpack.c.h.b16 %v880
        %v1031 = vunpack.c.l.b16 %v881
        %v1032 = vunpack.c.h.b16 %v881
        %v1033 = vunpack.c.l.b16 %v882
        %v1034 = vunpack.c.h.b16 %v882
        %v1035 = vunpack.c.l.b16 %v883
        %v1036 = vunpack.c.h.b16 %v883
        %v1037 = vunpack.c.l.b16 %v884
        %v1038 = vunpack.c.h.b16 %v884
        %v1039 = vunpack.c.l.b16 %v885
        %v1040 = vunpack.c.h.b16 %v885
        %v1041 = vunpack.c.l.b16 %v886
        %v1042 = vunpack.c.h.b16 %v886
        %v1043 = vunpack.c.l.b16 %v887
        %v1044 = vunpack.c.h.b16 %v887
        %v1045 = vunpack.c.l.b16 %v888
        %v1046 = vunpack.c.h.b16 %v888
        %v1047 = vunpack.c.l.b16 %v889
        %v1048 = vunpack.c.h.b16 %v889
        %v1049 = vunpack.c.l.b16 %v890
        %v1050 = vunpack.c.h.b16 %v890
        %v1051 = vunpack.c.l.b16 %v891
        %v1052 = vunpack.c.h.b16 %v891
        %v1053 = vunpack.c.l.b16 %v892
        %v1054 = vunpack.c.h.b16 %v892
        %v1055 = vunpack.c.l.b16 %v893
        %v1056 = vunpack.c.h.b16 %v893
        %v1057 = vunpack.c.l.b16 %v894
        %v1058 = vunpack.c.h.b16 %v894
        %v1059 = vunpack.c.l.b16 %v895
        %v1060 = vunpack.c.h.b16 %v895
        %v1061 = vunpack.c.l.b16 %v896
        %v1062 = vunpack.c.h.b16 %v896
        %v1063 = vunpack.c.l.b16 %v897
        %v1064 = vunpack.c.h.b16 %v897
        %v1065 = vunpack.c.l.b16 %v898
        %v1066 = vunpack.c.h.b16 %v898
        %v1067 = vunpack.c.l.b16 %v899
        %v1068 = vunpack.c.h.b16 %v899
        %v1069 = vunpack.c.l.b16 %v900
        %v1070 = vunpack.c.h.b16 %v900
        %v1071 = vunpack.c.l.b16 %v901
        %v1072 = vunpack.c.h.b16 %v901
        %v1073 = vunpack.c.l.b16 %v902
        %v1074 = vunpack.c.h.b16 %v902
        %v1075 = vunpack.c.l.b16 %v903
        %v1076 = vunpack.c.h.b16 %v903
        %v1077 = vpack.c.b16 %v1009, %v1005
        %v1078 = vpack.c.b16 %v1010, %v1006
        %v1079 = vpack.c.b16 %v1011, %v1007
        %v1080 = vpack.c.b16 %v1012, %v1008
        %v1081 = vpack.c.b16 %v1017, %v1013
        %v1082 = vpack.c.b16 %v1018, %v1014
        %v1083 = vpack.c.b16 %v1019, %v1015
        %v1084 = vpack.c.b16 %v1020, %v1016
        %v1085 = vpack.c.b16 %v1025, %v1021
        %v1086 = vpack.c.b16 %v1026, %v1022
        %v1087 = vpack.c.b16 %v1027, %v1023
        %v1088 = vpack.c.b16 %v1028, %v1024
        %v1089 = vpack.c.b16 %v1033, %v1029
        %v1090 = vpack.c.b16 %v1034, %v1030
        %v1091 = vpack.c.b16 %v1035, %v1031
        %v1092 = vpack.c.b16 %v1036, %v1032
        %v1093 = vpack.c.b16 %v1041, %v1037
        %v1094 = vpack.c.b16 %v1042, %v1038
        %v1095 = vpack.c.b16 %v1043, %v1039
        %v1096 = vpack.c.b16 %v1044, %v1040
        %v1097 = vpack.c.b16 %v1049, %v1045
        %v1098 = vpack.c.b16 %v1050, %v1046
        %v1099 = vpack.c.b16 %v1051, %v1047
        %v1100 = vpack.c.b16 %v1052, %v1048
        %v1101 = vpack.c.b16 %v1057, %v1053
        %v1102 = vpack.c.b16 %v1058, %v1054
        %v1103 = vpack.c.b16 %v1059, %v1055
        %v1104 = vpack.c.b16 %v1060, %v1056
        %v1105 = vpack.c.b16 %v1065, %v1061
        %v1106 = vpack.c.b16 %v1066, %v1062
        %v1107 = vpack.c.b16 %v1067, %v1063
        %v1108 = vpack.c.b16 %v1068, %v1064
        %v1109 = vpack.c.b16 %v1073, %v1069
        %v1110 = vpack.c.b16 %v1074, %v1070
        %v1111 = vpack.c.b16 %v1075, %v1071
        %v1112 = vpack.c.b16 %v1076, %v1072
        %vm1145 = vcmask 97280
        %v1146 = vsel %vm1145, %v925, 0
        %v1148 = vsel %vm1145, %v927, 0
        %v1150 = vsel %vm1145, %v942, 0
        %v1152 = vsel %vm1145, %v944, 0
        %v1154 = vsel %vm1145, %v960, 0
        %v1156 = vsel %vm1145, %v962, 0
        %vm1158 = vcmask 1045504
        %v1160 = vsel %vm1158, %v1109, 0
        %v1163 = vsel %vm1158, %v1110, 0
        %v1166 = vsel %vm1158, %v1111, 0
        %v1169 = vsel %vm1158, %v1112, 0
        %1171 = vmatpush.bf16.msra.mxu0 %v1105
        %1172 = vmatpush.bf16.msra.mxu0 %v1101
        %1173 = vmatpush.bf16.msra.mxu0 %v1097
        %1174 = vmatpush.bf16.msra.mxu0 %v1093
        %1175 = vmatpush.bf16.msra.mxu0 %v1089
        %1176 = vmatpush.bf16.msra.mxu0 %v1085
        %1177 = vmatpush.bf16.msra.mxu0 %v1081
        %1178 = vmatpush.bf16.msra.mxu0 %v1077
        %1179 = vmatmul.bf16.gmra.mxu0 %v924
        %v1180 = vpop.f32.mrf.mxu0
        %v1181 = vadd.f32 0.0, %v1180
        %v1182 = vpop.f32.mrf.mxu0
        %v1183 = vadd.f32 0.0, %v1182
        %1184 = vmatmul.bf16.gmra.mxu0 %v926
        %v1185 = vpop.f32.mrf.mxu0
        %v1186 = vadd.f32 0.0, %v1185
        %v1187 = vpop.f32.mrf.mxu0
        %v1188 = vadd.f32 0.0, %v1187
        %1189 = vmatmul.bf16.gmra.mxu0 %v941
        %v1190 = vpop.f32.mrf.mxu0
        %v1191 = vadd.f32 0.0, %v1190
        %v1192 = vpop.f32.mrf.mxu0
        %v1193 = vadd.f32 0.0, %v1192
        %1194 = vmatmul.bf16.gmra.mxu0 %v943
        %v1195 = vpop.f32.mrf.mxu0
        %v1196 = vadd.f32 0.0, %v1195
        %v1197 = vpop.f32.mrf.mxu0
        %v1198 = vadd.f32 0.0, %v1197
        %1199 = vmatmul.bf16.gmra.mxu0 %v959
        %v1200 = vpop.f32.mrf.mxu0
        %v1201 = vadd.f32 0.0, %v1200
        %v1202 = vpop.f32.mrf.mxu0
        %v1203 = vadd.f32 0.0, %v1202
        %1204 = vmatmul.bf16.gmra.mxu0 %v961
        %v1205 = vpop.f32.mrf.mxu0
        %v1206 = vadd.f32 0.0, %v1205
        %v1207 = vpop.f32.mrf.mxu0
        %v1208 = vadd.f32 0.0, %v1207
        %1209 = vdwg.mxu0
        %1210 = vmatpush.bf16.msra.mxu0 0
        %1211 = vmatpush.bf16.msra.mxu0 0
        %1212 = vmatpush.bf16.msra.mxu0 0
        %1213 = vmatpush.bf16.msra.mxu0 0
        %1214 = vmatpush.bf16.msra.mxu0 0
        %1215 = vmatpush.bf16.msra.mxu0 0
        %1216 = vmatpush.bf16.msra.mxu0 0
        %1217 = vmatpush.bf16.msra.mxu0 %v1160
        %1218 = vmatmul.bf16.gmra.mxu0 %v1146
        %v1219 = vpop.f32.mrf.mxu0
        %v1220 = vadd.f32 %v1181, %v1219
        %v1221 = vpop.f32.mrf.mxu0
        %v1222 = vadd.f32 %v1183, %v1221
        %1223 = vmatmul.bf16.gmra.mxu0 %v1148
        %v1224 = vpop.f32.mrf.mxu0
        %v1225 = vadd.f32 %v1186, %v1224
        %v1226 = vpop.f32.mrf.mxu0
        %v1227 = vadd.f32 %v1188, %v1226
        %1228 = vmatmul.bf16.gmra.mxu0 %v1150
        %v1229 = vpop.f32.mrf.mxu0
        %v1230 = vadd.f32 %v1191, %v1229
        %v1231 = vpop.f32.mrf.mxu0
        %v1232 = vadd.f32 %v1193, %v1231
        %1233 = vmatmul.bf16.gmra.mxu0 %v1152
        %v1234 = vpop.f32.mrf.mxu0
        %v1235 = vadd.f32 %v1196, %v1234
        %v1236 = vpop.f32.mrf.mxu0
        %v1237 = vadd.f32 %v1198, %v1236
        %1238 = vmatmul.bf16.gmra.mxu0 %v1154
        %v1239 = vpop.f32.mrf.mxu0
        %v1240 = vadd.f32 %v1201, %v1239
        %v1241 = vpop.f32.mrf.mxu0
        %v1242 = vadd.f32 %v1203, %v1241
        %1243 = vmatmul.bf16.gmra.mxu0 %v1156
        %v1244 = vpop.f32.mrf.mxu0
        %v1245 = vadd.f32 %v1206, %v1244
        %v1246 = vpop.f32.mrf.mxu0
        %v1247 = vadd.f32 %v1208, %v1246
        %1248 = vdwg.mxu0
        %1249 = vmatpush.bf16.msra.mxu0 %v1106
        %1250 = vmatpush.bf16.msra.mxu0 %v1102
        %1251 = vmatpush.bf16.msra.mxu0 %v1098
        %1252 = vmatpush.bf16.msra.mxu0 %v1094
        %1253 = vmatpush.bf16.msra.mxu0 %v1090
        %1254 = vmatpush.bf16.msra.mxu0 %v1086
        %1255 = vmatpush.bf16.msra.mxu0 %v1082
        %1256 = vmatpush.bf16.msra.mxu0 %v1078
        %1257 = vmatmul.bf16.gmra.mxu0 %v924
        %v1258 = vpop.f32.mrf.mxu0
        %v1259 = vadd.f32 0.0, %v1258
        %v1260 = vpop.f32.mrf.mxu0
        %v1261 = vadd.f32 0.0, %v1260
        %1262 = vmatmul.bf16.gmra.mxu0 %v926
        %v1263 = vpop.f32.mrf.mxu0
        %v1264 = vadd.f32 0.0, %v1263
        %v1265 = vpop.f32.mrf.mxu0
        %v1266 = vadd.f32 0.0, %v1265
        %1267 = vmatmul.bf16.gmra.mxu0 %v941
        %v1268 = vpop.f32.mrf.mxu0
        %v1269 = vadd.f32 0.0, %v1268
        %v1270 = vpop.f32.mrf.mxu0
        %v1271 = vadd.f32 0.0, %v1270
        %1272 = vmatmul.bf16.gmra.mxu0 %v943
        %v1273 = vpop.f32.mrf.mxu0
        %v1274 = vadd.f32 0.0, %v1273
        %v1275 = vpop.f32.mrf.mxu0
        %v1276 = vadd.f32 0.0, %v1275
        %1277 = vmatmul.bf16.gmra.mxu0 %v959
        %v1278 = vpop.f32.mrf.mxu0
        %v1279 = vadd.f32 0.0, %v1278
        %v1280 = vpop.f32.mrf.mxu0
        %v1281 = vadd.f32 0.0, %v1280
        %1282 = vmatmul.bf16.gmra.mxu0 %v961
        %v1283 = vpop.f32.mrf.mxu0
        %v1284 = vadd.f32 0.0, %v1283
        %v1285 = vpop.f32.mrf.mxu0
        %v1286 = vadd.f32 0.0, %v1285
        %1287 = vdwg.mxu0
        %1288 = vmatpush.bf16.msra.mxu0 0
        %1289 = vmatpush.bf16.msra.mxu0 0
        %1290 = vmatpush.bf16.msra.mxu0 0
        %1291 = vmatpush.bf16.msra.mxu0 0
        %1292 = vmatpush.bf16.msra.mxu0 0
        %1293 = vmatpush.bf16.msra.mxu0 0
        %1294 = vmatpush.bf16.msra.mxu0 0
        %1295 = vmatpush.bf16.msra.mxu0 %v1163
        %1296 = vmatmul.bf16.gmra.mxu0 %v1146
        %v1297 = vpop.f32.mrf.mxu0
        %v1298 = vadd.f32 %v1259, %v1297
        %v1299 = vpop.f32.mrf.mxu0
        %v1300 = vadd.f32 %v1261, %v1299
        %1301 = vmatmul.bf16.gmra.mxu0 %v1148
        %v1302 = vpop.f32.mrf.mxu0
        %v1303 = vadd.f32 %v1264, %v1302
        %v1304 = vpop.f32.mrf.mxu0
        %v1305 = vadd.f32 %v1266, %v1304
        %1306 = vmatmul.bf16.gmra.mxu0 %v1150
        %v1307 = vpop.f32.mrf.mxu0
        %v1308 = vadd.f32 %v1269, %v1307
        %v1309 = vpop.f32.mrf.mxu0
        %v1310 = vadd.f32 %v1271, %v1309
        %1311 = vmatmul.bf16.gmra.mxu0 %v1152
        %v1312 = vpop.f32.mrf.mxu0
        %v1313 = vadd.f32 %v1274, %v1312
        %v1314 = vpop.f32.mrf.mxu0
        %v1315 = vadd.f32 %v1276, %v1314
        %1316 = vmatmul.bf16.gmra.mxu0 %v1154
        %v1317 = vpop.f32.mrf.mxu0
        %v1318 = vadd.f32 %v1279, %v1317
        %v1319 = vpop.f32.mrf.mxu0
        %v1320 = vadd.f32 %v1281, %v1319
        %1321 = vmatmul.bf16.gmra.mxu0 %v1156
        %v1322 = vpop.f32.mrf.mxu0
        %v1323 = vadd.f32 %v1284, %v1322
        %v1324 = vpop.f32.mrf.mxu0
        %v1325 = vadd.f32 %v1286, %v1324
        %1326 = vdwg.mxu0
        %1327 = vmatpush.bf16.msra.mxu0 %v1107
        %1328 = vmatpush.bf16.msra.mxu0 %v1103
        %1329 = vmatpush.bf16.msra.mxu0 %v1099
        %1330 = vmatpush.bf16.msra.mxu0 %v1095
        %1331 = vmatpush.bf16.msra.mxu0 %v1091
        %1332 = vmatpush.bf16.msra.mxu0 %v1087
        %1333 = vmatpush.bf16.msra.mxu0 %v1083
        %1334 = vmatpush.bf16.msra.mxu0 %v1079
        %1335 = vmatmul.bf16.gmra.mxu0 %v924
        %v1336 = vpop.f32.mrf.mxu0
        %v1337 = vadd.f32 0.0, %v1336
        %v1338 = vpop.f32.mrf.mxu0
        %v1339 = vadd.f32 0.0, %v1338
        %1340 = vmatmul.bf16.gmra.mxu0 %v926
        %v1341 = vpop.f32.mrf.mxu0
        %v1342 = vadd.f32 0.0, %v1341
        %v1343 = vpop.f32.mrf.mxu0
        %v1344 = vadd.f32 0.0, %v1343
        %1345 = vmatmul.bf16.gmra.mxu0 %v941
        %v1346 = vpop.f32.mrf.mxu0
        %v1347 = vadd.f32 0.0, %v1346
        %v1348 = vpop.f32.mrf.mxu0
        %v1349 = vadd.f32 0.0, %v1348
        %1350 = vmatmul.bf16.gmra.mxu0 %v943
        %v1351 = vpop.f32.mrf.mxu0
        %v1352 = vadd.f32 0.0, %v1351
        %v1353 = vpop.f32.mrf.mxu0
        %v1354 = vadd.f32 0.0, %v1353
        %1355 = vmatmul.bf16.gmra.mxu0 %v959
        %v1356 = vpop.f32.mrf.mxu0
        %v1357 = vadd.f32 0.0, %v1356
        %v1358 = vpop.f32.mrf.mxu0
        %v1359 = vadd.f32 0.0, %v1358
        %1360 = vmatmul.bf16.gmra.mxu0 %v961
        %v1361 = vpop.f32.mrf.mxu0
        %v1362 = vadd.f32 0.0, %v1361
        %v1363 = vpop.f32.mrf.mxu0
        %v1364 = vadd.f32 0.0, %v1363
        %1365 = vdwg.mxu0
        %1366 = vmatpush.bf16.msra.mxu0 0
        %1367 = vmatpush.bf16.msra.mxu0 0
        %1368 = vmatpush.bf16.msra.mxu0 0
        %1369 = vmatpush.bf16.msra.mxu0 0
        %1370 = vmatpush.bf16.msra.mxu0 0
        %1371 = vmatpush.bf16.msra.mxu0 0
        %1372 = vmatpush.bf16.msra.mxu0 0
        %1373 = vmatpush.bf16.msra.mxu0 %v1166
        %1374 = vmatmul.bf16.gmra.mxu0 %v1146
        %v1375 = vpop.f32.mrf.mxu0
        %v1376 = vadd.f32 %v1337, %v1375
        %v1377 = vpop.f32.mrf.mxu0
        %v1378 = vadd.f32 %v1339, %v1377
        %1379 = vmatmul.bf16.gmra.mxu0 %v1148
        %v1380 = vpop.f32.mrf.mxu0
        %v1381 = vadd.f32 %v1342, %v1380
        %v1382 = vpop.f32.mrf.mxu0
        %v1383 = vadd.f32 %v1344, %v1382
        %1384 = vmatmul.bf16.gmra.mxu0 %v1150
        %v1385 = vpop.f32.mrf.mxu0
        %v1386 = vadd.f32 %v1347, %v1385
        %v1387 = vpop.f32.mrf.mxu0
        %v1388 = vadd.f32 %v1349, %v1387
        %1389 = vmatmul.bf16.gmra.mxu0 %v1152
        %v1390 = vpop.f32.mrf.mxu0
        %v1391 = vadd.f32 %v1352, %v1390
        %v1392 = vpop.f32.mrf.mxu0
        %v1393 = vadd.f32 %v1354, %v1392
        %1394 = vmatmul.bf16.gmra.mxu0 %v1154
        %v1395 = vpop.f32.mrf.mxu0
        %v1396 = vadd.f32 %v1357, %v1395
        %v1397 = vpop.f32.mrf.mxu0
        %v1398 = vadd.f32 %v1359, %v1397
        %1399 = vmatmul.bf16.gmra.mxu0 %v1156
        %v1400 = vpop.f32.mrf.mxu0
        %v1401 = vadd.f32 %v1362, %v1400
        %v1402 = vpop.f32.mrf.mxu0
        %v1403 = vadd.f32 %v1364, %v1402
        %1404 = vdwg.mxu0
        %1405 = vmatpush.bf16.msra.mxu0 %v1108
        %1406 = vmatpush.bf16.msra.mxu0 %v1104
        %1407 = vmatpush.bf16.msra.mxu0 %v1100
        %1408 = vmatpush.bf16.msra.mxu0 %v1096
        %1409 = vmatpush.bf16.msra.mxu0 %v1092
        %1410 = vmatpush.bf16.msra.mxu0 %v1088
        %1411 = vmatpush.bf16.msra.mxu0 %v1084
        %1412 = vmatpush.bf16.msra.mxu0 %v1080
        %1413 = vmatmul.bf16.gmra.mxu0 %v924
        %v1414 = vpop.f32.mrf.mxu0
        %v1415 = vadd.f32 0.0, %v1414
        %v1416 = vpop.f32.mrf.mxu0
        %v1417 = vadd.f32 0.0, %v1416
        %1418 = vmatmul.bf16.gmra.mxu0 %v926
        %v1419 = vpop.f32.mrf.mxu0
        %v1420 = vadd.f32 0.0, %v1419
        %v1421 = vpop.f32.mrf.mxu0
        %v1422 = vadd.f32 0.0, %v1421
        %1423 = vmatmul.bf16.gmra.mxu0 %v941
        %v1424 = vpop.f32.mrf.mxu0
        %v1425 = vadd.f32 0.0, %v1424
        %v1426 = vpop.f32.mrf.mxu0
        %v1427 = vadd.f32 0.0, %v1426
        %1428 = vmatmul.bf16.gmra.mxu0 %v943
        %v1429 = vpop.f32.mrf.mxu0
        %v1430 = vadd.f32 0.0, %v1429
        %v1431 = vpop.f32.mrf.mxu0
        %v1432 = vadd.f32 0.0, %v1431
        %1433 = vmatmul.bf16.gmra.mxu0 %v959
        %v1434 = vpop.f32.mrf.mxu0
        %v1435 = vadd.f32 0.0, %v1434
        %v1436 = vpop.f32.mrf.mxu0
        %v1437 = vadd.f32 0.0, %v1436
        %1438 = vmatmul.bf16.gmra.mxu0 %v961
        %v1439 = vpop.f32.mrf.mxu0
        %v1440 = vadd.f32 0.0, %v1439
        %v1441 = vpop.f32.mrf.mxu0
        %v1442 = vadd.f32 0.0, %v1441
        %1443 = vdwg.mxu0
        %1444 = vmatpush.bf16.msra.mxu0 0
        %1445 = vmatpush.bf16.msra.mxu0 0
        %1446 = vmatpush.bf16.msra.mxu0 0
        %1447 = vmatpush.bf16.msra.mxu0 0
        %1448 = vmatpush.bf16.msra.mxu0 0
        %1449 = vmatpush.bf16.msra.mxu0 0
        %1450 = vmatpush.bf16.msra.mxu0 0
        %1451 = vmatpush.bf16.msra.mxu0 %v1169
        %1452 = vmatmul.bf16.gmra.mxu0 %v1146
        %v1453 = vpop.f32.mrf.mxu0
        %v1454 = vadd.f32 %v1415, %v1453
        %v1455 = vpop.f32.mrf.mxu0
        %v1456 = vadd.f32 %v1417, %v1455
        %1457 = vmatmul.bf16.gmra.mxu0 %v1148
        %v1458 = vpop.f32.mrf.mxu0
        %v1459 = vadd.f32 %v1420, %v1458
        %v1460 = vpop.f32.mrf.mxu0
        %v1461 = vadd.f32 %v1422, %v1460
        %1462 = vmatmul.bf16.gmra.mxu0 %v1150
        %v1463 = vpop.f32.mrf.mxu0
        %v1464 = vadd.f32 %v1425, %v1463
        %v1465 = vpop.f32.mrf.mxu0
        %v1466 = vadd.f32 %v1427, %v1465
        %1467 = vmatmul.bf16.gmra.mxu0 %v1152
        %v1468 = vpop.f32.mrf.mxu0
        %v1469 = vadd.f32 %v1430, %v1468
        %v1470 = vpop.f32.mrf.mxu0
        %v1471 = vadd.f32 %v1432, %v1470
        %1472 = vmatmul.bf16.gmra.mxu0 %v1154
        %v1473 = vpop.f32.mrf.mxu0
        %v1474 = vadd.f32 %v1435, %v1473
        %v1475 = vpop.f32.mrf.mxu0
        %v1476 = vadd.f32 %v1437, %v1475
        %1477 = vmatmul.bf16.gmra.mxu0 %v1156
        %v1478 = vpop.f32.mrf.mxu0
        %v1479 = vadd.f32 %v1440, %v1478
        %v1480 = vpop.f32.mrf.mxu0
        %v1481 = vadd.f32 %v1442, %v1480
        %1482 = vdwg.mxu0
        %v1483 = vrot.slane %v477, 5
        %v1484 = vrot.slane %v479, 6
        %v1485 = vor.u32 %v1483, %v1484
        %v1486 = vrot.slane %v484, 5
        %v1487 = vrot.slane %v486, 6
        %v1488 = vor.u32 %v1486, %v1487
        %v1489 = vrot.slane %v491, 5
        %v1490 = vrot.slane %v493, 6
        %v1491 = vor.u32 %v1489, %v1490
        %v1492 = vrot.slane %v498, 5
        %v1493 = vrot.slane %v500, 6
        %v1494 = vor.u32 %v1492, %v1493
        %v1495 = vrot.slane %v505, 5
        %v1496 = vrot.slane %v507, 6
        %v1497 = vor.u32 %v1495, %v1496
        %v1498 = vrot.slane %v512, 5
        %v1499 = vrot.slane %v514, 6
        %v1500 = vor.u32 %v1498, %v1499
        %v1501 = vrot.slane %v519, 5
        %v1502 = vrot.slane %v521, 6
        %v1503 = vor.u32 %v1501, %v1502
        %v1504 = vrot.slane %v526, 5
        %v1505 = vrot.slane %v528, 6
        %v1506 = vor.u32 %v1504, %v1505
        %1507 = vrot.lane.b32.xlu0 %v1485, 28
        %v1508 = vpop.permute.xlu0 %1507
        %1509 = vrot.lane.b32.xlu0 %v1488, 28
        %v1510 = vpop.permute.xlu0 %1509
        %1511 = vrot.lane.b32.xlu0 %v1491, 28
        %v1512 = vpop.permute.xlu0 %1511
        %1513 = vrot.lane.b32.xlu0 %v1494, 28
        %v1514 = vpop.permute.xlu0 %1513
        %1515 = vrot.lane.b32.xlu0 %v1497, 28
        %v1516 = vpop.permute.xlu0 %1515
        %1517 = vrot.lane.b32.xlu0 %v1500, 28
        %v1518 = vpop.permute.xlu0 %1517
        %1519 = vrot.lane.b32.xlu0 %v1503, 28
        %v1520 = vpop.permute.xlu0 %1519
        %1521 = vrot.lane.b32.xlu0 %v1506, 28
        %v1522 = vpop.permute.xlu0 %1521
        %vm1523 = vsmask.f32 7424
        %v1524 = vrot.slane %v553, 1
        %v1525 = vor.u32 %v550, %v1524
        %v1526 = vrot.slane %v561, 1
        %v1527 = vsel %vm1523, %v1525, %v1526
        %v1528 = vor.u32 %v558, %v1526
        %v1529 = vrot.slane %v570, 1
        %v1530 = vor.u32 %v567, %v1529
        %v1531 = vrot.slane %v578, 1
        %v1532 = vsel %vm1523, %v1530, %v1531
        %v1533 = vor.u32 %v575, %v1531
        %v1534 = vrot.slane %v587, 1
        %v1535 = vor.u32 %v584, %v1534
        %v1536 = vrot.slane %v595, 1
        %v1537 = vsel %vm1523, %v1535, %v1536
        %v1538 = vor.u32 %v592, %v1536
        %v1539 = vrot.slane %v604, 1
        %v1540 = vor.u32 %v601, %v1539
        %v1541 = vrot.slane %v612, 1
        %v1542 = vsel %vm1523, %v1540, %v1541
        %v1543 = vor.u32 %v609, %v1541
        %v1544 = vrot.slane %v621, 1
        %v1545 = vor.u32 %v618, %v1544
        %v1546 = vrot.slane %v629, 1
        %v1547 = vsel %vm1523, %v1545, %v1546
        %v1548 = vor.u32 %v626, %v1546
        %v1549 = vrot.slane %v638, 1
        %v1550 = vor.u32 %v635, %v1549
        %v1551 = vrot.slane %v646, 1
        %v1552 = vsel %vm1523, %v1550, %v1551
        %v1553 = vor.u32 %v643, %v1551
        %v1554 = vrot.slane %v655, 1
        %v1555 = vor.u32 %v652, %v1554
        %v1556 = vrot.slane %v663, 1
        %v1557 = vsel %vm1523, %v1555, %v1556
        %v1558 = vor.u32 %v660, %v1556
        %v1559 = vrot.slane %v672, 1
        %v1560 = vor.u32 %v669, %v1559
        %v1561 = vrot.slane %v680, 1
        %v1562 = vsel %vm1523, %v1560, %v1561
        %v1563 = vor.u32 %v677, %v1561
        %1564 = vrot.lane.b32.xlu0 %v1527, 56
        %v1565 = vpop.permute.xlu0 %1564
        %1566 = vrot.lane.b32.xlu0 %v1528, 56
        %v1567 = vpop.permute.xlu0 %1566
        %1568 = vrot.lane.b32.xlu0 %v1532, 56
        %v1569 = vpop.permute.xlu0 %1568
        %1570 = vrot.lane.b32.xlu0 %v1533, 56
        %v1571 = vpop.permute.xlu0 %1570
        %1572 = vrot.lane.b32.xlu0 %v1537, 56
        %v1573 = vpop.permute.xlu0 %1572
        %1574 = vrot.lane.b32.xlu0 %v1538, 56
        %v1575 = vpop.permute.xlu0 %1574
        %1576 = vrot.lane.b32.xlu0 %v1542, 56
        %v1577 = vpop.permute.xlu0 %1576
        %1578 = vrot.lane.b32.xlu0 %v1543, 56
        %v1579 = vpop.permute.xlu0 %1578
        %1580 = vrot.lane.b32.xlu0 %v1547, 56
        %v1581 = vpop.permute.xlu0 %1580
        %1582 = vrot.lane.b32.xlu0 %v1548, 56
        %v1583 = vpop.permute.xlu0 %1582
        %1584 = vrot.lane.b32.xlu0 %v1552, 56
        %v1585 = vpop.permute.xlu0 %1584
        %1586 = vrot.lane.b32.xlu0 %v1553, 56
        %v1587 = vpop.permute.xlu0 %1586
        %1588 = vrot.lane.b32.xlu0 %v1557, 56
        %v1589 = vpop.permute.xlu0 %1588
        %1590 = vrot.lane.b32.xlu0 %v1558, 56
        %v1591 = vpop.permute.xlu0 %1590
        %1592 = vrot.lane.b32.xlu0 %v1562, 56
        %v1593 = vpop.permute.xlu0 %1592
        %1594 = vrot.lane.b32.xlu0 %v1563, 56
        %v1595 = vpop.permute.xlu0 %1594
        %v1596 = vrot.slane %v379, 6
        %v1597 = vrot.slane %v380, 6
        %v1598 = vrot.slane %v381, 6
        %v1599 = vrot.slane %v382, 6
        %v1600 = vrot.slane %v383, 6
        %v1601 = vrot.slane %v384, 6
        %v1602 = vrot.slane %v385, 6
        %v1603 = vrot.slane %v386, 6
        %1604 = vrot.lane.b32.xlu0 %v1596, 84
        %v1605 = vpop.permute.xlu0 %1604
        %1606 = vrot.lane.b32.xlu0 %v1597, 84
        %v1607 = vpop.permute.xlu0 %1606
        %1608 = vrot.lane.b32.xlu0 %v1598, 84
        %v1609 = vpop.permute.xlu0 %1608
        %1610 = vrot.lane.b32.xlu0 %v1599, 84
        %v1611 = vpop.permute.xlu0 %1610
        %1612 = vrot.lane.b32.xlu0 %v1600, 84
        %v1613 = vpop.permute.xlu0 %1612
        %1614 = vrot.lane.b32.xlu0 %v1601, 84
        %v1615 = vpop.permute.xlu0 %1614
        %1616 = vrot.lane.b32.xlu0 %v1602, 84
        %v1617 = vpop.permute.xlu0 %1616
        %1618 = vrot.lane.b32.xlu0 %v1603, 84
        %v1619 = vpop.permute.xlu0 %1618
        %v1620 = vpack.c.b16 %v404, %v403
        %v1621 = vpack.c.b16 %v406, %v405
        %v1622 = vpack.c.b16 %v408, %v407
        %v1623 = vpack.c.b16 %v410, %v409
        %v1624 = vpack.c.b16 %v412, %v411
        %v1625 = vpack.c.b16 %v414, %v413
        %v1626 = vpack.c.b16 %v416, %v415
        %v1627 = vpack.c.b16 %v418, %v417
        %v1628 = vrot.slane %v1620, 5
        %v1629 = vrot.slane %v1621, 5
        %v1630 = vrot.slane %v1622, 5
        %v1631 = vrot.slane %v1623, 5
        %v1632 = vrot.slane %v1624, 5
        %v1633 = vrot.slane %v1625, 5
        %v1634 = vrot.slane %v1626, 5
        %v1635 = vrot.slane %v1627, 5
        %1636 = vrot.lane.b32.xlu0 %v1628, 112
        %v1637 = vpop.permute.xlu0 %1636
        %1638 = vrot.lane.b32.xlu0 %v1629, 112
        %v1639 = vpop.permute.xlu0 %1638
        %1640 = vrot.lane.b32.xlu0 %v1630, 112
        %v1641 = vpop.permute.xlu0 %1640
        %1642 = vrot.lane.b32.xlu0 %v1631, 112
        %v1643 = vpop.permute.xlu0 %1642
        %1644 = vrot.lane.b32.xlu0 %v1632, 112
        %v1645 = vpop.permute.xlu0 %1644
        %1646 = vrot.lane.b32.xlu0 %v1633, 112
        %v1647 = vpop.permute.xlu0 %1646
        %1648 = vrot.lane.b32.xlu0 %v1634, 112
        %v1649 = vpop.permute.xlu0 %1648
        %1650 = vrot.lane.b32.xlu0 %v1635, 112
        %v1651 = vpop.permute.xlu0 %1650
        %v1653 = vsel %vm725, %v419, %v1508
        %v1654 = vsel %vm725, %v420, %v1508
        %v1656 = vsel %vm725, %v421, %v1510
        %v1657 = vsel %vm725, %v422, %v1510
        %v1659 = vsel %vm725, %v423, %v1512
        %v1660 = vsel %vm725, %v424, %v1512
        %v1662 = vsel %vm725, %v425, %v1514
        %v1663 = vsel %vm725, %v426, %v1514
        %v1665 = vsel %vm725, %v427, %v1516
        %v1666 = vsel %vm725, %v428, %v1516
        %v1668 = vsel %vm725, %v429, %v1518
        %v1669 = vsel %vm725, %v430, %v1518
        %v1671 = vsel %vm725, %v431, %v1520
        %v1672 = vsel %vm725, %v432, %v1520
        %v1674 = vsel %vm725, %v433, %v1522
        %v1675 = vsel %vm725, %v434, %v1522
        %v1677 = vsel %vm742, %v1653, %v1565
        %v1679 = vsel %vm742, %v1654, %v1567
        %v1681 = vsel %vm742, %v1656, %v1569
        %v1683 = vsel %vm742, %v1657, %v1571
        %v1685 = vsel %vm742, %v1659, %v1573
        %v1687 = vsel %vm742, %v1660, %v1575
        %v1689 = vsel %vm742, %v1662, %v1577
        %v1691 = vsel %vm742, %v1663, %v1579
        %v1693 = vsel %vm742, %v1665, %v1581
        %v1695 = vsel %vm742, %v1666, %v1583
        %v1697 = vsel %vm742, %v1668, %v1585
        %v1699 = vsel %vm742, %v1669, %v1587
        %v1701 = vsel %vm742, %v1671, %v1589
        %v1703 = vsel %vm742, %v1672, %v1591
        %v1705 = vsel %vm742, %v1674, %v1593
        %v1707 = vsel %vm742, %v1675, %v1595
        %v1709 = vsel %vm759, %v1677, %v1605
        %v1710 = vsel %vm759, %v1679, %v1605
        %v1712 = vsel %vm759, %v1681, %v1607
        %v1713 = vsel %vm759, %v1683, %v1607
        %v1715 = vsel %vm759, %v1685, %v1609
        %v1716 = vsel %vm759, %v1687, %v1609
        %v1718 = vsel %vm759, %v1689, %v1611
        %v1719 = vsel %vm759, %v1691, %v1611
        %v1721 = vsel %vm759, %v1693, %v1613
        %v1722 = vsel %vm759, %v1695, %v1613
        %v1724 = vsel %vm759, %v1697, %v1615
        %v1725 = vsel %vm759, %v1699, %v1615
        %v1727 = vsel %vm759, %v1701, %v1617
        %v1728 = vsel %vm759, %v1703, %v1617
        %v1730 = vsel %vm759, %v1705, %v1619
        %v1731 = vsel %vm759, %v1707, %v1619
        %v1733 = vsel %vm776, %v1709, %v1637
        %v1734 = vsel %vm776, %v1710, %v1637
        %v1736 = vsel %vm776, %v1712, %v1639
        %v1737 = vsel %vm776, %v1713, %v1639
        %v1739 = vsel %vm776, %v1715, %v1641
        %v1740 = vsel %vm776, %v1716, %v1641
        %v1742 = vsel %vm776, %v1718, %v1643
        %v1743 = vsel %vm776, %v1719, %v1643
        %v1745 = vsel %vm776, %v1721, %v1645
        %v1746 = vsel %vm776, %v1722, %v1645
        %v1748 = vsel %vm776, %v1724, %v1647
        %v1749 = vsel %vm776, %v1725, %v1647
        %v1751 = vsel %vm776, %v1727, %v1649
        %v1752 = vsel %vm776, %v1728, %v1649
        %v1754 = vsel %vm776, %v1730, %v1651
        %v1755 = vsel %vm776, %v1731, %v1651
        %1756 = vst.sshfl [vmem:[#allocation1] sm:$0xff pattern:$0x73625140] %v1733
        %1757 = vst.sshfl [vmem:[#allocation1 + $0x8] sm:$0xff pattern:$0x73625140] %v1637
        %1758 = vst.sshfl [vmem:[#allocation1 + $0x20] sm:$0xff pattern:$0x73625140] %v1734
        %1759 = vst.sshfl [vmem:[#allocation1 + $0x28] sm:$0xff pattern:$0x73625140] %v1637
        %s1760 = scalar_lea.vmem [#allocation1], 1
        %v1761 = vld [vmem:[%s1760] ss:$4 sm:$0xff]
        %s1763 = scalar_lea.vmem [#allocation1], 2
        %v1764 = vld [vmem:[%s1763] ss:$4 sm:$0xff]
        %s1766 = scalar_lea.vmem [#allocation1], 3
        %v1767 = vld [vmem:[%s1766] ss:$4 sm:$0xff]
        %s1769 = scalar_lea.vmem [#allocation1], 32
        %v1770 = vld [vmem:[%s1769] ss:$4 sm:$0xff]
        %1772 = vst.sshfl [vmem:[#allocation1] sm:$0xff pattern:$0x73625140] %v1736
        %1773 = vst.sshfl [vmem:[#allocation1 + $0x8] sm:$0xff pattern:$0x73625140] %v1639
        %1774 = vst.sshfl [vmem:[#allocation1 + $0x20] sm:$0xff pattern:$0x73625140] %v1737
        %1775 = vst.sshfl [vmem:[#allocation1 + $0x28] sm:$0xff pattern:$0x73625140] %v1639
        %v1776 = vld [vmem:[%s1760] ss:$4 sm:$0xff]
        %v1778 = vld [vmem:[%s1763] ss:$4 sm:$0xff]
        %v1780 = vld [vmem:[%s1766] ss:$4 sm:$0xff]
        %v1782 = vld [vmem:[%s1769] ss:$4 sm:$0xff]
        %1784 = vst.sshfl [vmem:[#allocation1] sm:$0xff pattern:$0x73625140] %v1739
        %1785 = vst.sshfl [vmem:[#allocation1 + $0x8] sm:$0xff pattern:$0x73625140] %v1641
        %1786 = vst.sshfl [vmem:[#allocation1 + $0x20] sm:$0xff pattern:$0x73625140] %v1740
        %1787 = vst.sshfl [vmem:[#allocation1 + $0x28] sm:$0xff pattern:$0x73625140] %v1641
        %v1788 = vld [vmem:[%s1760] ss:$4 sm:$0xff]
        %v1790 = vld [vmem:[%s1763] ss:$4 sm:$0xff]
        %v1792 = vld [vmem:[%s1766] ss:$4 sm:$0xff]
        %v1794 = vld [vmem:[%s1769] ss:$4 sm:$0xff]
        %1796 = vst.sshfl [vmem:[#allocation1] sm:$0xff pattern:$0x73625140] %v1742
        %1797 = vst.sshfl [vmem:[#allocation1 + $0x8] sm:$0xff pattern:$0x73625140] %v1643
        %1798 = vst.sshfl [vmem:[#allocation1 + $0x20] sm:$0xff pattern:$0x73625140] %v1743
        %1799 = vst.sshfl [vmem:[#allocation1 + $0x28] sm:$0xff pattern:$0x73625140] %v1643
        %v1800 = vld [vmem:[%s1760] ss:$4 sm:$0xff]
        %v1802 = vld [vmem:[%s1763] ss:$4 sm:$0xff]
        %v1804 = vld [vmem:[%s1766] ss:$4 sm:$0xff]
        %v1806 = vld [vmem:[%s1769] ss:$4 sm:$0xff]
        %1808 = vst.sshfl [vmem:[#allocation1] sm:$0xff pattern:$0x73625140] %v1745
        %1809 = vst.sshfl [vmem:[#allocation1 + $0x8] sm:$0xff pattern:$0x73625140] %v1645
        %1810 = vst.sshfl [vmem:[#allocation1 + $0x20] sm:$0xff pattern:$0x73625140] %v1746
        %1811 = vst.sshfl [vmem:[#allocation1 + $0x28] sm:$0xff pattern:$0x73625140] %v1645
        %v1812 = vld [vmem:[%s1760] ss:$4 sm:$0xff]
        %v1814 = vld [vmem:[%s1763] ss:$4 sm:$0xff]
        %v1816 = vld [vmem:[%s1766] ss:$4 sm:$0xff]
        %v1818 = vld [vmem:[%s1769] ss:$4 sm:$0xff]
        %1820 = vst.sshfl [vmem:[#allocation1] sm:$0xff pattern:$0x73625140] %v1748
        %1821 = vst.sshfl [vmem:[#allocation1 + $0x8] sm:$0xff pattern:$0x73625140] %v1647
        %1822 = vst.sshfl [vmem:[#allocation1 + $0x20] sm:$0xff pattern:$0x73625140] %v1749
        %1823 = vst.sshfl [vmem:[#allocation1 + $0x28] sm:$0xff pattern:$0x73625140] %v1647
        %v1824 = vld [vmem:[%s1760] ss:$4 sm:$0xff]
        %v1826 = vld [vmem:[%s1763] ss:$4 sm:$0xff]
        %v1828 = vld [vmem:[%s1766] ss:$4 sm:$0xff]
        %v1830 = vld [vmem:[%s1769] ss:$4 sm:$0xff]
        %1832 = vst.sshfl [vmem:[#allocation1] sm:$0xff pattern:$0x73625140] %v1751
        %1833 = vst.sshfl [vmem:[#allocation1 + $0x8] sm:$0xff pattern:$0x73625140] %v1649
        %1834 = vst.sshfl [vmem:[#allocation1 + $0x20] sm:$0xff pattern:$0x73625140] %v1752
        %1835 = vst.sshfl [vmem:[#allocation1 + $0x28] sm:$0xff pattern:$0x73625140] %v1649
        %v1836 = vld [vmem:[%s1760] ss:$4 sm:$0xff]
        %v1838 = vld [vmem:[%s1763] ss:$4 sm:$0xff]
        %v1840 = vld [vmem:[%s1766] ss:$4 sm:$0xff]
        %v1842 = vld [vmem:[%s1769] ss:$4 sm:$0xff]
        %1844 = vst.sshfl [vmem:[#allocation1] sm:$0xff pattern:$0x73625140] %v1754
        %1845 = vst.sshfl [vmem:[#allocation1 + $0x8] sm:$0xff pattern:$0x73625140] %v1651
        %1846 = vst.sshfl [vmem:[#allocation1 + $0x20] sm:$0xff pattern:$0x73625140] %v1755
        %1847 = vst.sshfl [vmem:[#allocation1 + $0x28] sm:$0xff pattern:$0x73625140] %v1651
        %v1848 = vld [vmem:[%s1760] ss:$4 sm:$0xff]
        %v1850 = vld [vmem:[%s1763] ss:$4 sm:$0xff]
        %v1852 = vld [vmem:[%s1766] ss:$4 sm:$0xff]
        %v1854 = vld [vmem:[%s1769] ss:$4 sm:$0xff]
        %vm1856 = vcmask 1040384
        %vm1857 = vcmask 1042434
        %vm1858 = vmor %vm1856, %vm1857
        %vm1859 = vcmask 1044484
        %vm1860 = vmor %vm1858, %vm1859
        %vm1861 = vcmask 1046534
        %vm1862 = vmor %vm1860, %vm1861
        %v1863 = vrot.slane %v1761, 7
        %v1864 = vrot.slane %v1863, 2
        %v1865 = vrot.slane %v1764, 7
        %v1866 = vsel %vm1862, %v1864, %v1865
        %v1867 = vrot.slane %v1865, 2
        %v1868 = vrot.slane %v1767, 7
        %v1869 = vsel %vm1862, %v1867, %v1868
        %v1870 = vrot.slane %v1868, 2
        %v1871 = vrot.slane %v1770, 7
        %v1872 = vsel %vm1862, %v1870, %v1871
        %v1873 = vrot.slane %v1776, 7
        %v1874 = vrot.slane %v1873, 2
        %v1875 = vrot.slane %v1778, 7
        %v1876 = vsel %vm1862, %v1874, %v1875
        %v1877 = vrot.slane %v1875, 2
        %v1878 = vrot.slane %v1780, 7
        %v1879 = vsel %vm1862, %v1877, %v1878
        %v1880 = vrot.slane %v1878, 2
        %v1881 = vrot.slane %v1782, 7
        %v1882 = vsel %vm1862, %v1880, %v1881
        %v1883 = vrot.slane %v1788, 7
        %v1884 = vrot.slane %v1883, 2
        %v1885 = vrot.slane %v1790, 7
        %v1886 = vsel %vm1862, %v1884, %v1885
        %v1887 = vrot.slane %v1885, 2
        %v1888 = vrot.slane %v1792, 7
        %v1889 = vsel %vm1862, %v1887, %v1888
        %v1890 = vrot.slane %v1888, 2
        %v1891 = vrot.slane %v1794, 7
        %v1892 = vsel %vm1862, %v1890, %v1891
        %v1893 = vrot.slane %v1800, 7
        %v1894 = vrot.slane %v1893, 2
        %v1895 = vrot.slane %v1802, 7
        %v1896 = vsel %vm1862, %v1894, %v1895
        %v1897 = vrot.slane %v1895, 2
        %v1898 = vrot.slane %v1804, 7
        %v1899 = vsel %vm1862, %v1897, %v1898
        %v1900 = vrot.slane %v1898, 2
        %v1901 = vrot.slane %v1806, 7
        %v1902 = vsel %vm1862, %v1900, %v1901
        %v1903 = vrot.slane %v1812, 7
        %v1904 = vrot.slane %v1903, 2
        %v1905 = vrot.slane %v1814, 7
        %v1906 = vsel %vm1862, %v1904, %v1905
        %v1907 = vrot.slane %v1905, 2
        %v1908 = vrot.slane %v1816, 7
        %v1909 = vsel %vm1862, %v1907, %v1908
        %v1910 = vrot.slane %v1908, 2
        %v1911 = vrot.slane %v1818, 7
        %v1912 = vsel %vm1862, %v1910, %v1911
        %v1913 = vrot.slane %v1824, 7
        %v1914 = vrot.slane %v1913, 2
        %v1915 = vrot.slane %v1826, 7
        %v1916 = vsel %vm1862, %v1914, %v1915
        %v1917 = vrot.slane %v1915, 2
        %v1918 = vrot.slane %v1828, 7
        %v1919 = vsel %vm1862, %v1917, %v1918
        %v1920 = vrot.slane %v1918, 2
        %v1921 = vrot.slane %v1830, 7
        %v1922 = vsel %vm1862, %v1920, %v1921
        %v1923 = vrot.slane %v1836, 7
        %v1924 = vrot.slane %v1923, 2
        %v1925 = vrot.slane %v1838, 7
        %v1926 = vsel %vm1862, %v1924, %v1925
        %v1927 = vrot.slane %v1925, 2
        %v1928 = vrot.slane %v1840, 7
        %v1929 = vsel %vm1862, %v1927, %v1928
        %v1930 = vrot.slane %v1928, 2
        %v1931 = vrot.slane %v1842, 7
        %v1932 = vsel %vm1862, %v1930, %v1931
        %v1933 = vrot.slane %v1848, 7
        %v1934 = vrot.slane %v1933, 2
        %v1935 = vrot.slane %v1850, 7
        %v1936 = vsel %vm1862, %v1934, %v1935
        %v1937 = vrot.slane %v1935, 2
        %v1938 = vrot.slane %v1852, 7
        %v1939 = vsel %vm1862, %v1937, %v1938
        %v1940 = vrot.slane %v1938, 2
        %v1941 = vrot.slane %v1854, 7
        %v1942 = vsel %vm1862, %v1940, %v1941
        %1944 = vst [vmem:[#allocation1] ss:$4 sm:$0xff] %v1866
        %s1946 = scalar_lea.vmem [#allocation1], 1
        %1947 = vst [vmem:[%s1946] ss:$4 sm:$0xff] %v1869
        %s1949 = scalar_lea.vmem [#allocation1], 2
        %1950 = vst [vmem:[%s1949] ss:$4 sm:$0xff] %v1872
        %s1952 = scalar_lea.vmem [#allocation1], 3
        %1953 = vst [vmem:[%s1952] ss:$4 sm:$0xff] %v1876
        %s1955 = scalar_lea.vmem [#allocation1], 32
        %1956 = vst [vmem:[%s1955] ss:$4 sm:$0xff] %v1879
        %s1958 = scalar_lea.vmem [#allocation1], 33
        %1959 = vst [vmem:[%s1958] ss:$4 sm:$0xff] %v1882
        %s1961 = scalar_lea.vmem [#allocation1], 34
        %1962 = vst [vmem:[%s1961] ss:$4 sm:$0xff] %v1886
        %s1964 = scalar_lea.vmem [#allocation1], 35
        %1965 = vst [vmem:[%s1964] ss:$4 sm:$0xff] %v1889
        %v1966 = vld.sshfl [vmem:[#allocation1] sm:$0xff pattern:$0x73625140]
        %v1967 = vld.sshfl [vmem:[#allocation1 + $0x8] sm:$0xff pattern:$0x73625140]
        %v1968 = vld.sshfl [vmem:[#allocation1 + $0x20] sm:$0xff pattern:$0x73625140]
        %v1969 = vld.sshfl [vmem:[#allocation1 + $0x28] sm:$0xff pattern:$0x73625140]
        %1971 = vst [vmem:[#allocation1] ss:$4 sm:$0xff] %v1892
        %1973 = vst [vmem:[%s1946] ss:$4 sm:$0xff] %v1896
        %1975 = vst [vmem:[%s1949] ss:$4 sm:$0xff] %v1899
        %1977 = vst [vmem:[%s1952] ss:$4 sm:$0xff] %v1902
        %1979 = vst [vmem:[%s1955] ss:$4 sm:$0xff] %v1906
        %1981 = vst [vmem:[%s1958] ss:$4 sm:$0xff] %v1909
        %1983 = vst [vmem:[%s1961] ss:$4 sm:$0xff] %v1912
        %1985 = vst [vmem:[%s1964] ss:$4 sm:$0xff] %v1916
        %v1986 = vld.sshfl [vmem:[#allocation1] sm:$0xff pattern:$0x73625140]
        %v1987 = vld.sshfl [vmem:[#allocation1 + $0x8] sm:$0xff pattern:$0x73625140]
        %v1988 = vld.sshfl [vmem:[#allocation1 + $0x20] sm:$0xff pattern:$0x73625140]
        %v1989 = vld.sshfl [vmem:[#allocation1 + $0x28] sm:$0xff pattern:$0x73625140]
        %1991 = vst [vmem:[#allocation1] ss:$4 sm:$0xff] %v1919
        %1993 = vst [vmem:[%s1946] ss:$4 sm:$0xff] %v1922
        %1995 = vst [vmem:[%s1949] ss:$4 sm:$0xff] %v1926
        %1997 = vst [vmem:[%s1952] ss:$4 sm:$0xff] %v1929
        %1999 = vst [vmem:[%s1955] ss:$4 sm:$0xff] %v1932
        %2001 = vst [vmem:[%s1958] ss:$4 sm:$0xff] %v1936
        %2003 = vst [vmem:[%s1961] ss:$4 sm:$0xff] %v1939
        %2005 = vst [vmem:[%s1964] ss:$4 sm:$0xff] %v1942
        %v2006 = vld.sshfl [vmem:[#allocation1] sm:$0xff pattern:$0x73625140]
        %v2007 = vld.sshfl [vmem:[#allocation1 + $0x8] sm:$0xff pattern:$0x73625140]
        %v2008 = vld.sshfl [vmem:[#allocation1 + $0x20] sm:$0xff pattern:$0x73625140]
        %v2009 = vld.sshfl [vmem:[#allocation1 + $0x28] sm:$0xff pattern:$0x73625140]
        %v2016 = vsel %vm1145, %v1967, 0
        %v2018 = vsel %vm1145, %v1969, 0
        %v2020 = vsel %vm1145, %v1987, 0
        %v2022 = vsel %vm1145, %v1989, 0
        %v2024 = vsel %vm1145, %v2007, 0
        %v2026 = vsel %vm1145, %v2009, 0
        %2028 = vmatpush.bf16.msra.mxu0 %v1105
        %2029 = vmatpush.bf16.msra.mxu0 %v1101
        %2030 = vmatpush.bf16.msra.mxu0 %v1097
        %2031 = vmatpush.bf16.msra.mxu0 %v1093
        %2032 = vmatpush.bf16.msra.mxu0 %v1089
        %2033 = vmatpush.bf16.msra.mxu0 %v1085
        %2034 = vmatpush.bf16.msra.mxu0 %v1081
        %2035 = vmatpush.bf16.msra.mxu0 %v1077
        %2036 = vmatmul.bf16.gmra.mxu0 %v1966
        %v2037 = vpop.f32.mrf.mxu0
        %v2038 = vadd.f32 0.0, %v2037
        %v2039 = vpop.f32.mrf.mxu0
        %v2040 = vadd.f32 0.0, %v2039
        %2041 = vmatmul.bf16.gmra.mxu0 %v1968
        %v2042 = vpop.f32.mrf.mxu0
        %v2043 = vadd.f32 0.0, %v2042
        %v2044 = vpop.f32.mrf.mxu0
        %v2045 = vadd.f32 0.0, %v2044
        %2046 = vmatmul.bf16.gmra.mxu0 %v1986
        %v2047 = vpop.f32.mrf.mxu0
        %v2048 = vadd.f32 0.0, %v2047
        %v2049 = vpop.f32.mrf.mxu0
        %v2050 = vadd.f32 0.0, %v2049
        %2051 = vmatmul.bf16.gmra.mxu0 %v1988
        %v2052 = vpop.f32.mrf.mxu0
        %v2053 = vadd.f32 0.0, %v2052
        %v2054 = vpop.f32.mrf.mxu0
        %v2055 = vadd.f32 0.0, %v2054
        %2056 = vmatmul.bf16.gmra.mxu0 %v2006
        %v2057 = vpop.f32.mrf.mxu0
        %v2058 = vadd.f32 0.0, %v2057
        %v2059 = vpop.f32.mrf.mxu0
        %v2060 = vadd.f32 0.0, %v2059
        %2061 = vmatmul.bf16.gmra.mxu0 %v2008
        %v2062 = vpop.f32.mrf.mxu0
        %v2063 = vadd.f32 0.0, %v2062
        %v2064 = vpop.f32.mrf.mxu0
        %v2065 = vadd.f32 0.0, %v2064
        %2066 = vdwg.mxu0
        %2067 = vmatpush.bf16.msra.mxu0 0
        %2068 = vmatpush.bf16.msra.mxu0 0
        %2069 = vmatpush.bf16.msra.mxu0 0
        %2070 = vmatpush.bf16.msra.mxu0 0
        %2071 = vmatpush.bf16.msra.mxu0 0
        %2072 = vmatpush.bf16.msra.mxu0 0
        %2073 = vmatpush.bf16.msra.mxu0 0
        %2074 = vmatpush.bf16.msra.mxu0 %v1160
        %2075 = vmatmul.bf16.gmra.mxu0 %v2016
        %v2076 = vpop.f32.mrf.mxu0
        %v2077 = vadd.f32 %v2038, %v2076
        %v2078 = vpop.f32.mrf.mxu0
        %v2079 = vadd.f32 %v2040, %v2078
        %2080 = vmatmul.bf16.gmra.mxu0 %v2018
        %v2081 = vpop.f32.mrf.mxu0
        %v2082 = vadd.f32 %v2043, %v2081
        %v2083 = vpop.f32.mrf.mxu0
        %v2084 = vadd.f32 %v2045, %v2083
        %2085 = vmatmul.bf16.gmra.mxu0 %v2020
        %v2086 = vpop.f32.mrf.mxu0
        %v2087 = vadd.f32 %v2048, %v2086
        %v2088 = vpop.f32.mrf.mxu0
        %v2089 = vadd.f32 %v2050, %v2088
        %2090 = vmatmul.bf16.gmra.mxu0 %v2022
        %v2091 = vpop.f32.mrf.mxu0
        %v2092 = vadd.f32 %v2053, %v2091
        %v2093 = vpop.f32.mrf.mxu0
        %v2094 = vadd.f32 %v2055, %v2093
        %2095 = vmatmul.bf16.gmra.mxu0 %v2024
        %v2096 = vpop.f32.mrf.mxu0
        %v2097 = vadd.f32 %v2058, %v2096
        %v2098 = vpop.f32.mrf.mxu0
        %v2099 = vadd.f32 %v2060, %v2098
        %2100 = vmatmul.bf16.gmra.mxu0 %v2026
        %v2101 = vpop.f32.mrf.mxu0
        %v2102 = vadd.f32 %v2063, %v2101
        %v2103 = vpop.f32.mrf.mxu0
        %v2104 = vadd.f32 %v2065, %v2103
        %2105 = vdwg.mxu0
        %2106 = vmatpush.bf16.msra.mxu0 %v1106
        %2107 = vmatpush.bf16.msra.mxu0 %v1102
        %2108 = vmatpush.bf16.msra.mxu0 %v1098
        %2109 = vmatpush.bf16.msra.mxu0 %v1094
        %2110 = vmatpush.bf16.msra.mxu0 %v1090
        %2111 = vmatpush.bf16.msra.mxu0 %v1086
        %2112 = vmatpush.bf16.msra.mxu0 %v1082
        %2113 = vmatpush.bf16.msra.mxu0 %v1078
        %2114 = vmatmul.bf16.gmra.mxu0 %v1966
        %v2115 = vpop.f32.mrf.mxu0
        %v2116 = vadd.f32 0.0, %v2115
        %v2117 = vpop.f32.mrf.mxu0
        %v2118 = vadd.f32 0.0, %v2117
        %2119 = vmatmul.bf16.gmra.mxu0 %v1968
        %v2120 = vpop.f32.mrf.mxu0
        %v2121 = vadd.f32 0.0, %v2120
        %v2122 = vpop.f32.mrf.mxu0
        %v2123 = vadd.f32 0.0, %v2122
        %2124 = vmatmul.bf16.gmra.mxu0 %v1986
        %v2125 = vpop.f32.mrf.mxu0
        %v2126 = vadd.f32 0.0, %v2125
        %v2127 = vpop.f32.mrf.mxu0
        %v2128 = vadd.f32 0.0, %v2127
        %2129 = vmatmul.bf16.gmra.mxu0 %v1988
        %v2130 = vpop.f32.mrf.mxu0
        %v2131 = vadd.f32 0.0, %v2130
        %v2132 = vpop.f32.mrf.mxu0
        %v2133 = vadd.f32 0.0, %v2132
        %2134 = vmatmul.bf16.gmra.mxu0 %v2006
        %v2135 = vpop.f32.mrf.mxu0
        %v2136 = vadd.f32 0.0, %v2135
        %v2137 = vpop.f32.mrf.mxu0
        %v2138 = vadd.f32 0.0, %v2137
        %2139 = vmatmul.bf16.gmra.mxu0 %v2008
        %v2140 = vpop.f32.mrf.mxu0
        %v2141 = vadd.f32 0.0, %v2140
        %v2142 = vpop.f32.mrf.mxu0
        %v2143 = vadd.f32 0.0, %v2142
        %2144 = vdwg.mxu0
        %2145 = vmatpush.bf16.msra.mxu0 0
        %2146 = vmatpush.bf16.msra.mxu0 0
        %2147 = vmatpush.bf16.msra.mxu0 0
        %2148 = vmatpush.bf16.msra.mxu0 0
        %2149 = vmatpush.bf16.msra.mxu0 0
        %2150 = vmatpush.bf16.msra.mxu0 0
        %2151 = vmatpush.bf16.msra.mxu0 0
        %2152 = vmatpush.bf16.msra.mxu0 %v1163
        %2153 = vmatmul.bf16.gmra.mxu0 %v2016
        %v2154 = vpop.f32.mrf.mxu0
        %v2155 = vadd.f32 %v2116, %v2154
        %v2156 = vpop.f32.mrf.mxu0
        %v2157 = vadd.f32 %v2118, %v2156
        %2158 = vmatmul.bf16.gmra.mxu0 %v2018
        %v2159 = vpop.f32.mrf.mxu0
        %v2160 = vadd.f32 %v2121, %v2159
        %v2161 = vpop.f32.mrf.mxu0
        %v2162 = vadd.f32 %v2123, %v2161
        %2163 = vmatmul.bf16.gmra.mxu0 %v2020
        %v2164 = vpop.f32.mrf.mxu0
        %v2165 = vadd.f32 %v2126, %v2164
        %v2166 = vpop.f32.mrf.mxu0
        %v2167 = vadd.f32 %v2128, %v2166
        %2168 = vmatmul.bf16.gmra.mxu0 %v2022
        %v2169 = vpop.f32.mrf.mxu0
        %v2170 = vadd.f32 %v2131, %v2169
        %v2171 = vpop.f32.mrf.mxu0
        %v2172 = vadd.f32 %v2133, %v2171
        %2173 = vmatmul.bf16.gmra.mxu0 %v2024
        %v2174 = vpop.f32.mrf.mxu0
        %v2175 = vadd.f32 %v2136, %v2174
        %v2176 = vpop.f32.mrf.mxu0
        %v2177 = vadd.f32 %v2138, %v2176
        %2178 = vmatmul.bf16.gmra.mxu0 %v2026
        %v2179 = vpop.f32.mrf.mxu0
        %v2180 = vadd.f32 %v2141, %v2179
        %v2181 = vpop.f32.mrf.mxu0
        %v2182 = vadd.f32 %v2143, %v2181
        %2183 = vdwg.mxu0
        %2184 = vmatpush.bf16.msra.mxu0 %v1107
        %2185 = vmatpush.bf16.msra.mxu0 %v1103
        %2186 = vmatpush.bf16.msra.mxu0 %v1099
        %2187 = vmatpush.bf16.msra.mxu0 %v1095
        %2188 = vmatpush.bf16.msra.mxu0 %v1091
        %2189 = vmatpush.bf16.msra.mxu0 %v1087
        %2190 = vmatpush.bf16.msra.mxu0 %v1083
        %2191 = vmatpush.bf16.msra.mxu0 %v1079
        %2192 = vmatmul.bf16.gmra.mxu0 %v1966
        %v2193 = vpop.f32.mrf.mxu0
        %v2194 = vadd.f32 0.0, %v2193
        %v2195 = vpop.f32.mrf.mxu0
        %v2196 = vadd.f32 0.0, %v2195
        %2197 = vmatmul.bf16.gmra.mxu0 %v1968
        %v2198 = vpop.f32.mrf.mxu0
        %v2199 = vadd.f32 0.0, %v2198
        %v2200 = vpop.f32.mrf.mxu0
        %v2201 = vadd.f32 0.0, %v2200
        %2202 = vmatmul.bf16.gmra.mxu0 %v1986
        %v2203 = vpop.f32.mrf.mxu0
        %v2204 = vadd.f32 0.0, %v2203
        %v2205 = vpop.f32.mrf.mxu0
        %v2206 = vadd.f32 0.0, %v2205
        %2207 = vmatmul.bf16.gmra.mxu0 %v1988
        %v2208 = vpop.f32.mrf.mxu0
        %v2209 = vadd.f32 0.0, %v2208
        %v2210 = vpop.f32.mrf.mxu0
        %v2211 = vadd.f32 0.0, %v2210
        %2212 = vmatmul.bf16.gmra.mxu0 %v2006
        %v2213 = vpop.f32.mrf.mxu0
        %v2214 = vadd.f32 0.0, %v2213
        %v2215 = vpop.f32.mrf.mxu0
        %v2216 = vadd.f32 0.0, %v2215
        %2217 = vmatmul.bf16.gmra.mxu0 %v2008
        %v2218 = vpop.f32.mrf.mxu0
        %v2219 = vadd.f32 0.0, %v2218
        %v2220 = vpop.f32.mrf.mxu0
        %v2221 = vadd.f32 0.0, %v2220
        %2222 = vdwg.mxu0
        %2223 = vmatpush.bf16.msra.mxu0 0
        %2224 = vmatpush.bf16.msra.mxu0 0
        %2225 = vmatpush.bf16.msra.mxu0 0
        %2226 = vmatpush.bf16.msra.mxu0 0
        %2227 = vmatpush.bf16.msra.mxu0 0
        %2228 = vmatpush.bf16.msra.mxu0 0
        %2229 = vmatpush.bf16.msra.mxu0 0
        %2230 = vmatpush.bf16.msra.mxu0 %v1166
        %2231 = vmatmul.bf16.gmra.mxu0 %v2016
        %v2232 = vpop.f32.mrf.mxu0
        %v2233 = vadd.f32 %v2194, %v2232
        %v2234 = vpop.f32.mrf.mxu0
        %v2235 = vadd.f32 %v2196, %v2234
        %2236 = vmatmul.bf16.gmra.mxu0 %v2018
        %v2237 = vpop.f32.mrf.mxu0
        %v2238 = vadd.f32 %v2199, %v2237
        %v2239 = vpop.f32.mrf.mxu0
        %v2240 = vadd.f32 %v2201, %v2239
        %2241 = vmatmul.bf16.gmra.mxu0 %v2020
        %v2242 = vpop.f32.mrf.mxu0
        %v2243 = vadd.f32 %v2204, %v2242
        %v2244 = vpop.f32.mrf.mxu0
        %v2245 = vadd.f32 %v2206, %v2244
        %2246 = vmatmul.bf16.gmra.mxu0 %v2022
        %v2247 = vpop.f32.mrf.mxu0
        %v2248 = vadd.f32 %v2209, %v2247
        %v2249 = vpop.f32.mrf.mxu0
        %v2250 = vadd.f32 %v2211, %v2249
        %2251 = vmatmul.bf16.gmra.mxu0 %v2024
        %v2252 = vpop.f32.mrf.mxu0
        %v2253 = vadd.f32 %v2214, %v2252
        %v2254 = vpop.f32.mrf.mxu0
        %v2255 = vadd.f32 %v2216, %v2254
        %2256 = vmatmul.bf16.gmra.mxu0 %v2026
        %v2257 = vpop.f32.mrf.mxu0
        %v2258 = vadd.f32 %v2219, %v2257
        %v2259 = vpop.f32.mrf.mxu0
        %v2260 = vadd.f32 %v2221, %v2259
        %2261 = vdwg.mxu0
        %2262 = vmatpush.bf16.msra.mxu0 %v1108
        %2263 = vmatpush.bf16.msra.mxu0 %v1104
        %2264 = vmatpush.bf16.msra.mxu0 %v1100
        %2265 = vmatpush.bf16.msra.mxu0 %v1096
        %2266 = vmatpush.bf16.msra.mxu0 %v1092
        %2267 = vmatpush.bf16.msra.mxu0 %v1088
        %2268 = vmatpush.bf16.msra.mxu0 %v1084
        %2269 = vmatpush.bf16.msra.mxu0 %v1080
        %2270 = vmatmul.bf16.gmra.mxu0 %v1966
        %v2271 = vpop.f32.mrf.mxu0
        %v2272 = vadd.f32 0.0, %v2271
        %v2273 = vpop.f32.mrf.mxu0
        %v2274 = vadd.f32 0.0, %v2273
        %2275 = vmatmul.bf16.gmra.mxu0 %v1968
        %v2276 = vpop.f32.mrf.mxu0
        %v2277 = vadd.f32 0.0, %v2276
        %v2278 = vpop.f32.mrf.mxu0
        %v2279 = vadd.f32 0.0, %v2278
        %2280 = vmatmul.bf16.gmra.mxu0 %v1986
        %v2281 = vpop.f32.mrf.mxu0
        %v2282 = vadd.f32 0.0, %v2281
        %v2283 = vpop.f32.mrf.mxu0
        %v2284 = vadd.f32 0.0, %v2283
        %2285 = vmatmul.bf16.gmra.mxu0 %v1988
        %v2286 = vpop.f32.mrf.mxu0
        %v2287 = vadd.f32 0.0, %v2286
        %v2288 = vpop.f32.mrf.mxu0
        %v2289 = vadd.f32 0.0, %v2288
        %2290 = vmatmul.bf16.gmra.mxu0 %v2006
        %v2291 = vpop.f32.mrf.mxu0
        %v2292 = vadd.f32 0.0, %v2291
        %v2293 = vpop.f32.mrf.mxu0
        %v2294 = vadd.f32 0.0, %v2293
        %2295 = vmatmul.bf16.gmra.mxu0 %v2008
        %v2296 = vpop.f32.mrf.mxu0
        %v2297 = vadd.f32 0.0, %v2296
        %v2298 = vpop.f32.mrf.mxu0
        %v2299 = vadd.f32 0.0, %v2298
        %2300 = vdwg.mxu0
        %2301 = vmatpush.bf16.msra.mxu0 0
        %2302 = vmatpush.bf16.msra.mxu0 0
        %2303 = vmatpush.bf16.msra.mxu0 0
        %2304 = vmatpush.bf16.msra.mxu0 0
        %2305 = vmatpush.bf16.msra.mxu0 0
        %2306 = vmatpush.bf16.msra.mxu0 0
        %2307 = vmatpush.bf16.msra.mxu0 0
        %2308 = vmatpush.bf16.msra.mxu0 %v1169
        %2309 = vmatmul.bf16.gmra.mxu0 %v2016
        %v2310 = vpop.f32.mrf.mxu0
        %v2311 = vadd.f32 %v2272, %v2310
        %v2312 = vpop.f32.mrf.mxu0
        %v2313 = vadd.f32 %v2274, %v2312
        %2314 = vmatmul.bf16.gmra.mxu0 %v2018
        %v2315 = vpop.f32.mrf.mxu0
        %v2316 = vadd.f32 %v2277, %v2315
        %v2317 = vpop.f32.mrf.mxu0
        %v2318 = vadd.f32 %v2279, %v2317
        %2319 = vmatmul.bf16.gmra.mxu0 %v2020
        %v2320 = vpop.f32.mrf.mxu0
        %v2321 = vadd.f32 %v2282, %v2320
        %v2322 = vpop.f32.mrf.mxu0
        %v2323 = vadd.f32 %v2284, %v2322
        %2324 = vmatmul.bf16.gmra.mxu0 %v2022
        %v2325 = vpop.f32.mrf.mxu0
        %v2326 = vadd.f32 %v2287, %v2325
        %v2327 = vpop.f32.mrf.mxu0
        %v2328 = vadd.f32 %v2289, %v2327
        %2329 = vmatmul.bf16.gmra.mxu0 %v2024
        %v2330 = vpop.f32.mrf.mxu0
        %v2331 = vadd.f32 %v2292, %v2330
        %v2332 = vpop.f32.mrf.mxu0
        %v2333 = vadd.f32 %v2294, %v2332
        %2334 = vmatmul.bf16.gmra.mxu0 %v2026
        %v2335 = vpop.f32.mrf.mxu0
        %v2336 = vadd.f32 %v2297, %v2335
        %v2337 = vpop.f32.mrf.mxu0
        %v2338 = vadd.f32 %v2299, %v2337
        %2339 = vdwg.mxu0
        %v2340 = vmax.f32 %v1220, %v2077
        %v2341 = vmax.f32 %v1298, %v2155
        %v2342 = vmax.f32 %v1376, %v2233
        %v2343 = vmax.f32 %v1454, %v2311
        %v2344 = vmax.f32 %v1222, %v2079
        %v2345 = vmax.f32 %v1300, %v2157
        %v2346 = vmax.f32 %v1378, %v2235
        %v2347 = vmax.f32 %v1456, %v2313
        %v2348 = vmax.f32 %v1225, %v2082
        %v2349 = vmax.f32 %v1303, %v2160
        %v2350 = vmax.f32 %v1381, %v2238
        %v2351 = vmax.f32 %v1459, %v2316
        %v2352 = vmax.f32 %v1227, %v2084
        %v2353 = vmax.f32 %v1305, %v2162
        %v2354 = vmax.f32 %v1383, %v2240
        %v2355 = vmax.f32 %v1461, %v2318
        %v2356 = vmax.f32 %v1230, %v2087
        %v2357 = vmax.f32 %v1308, %v2165
        %v2358 = vmax.f32 %v1386, %v2243
        %v2359 = vmax.f32 %v1464, %v2321
        %v2360 = vmax.f32 %v1232, %v2089
        %v2361 = vmax.f32 %v1310, %v2167
        %v2362 = vmax.f32 %v1388, %v2245
        %v2363 = vmax.f32 %v1466, %v2323
        %v2364 = vmax.f32 %v1235, %v2092
        %v2365 = vmax.f32 %v1313, %v2170
        %v2366 = vmax.f32 %v1391, %v2248
        %v2367 = vmax.f32 %v1469, %v2326
        %v2368 = vmax.f32 %v1237, %v2094
        %v2369 = vmax.f32 %v1315, %v2172
        %v2370 = vmax.f32 %v1393, %v2250
        %v2371 = vmax.f32 %v1471, %v2328
        %v2372 = vmax.f32 %v1240, %v2097
        %v2373 = vmax.f32 %v1318, %v2175
        %v2374 = vmax.f32 %v1396, %v2253
        %v2375 = vmax.f32 %v1474, %v2331
        %v2376 = vmax.f32 %v1242, %v2099
        %v2377 = vmax.f32 %v1320, %v2177
        %v2378 = vmax.f32 %v1398, %v2255
        %v2379 = vmax.f32 %v1476, %v2333
        %v2380 = vmax.f32 %v1245, %v2102
        %v2381 = vmax.f32 %v1323, %v2180
        %v2382 = vmax.f32 %v1401, %v2258
        %v2383 = vmax.f32 %v1479, %v2336
        %v2384 = vmax.f32 %v1247, %v2104
        %v2385 = vmax.f32 %v1325, %v2182
        %v2386 = vmax.f32 %v1403, %v2260
        %v2387 = vmax.f32 %v1481, %v2338
        %v2388 = vmax.f32 %v2340, %v2342
        %v2389 = vmax.f32 %v2341, %v2343
        %v2390 = vmax.f32 %v2344, %v2346
        %v2391 = vmax.f32 %v2345, %v2347
        %v2392 = vmax.f32 %v2348, %v2350
        %v2393 = vmax.f32 %v2349, %v2351
        %v2394 = vmax.f32 %v2352, %v2354
        %v2395 = vmax.f32 %v2353, %v2355
        %v2396 = vmax.f32 %v2356, %v2358
        %v2397 = vmax.f32 %v2357, %v2359
        %v2398 = vmax.f32 %v2360, %v2362
        %v2399 = vmax.f32 %v2361, %v2363
        %v2400 = vmax.f32 %v2364, %v2366
        %v2401 = vmax.f32 %v2365, %v2367
        %v2402 = vmax.f32 %v2368, %v2370
        %v2403 = vmax.f32 %v2369, %v2371
        %v2404 = vmax.f32 %v2372, %v2374
        %v2405 = vmax.f32 %v2373, %v2375
        %v2406 = vmax.f32 %v2376, %v2378
        %v2407 = vmax.f32 %v2377, %v2379
        %v2408 = vmax.f32 %v2380, %v2382
        %v2409 = vmax.f32 %v2381, %v2383
        %v2410 = vmax.f32 %v2384, %v2386
        %v2411 = vmax.f32 %v2385, %v2387
        %v2412 = vld [vmem:[%s2] sm:$0x3]
        %v2414 = vperm.slane %v2412, 0
        %v2415 = vperm.slane %v2412, 1
        %v2418 = vadd.f32 %v2388, %v2414
        %v2419 = vadd.f32 %v2389, %v2415
        %v2420 = vadd.f32 %v2390, %v2414
        %v2421 = vadd.f32 %v2391, %v2415
        %v2422 = vadd.f32 %v2392, %v2414
        %v2423 = vadd.f32 %v2393, %v2415
        %v2424 = vadd.f32 %v2394, %v2414
        %v2425 = vadd.f32 %v2395, %v2415
        %v2426 = vadd.f32 %v2396, %v2414
        %v2427 = vadd.f32 %v2397, %v2415
        %v2428 = vadd.f32 %v2398, %v2414
        %v2429 = vadd.f32 %v2399, %v2415
        %v2430 = vadd.f32 %v2400, %v2414
        %v2431 = vadd.f32 %v2401, %v2415
        %v2432 = vadd.f32 %v2402, %v2414
        %v2433 = vadd.f32 %v2403, %v2415
        %v2434 = vadd.f32 %v2404, %v2414
        %v2435 = vadd.f32 %v2405, %v2415
        %v2436 = vadd.f32 %v2406, %v2414
        %v2437 = vadd.f32 %v2407, %v2415
        %v2438 = vadd.f32 %v2408, %v2414
        %v2439 = vadd.f32 %v2409, %v2415
        %v2440 = vadd.f32 %v2410, %v2414
        %v2441 = vadd.f32 %v2411, %v2415
        %v2442 = vmax.f32 %v2418, 0.0
        %v2443 = vmax.f32 %v2419, 0.0
        %v2444 = vmax.f32 %v2420, 0.0
        %v2445 = vmax.f32 %v2421, 0.0
        %v2446 = vmax.f32 %v2422, 0.0
        %v2447 = vmax.f32 %v2423, 0.0
        %v2448 = vmax.f32 %v2424, 0.0
        %v2449 = vmax.f32 %v2425, 0.0
        %v2450 = vmax.f32 %v2426, 0.0
        %v2451 = vmax.f32 %v2427, 0.0
        %v2452 = vmax.f32 %v2428, 0.0
        %v2453 = vmax.f32 %v2429, 0.0
        %v2454 = vmax.f32 %v2430, 0.0
        %v2455 = vmax.f32 %v2431, 0.0
        %v2456 = vmax.f32 %v2432, 0.0
        %v2457 = vmax.f32 %v2433, 0.0
        %v2458 = vmax.f32 %v2434, 0.0
        %v2459 = vmax.f32 %v2435, 0.0
        %v2460 = vmax.f32 %v2436, 0.0
        %v2461 = vmax.f32 %v2437, 0.0
        %v2462 = vmax.f32 %v2438, 0.0
        %v2463 = vmax.f32 %v2439, 0.0
        %v2464 = vmax.f32 %v2440, 0.0
        %v2465 = vmax.f32 %v2441, 0.0
        %v2490 = vrot.slane %v2443, 4
        %v2491 = vrot.slane %v2445, 4
        %v2492 = vrot.slane %v2447, 4
        %v2493 = vrot.slane %v2449, 4
        %v2494 = vrot.slane %v2451, 4
        %v2495 = vrot.slane %v2453, 4
        %v2496 = vrot.slane %v2455, 4
        %v2497 = vrot.slane %v2457, 4
        %v2498 = vrot.slane %v2459, 4
        %v2499 = vrot.slane %v2461, 4
        %v2500 = vrot.slane %v2463, 4
        %v2501 = vrot.slane %v2465, 4
        %vm2502 = vcmask 1043456
        %v2503 = vsel %vm2502, %v2442, %v2490
        %v2504 = vsel %vm2502, %v2490, %v2442
        %v2505 = vrot.slane %v2504, 4
        %v2506 = vsel %vm2502, %v2444, %v2491
        %v2507 = vsel %vm2502, %v2491, %v2444
        %v2508 = vrot.slane %v2507, 4
        %v2509 = vsel %vm2502, %v2446, %v2492
        %v2510 = vsel %vm2502, %v2492, %v2446
        %v2511 = vrot.slane %v2510, 4
        %v2512 = vsel %vm2502, %v2448, %v2493
        %v2513 = vsel %vm2502, %v2493, %v2448
        %v2514 = vrot.slane %v2513, 4
        %v2515 = vsel %vm2502, %v2450, %v2494
        %v2516 = vsel %vm2502, %v2494, %v2450
        %v2517 = vrot.slane %v2516, 4
        %v2518 = vsel %vm2502, %v2452, %v2495
        %v2519 = vsel %vm2502, %v2495, %v2452
        %v2520 = vrot.slane %v2519, 4
        %v2521 = vsel %vm2502, %v2454, %v2496
        %v2522 = vsel %vm2502, %v2496, %v2454
        %v2523 = vrot.slane %v2522, 4
        %v2524 = vsel %vm2502, %v2456, %v2497
        %v2525 = vsel %vm2502, %v2497, %v2456
        %v2526 = vrot.slane %v2525, 4
        %v2527 = vsel %vm2502, %v2458, %v2498
        %v2528 = vsel %vm2502, %v2498, %v2458
        %v2529 = vrot.slane %v2528, 4
        %v2530 = vsel %vm2502, %v2460, %v2499
        %v2531 = vsel %vm2502, %v2499, %v2460
        %v2532 = vrot.slane %v2531, 4
        %v2533 = vsel %vm2502, %v2462, %v2500
        %v2534 = vsel %vm2502, %v2500, %v2462
        %v2535 = vrot.slane %v2534, 4
        %v2536 = vsel %vm2502, %v2464, %v2501
        %v2537 = vsel %vm2502, %v2501, %v2464
        %v2538 = vrot.slane %v2537, 4
        %2539 = vst [vmem:[#allocation1] ss:$2 sm:$0xff] %v2503
        %s2540 = scalar_lea.vmem [#allocation1], 1
        %2541 = vst [vmem:[%s2540] ss:$2 sm:$0xff] %v2505
        %s2542 = scalar_lea.vmem [#allocation1], 16
        %2543 = vst [vmem:[%s2542] ss:$2 sm:$0xff] %v2506
        %v2544 = vld.sshfl [vmem:[#allocation1] sm:$0xff pattern:$0x75316420]
        %v2545 = vld.sshfl [vmem:[#allocation1 + $0x8] sm:$0xff pattern:$0x75316420]
        %v2546 = vld.sshfl [vmem:[#allocation1 + $0x10] sm:$0xff pattern:$0x75316420]
        %v2547 = vld.sshfl [vmem:[#allocation1 + $0x18] sm:$0xff pattern:$0x75316420]
        %s2548 = scalar_lea.vmem [#allocation1], 32
        %2549 = vst [vmem:[%s2548] ss:$2 sm:$0xff] %v2508
        %s2550 = scalar_lea.vmem [#allocation1], 33
        %2551 = vst [vmem:[%s2550] ss:$2 sm:$0xff] %v2509
        %s2552 = scalar_lea.vmem [#allocation1], 48
        %2553 = vst [vmem:[%s2552] ss:$2 sm:$0xff] %v2511
        %v2554 = vld.sshfl [vmem:[#allocation1 + $0x20] sm:$0xff pattern:$0x75316420]
        %v2555 = vld.sshfl [vmem:[#allocation1 + $0x28] sm:$0xff pattern:$0x75316420]
        %v2556 = vld.sshfl [vmem:[#allocation1 + $0x30] sm:$0xff pattern:$0x75316420]
        %v2557 = vld.sshfl [vmem:[#allocation1 + $0x38] sm:$0xff pattern:$0x75316420]
        %2558 = vst [vmem:[#allocation1] ss:$2 sm:$0xff] %v2512
        %2559 = vst [vmem:[%s2540] ss:$2 sm:$0xff] %v2514
        %2560 = vst [vmem:[%s2542] ss:$2 sm:$0xff] %v2515
        %v2561 = vld.sshfl [vmem:[#allocation1] sm:$0xff pattern:$0x75316420]
        %v2562 = vld.sshfl [vmem:[#allocation1 + $0x8] sm:$0xff pattern:$0x75316420]
        %v2563 = vld.sshfl [vmem:[#allocation1 + $0x10] sm:$0xff pattern:$0x75316420]
        %v2564 = vld.sshfl [vmem:[#allocation1 + $0x18] sm:$0xff pattern:$0x75316420]
        %2565 = vst [vmem:[%s2548] ss:$2 sm:$0xff] %v2517
        %2566 = vst [vmem:[%s2550] ss:$2 sm:$0xff] %v2518
        %2567 = vst [vmem:[%s2552] ss:$2 sm:$0xff] %v2520
        %v2568 = vld.sshfl [vmem:[#allocation1 + $0x20] sm:$0xff pattern:$0x75316420]
        %v2569 = vld.sshfl [vmem:[#allocation1 + $0x28] sm:$0xff pattern:$0x75316420]
        %v2570 = vld.sshfl [vmem:[#allocation1 + $0x30] sm:$0xff pattern:$0x75316420]
        %v2571 = vld.sshfl [vmem:[#allocation1 + $0x38] sm:$0xff pattern:$0x75316420]
        %2572 = vst [vmem:[#allocation1] ss:$2 sm:$0xff] %v2521
        %2573 = vst [vmem:[%s2540] ss:$2 sm:$0xff] %v2523
        %2574 = vst [vmem:[%s2542] ss:$2 sm:$0xff] %v2524
        %v2575 = vld.sshfl [vmem:[#allocation1] sm:$0xff pattern:$0x75316420]
        %v2576 = vld.sshfl [vmem:[#allocation1 + $0x8] sm:$0xff pattern:$0x75316420]
        %v2577 = vld.sshfl [vmem:[#allocation1 + $0x10] sm:$0xff pattern:$0x75316420]
        %v2578 = vld.sshfl [vmem:[#allocation1 + $0x18] sm:$0xff pattern:$0x75316420]
        %2579 = vst [vmem:[%s2548] ss:$2 sm:$0xff] %v2526
        %2580 = vst [vmem:[%s2550] ss:$2 sm:$0xff] %v2527
        %2581 = vst [vmem:[%s2552] ss:$2 sm:$0xff] %v2529
        %v2582 = vld.sshfl [vmem:[#allocation1 + $0x20] sm:$0xff pattern:$0x75316420]
        %v2583 = vld.sshfl [vmem:[#allocation1 + $0x28] sm:$0xff pattern:$0x75316420]
        %v2584 = vld.sshfl [vmem:[#allocation1 + $0x30] sm:$0xff pattern:$0x75316420]
        %v2585 = vld.sshfl [vmem:[#allocation1 + $0x38] sm:$0xff pattern:$0x75316420]
        %2586 = vst [vmem:[#allocation1] ss:$2 sm:$0xff] %v2530
        %2587 = vst [vmem:[%s2540] ss:$2 sm:$0xff] %v2532
        %2588 = vst [vmem:[%s2542] ss:$2 sm:$0xff] %v2533
        %v2589 = vld.sshfl [vmem:[#allocation1] sm:$0xff pattern:$0x75316420]
        %v2590 = vld.sshfl [vmem:[#allocation1 + $0x8] sm:$0xff pattern:$0x75316420]
        %v2591 = vld.sshfl [vmem:[#allocation1 + $0x10] sm:$0xff pattern:$0x75316420]
        %v2592 = vld.sshfl [vmem:[#allocation1 + $0x18] sm:$0xff pattern:$0x75316420]
        %2593 = vst [vmem:[%s2548] ss:$2 sm:$0xff] %v2535
        %2594 = vst [vmem:[%s2550] ss:$2 sm:$0xff] %v2536
        %2595 = vst [vmem:[%s2552] ss:$2 sm:$0xff] %v2538
        %v2596 = vld.sshfl [vmem:[#allocation1 + $0x20] sm:$0xff pattern:$0x75316420]
        %v2597 = vld.sshfl [vmem:[#allocation1 + $0x28] sm:$0xff pattern:$0x75316420]
        %v2598 = vld.sshfl [vmem:[#allocation1 + $0x30] sm:$0xff pattern:$0x75316420]
        %v2599 = vld.sshfl [vmem:[#allocation1 + $0x38] sm:$0xff pattern:$0x75316420]
        %v2632 = vpack.c.bf16 %v2545, %v2544
        %v2633 = vpack.c.bf16 %v2547, %v2546
        %v2634 = vpack.c.bf16 %v2555, %v2554
        %v2635 = vpack.c.bf16 %v2557, %v2556
        %v2636 = vpack.c.bf16 %v2562, %v2561
        %v2637 = vpack.c.bf16 %v2564, %v2563
        %v2638 = vpack.c.bf16 %v2569, %v2568
        %v2639 = vpack.c.bf16 %v2571, %v2570
        %v2640 = vpack.c.bf16 %v2576, %v2575
        %v2641 = vpack.c.bf16 %v2578, %v2577
        %v2642 = vpack.c.bf16 %v2583, %v2582
        %v2643 = vpack.c.bf16 %v2585, %v2584
        %v2644 = vpack.c.bf16 %v2590, %v2589
        %v2645 = vpack.c.bf16 %v2592, %v2591
        %v2646 = vpack.c.bf16 %v2597, %v2596
        %v2647 = vpack.c.bf16 %v2599, %v2598
        %v2656 = vunpack.c.l.b16 %v2632
        %v2657 = vunpack.c.h.b16 %v2632
        %v2658 = vunpack.c.l.b16 %v2634
        %v2659 = vunpack.c.h.b16 %v2634
        %v2660 = vunpack.c.l.b16 %v2636
        %v2661 = vunpack.c.h.b16 %v2636
        %v2662 = vunpack.c.l.b16 %v2638
        %v2663 = vunpack.c.h.b16 %v2638
        %v2664 = vunpack.c.l.b16 %v2640
        %v2665 = vunpack.c.h.b16 %v2640
        %v2666 = vunpack.c.l.b16 %v2642
        %v2667 = vunpack.c.h.b16 %v2642
        %v2668 = vunpack.c.l.b16 %v2644
        %v2669 = vunpack.c.h.b16 %v2644
        %v2670 = vunpack.c.l.b16 %v2646
        %v2671 = vunpack.c.h.b16 %v2646
        %v2680 = vunpack.c.l.b16 %v2633
        %v2681 = vunpack.c.h.b16 %v2633
        %v2682 = vunpack.c.l.b16 %v2635
        %v2683 = vunpack.c.h.b16 %v2635
        %v2684 = vunpack.c.l.b16 %v2637
        %v2685 = vunpack.c.h.b16 %v2637
        %v2686 = vunpack.c.l.b16 %v2639
        %v2687 = vunpack.c.h.b16 %v2639
        %v2688 = vunpack.c.l.b16 %v2641
        %v2689 = vunpack.c.h.b16 %v2641
        %v2690 = vunpack.c.l.b16 %v2643
        %v2691 = vunpack.c.h.b16 %v2643
        %v2692 = vunpack.c.l.b16 %v2645
        %v2693 = vunpack.c.h.b16 %v2645
        %v2694 = vunpack.c.l.b16 %v2647
        %v2695 = vunpack.c.h.b16 %v2647
        %v2696 = vpack.c.b16 %v2680, %v2656
        %v2697 = vpack.c.b16 %v2681, %v2657
        %v2698 = vpack.c.b16 %v2682, %v2658
        %v2699 = vpack.c.b16 %v2683, %v2659
        %v2700 = vpack.c.b16 %v2684, %v2660
        %v2701 = vpack.c.b16 %v2685, %v2661
        %v2702 = vpack.c.b16 %v2686, %v2662
        %v2703 = vpack.c.b16 %v2687, %v2663
        %v2704 = vpack.c.b16 %v2688, %v2664
        %v2705 = vpack.c.b16 %v2689, %v2665
        %v2706 = vpack.c.b16 %v2690, %v2666
        %v2707 = vpack.c.b16 %v2691, %v2667
        %v2708 = vpack.c.b16 %v2692, %v2668
        %v2709 = vpack.c.b16 %v2693, %v2669
        %v2710 = vpack.c.b16 %v2694, %v2670
        %v2711 = vpack.c.b16 %v2695, %v2671
        %v2713 = vshrl.u32 %v2696, 16
        %v2715 = vshll.u32 %v2696, 16
        %v2717 = vrot.slane %v2715, 1
        %v2718 = vor.u32 %v2713, %v2717
        %v2720 = vshrl.u32 %v2697, 16
        %v2722 = vshll.u32 %v2697, 16
        %v2724 = vrot.slane %v2722, 1
        %v2725 = vor.u32 %v2720, %v2724
        %v2727 = vshrl.u32 %v2698, 16
        %v2729 = vshll.u32 %v2698, 16
        %v2731 = vrot.slane %v2729, 1
        %v2732 = vor.u32 %v2727, %v2731
        %v2734 = vshrl.u32 %v2699, 16
        %v2736 = vshll.u32 %v2699, 16
        %v2738 = vrot.slane %v2736, 1
        %v2739 = vor.u32 %v2734, %v2738
        %v2741 = vshrl.u32 %v2700, 16
        %v2743 = vshll.u32 %v2700, 16
        %v2745 = vrot.slane %v2743, 1
        %v2746 = vor.u32 %v2741, %v2745
        %v2748 = vshrl.u32 %v2701, 16
        %v2750 = vshll.u32 %v2701, 16
        %v2752 = vrot.slane %v2750, 1
        %v2753 = vor.u32 %v2748, %v2752
        %v2755 = vshrl.u32 %v2702, 16
        %v2757 = vshll.u32 %v2702, 16
        %v2759 = vrot.slane %v2757, 1
        %v2760 = vor.u32 %v2755, %v2759
        %v2762 = vshrl.u32 %v2703, 16
        %v2764 = vshll.u32 %v2703, 16
        %v2766 = vrot.slane %v2764, 1
        %v2767 = vor.u32 %v2762, %v2766
        %v2769 = vshrl.u32 %v2704, 16
        %v2771 = vshll.u32 %v2704, 16
        %v2773 = vrot.slane %v2771, 1
        %v2774 = vor.u32 %v2769, %v2773
        %v2776 = vshrl.u32 %v2705, 16
        %v2778 = vshll.u32 %v2705, 16
        %v2780 = vrot.slane %v2778, 1
        %v2781 = vor.u32 %v2776, %v2780
        %v2783 = vshrl.u32 %v2706, 16
        %v2785 = vshll.u32 %v2706, 16
        %v2787 = vrot.slane %v2785, 1
        %v2788 = vor.u32 %v2783, %v2787
        %v2790 = vshrl.u32 %v2707, 16
        %v2792 = vshll.u32 %v2707, 16
        %v2794 = vrot.slane %v2792, 1
        %v2795 = vor.u32 %v2790, %v2794
        %v2797 = vshrl.u32 %v2708, 16
        %v2799 = vshll.u32 %v2708, 16
        %v2801 = vrot.slane %v2799, 1
        %v2802 = vor.u32 %v2797, %v2801
        %v2804 = vshrl.u32 %v2709, 16
        %v2806 = vshll.u32 %v2709, 16
        %v2808 = vrot.slane %v2806, 1
        %v2809 = vor.u32 %v2804, %v2808
        %v2811 = vshrl.u32 %v2710, 16
        %v2813 = vshll.u32 %v2710, 16
        %v2815 = vrot.slane %v2813, 1
        %v2816 = vor.u32 %v2811, %v2815
        %v2818 = vshrl.u32 %v2711, 16
        %v2820 = vshll.u32 %v2711, 16
        %v2822 = vrot.slane %v2820, 1
        %v2823 = vor.u32 %v2818, %v2822
        %v2824 = vrot.slane %v2696, 1
        %v2825 = vrot.slane %v2697, 1
        %v2826 = vrot.slane %v2698, 1
        %v2827 = vrot.slane %v2699, 1
        %v2828 = vrot.slane %v2700, 1
        %v2829 = vrot.slane %v2701, 1
        %v2830 = vrot.slane %v2702, 1
        %v2831 = vrot.slane %v2703, 1
        %v2832 = vrot.slane %v2704, 1
        %v2833 = vrot.slane %v2705, 1
        %v2834 = vrot.slane %v2706, 1
        %v2835 = vrot.slane %v2707, 1
        %v2836 = vrot.slane %v2708, 1
        %v2837 = vrot.slane %v2709, 1
        %v2838 = vrot.slane %v2710, 1
        %v2839 = vrot.slane %v2711, 1
        %v2840 = vrot.slane %v2713, 1
        %v2841 = vrot.slane %v2715, 2
        %v2842 = vor.u32 %v2840, %v2841
        %v2843 = vrot.slane %v2720, 1
        %v2844 = vrot.slane %v2722, 2
        %v2845 = vor.u32 %v2843, %v2844
        %v2846 = vrot.slane %v2727, 1
        %v2847 = vrot.slane %v2729, 2
        %v2848 = vor.u32 %v2846, %v2847
        %v2849 = vrot.slane %v2734, 1
        %v2850 = vrot.slane %v2736, 2
        %v2851 = vor.u32 %v2849, %v2850
        %v2852 = vrot.slane %v2741, 1
        %v2853 = vrot.slane %v2743, 2
        %v2854 = vor.u32 %v2852, %v2853
        %v2855 = vrot.slane %v2748, 1
        %v2856 = vrot.slane %v2750, 2
        %v2857 = vor.u32 %v2855, %v2856
        %v2858 = vrot.slane %v2755, 1
        %v2859 = vrot.slane %v2757, 2
        %v2860 = vor.u32 %v2858, %v2859
        %v2861 = vrot.slane %v2762, 1
        %v2862 = vrot.slane %v2764, 2
        %v2863 = vor.u32 %v2861, %v2862
        %v2864 = vrot.slane %v2769, 1
        %v2865 = vrot.slane %v2771, 2
        %v2866 = vor.u32 %v2864, %v2865
        %v2867 = vrot.slane %v2776, 1
        %v2868 = vrot.slane %v2778, 2
        %v2869 = vor.u32 %v2867, %v2868
        %v2870 = vrot.slane %v2783, 1
        %v2871 = vrot.slane %v2785, 2
        %v2872 = vor.u32 %v2870, %v2871
        %v2873 = vrot.slane %v2790, 1
        %v2874 = vrot.slane %v2792, 2
        %v2875 = vor.u32 %v2873, %v2874
        %v2876 = vrot.slane %v2797, 1
        %v2877 = vrot.slane %v2799, 2
        %v2878 = vor.u32 %v2876, %v2877
        %v2879 = vrot.slane %v2804, 1
        %v2880 = vrot.slane %v2806, 2
        %v2881 = vor.u32 %v2879, %v2880
        %v2882 = vrot.slane %v2811, 1
        %v2883 = vrot.slane %v2813, 2
        %v2884 = vor.u32 %v2882, %v2883
        %v2885 = vrot.slane %v2818, 1
        %v2886 = vrot.slane %v2820, 2
        %v2887 = vor.u32 %v2885, %v2886
        %v2888 = vrot.slane %v2696, 2
        %v2889 = vrot.slane %v2697, 2
        %v2890 = vrot.slane %v2698, 2
        %v2891 = vrot.slane %v2699, 2
        %v2892 = vrot.slane %v2700, 2
        %v2893 = vrot.slane %v2701, 2
        %v2894 = vrot.slane %v2702, 2
        %v2895 = vrot.slane %v2703, 2
        %v2896 = vrot.slane %v2704, 2
        %v2897 = vrot.slane %v2705, 2
        %v2898 = vrot.slane %v2706, 2
        %v2899 = vrot.slane %v2707, 2
        %v2900 = vrot.slane %v2708, 2
        %v2901 = vrot.slane %v2709, 2
        %v2902 = vrot.slane %v2710, 2
        %v2903 = vrot.slane %v2711, 2
        %v2904 = vunpack.c.l.b16 %v2718
        %v2905 = vunpack.c.l.b16 %v2725
        %v2906 = vunpack.c.l.b16 %v2824
        %v2907 = vunpack.c.l.b16 %v2825
        %v2908 = vunpack.c.l.b16 %v2842
        %v2909 = vunpack.c.l.b16 %v2845
        %v2910 = vunpack.c.l.b16 %v2888
        %v2911 = vunpack.c.l.b16 %v2889
        %v2912 = vunpack.c.l.b16 %v2732
        %v2913 = vunpack.c.l.b16 %v2739
        %v2914 = vunpack.c.l.b16 %v2826
        %v2915 = vunpack.c.l.b16 %v2827
        %v2916 = vunpack.c.l.b16 %v2848
        %v2917 = vunpack.c.l.b16 %v2851
        %v2918 = vunpack.c.l.b16 %v2890
        %v2919 = vunpack.c.l.b16 %v2891
        %v2920 = vunpack.c.l.b16 %v2746
        %v2921 = vunpack.c.l.b16 %v2753
        %v2922 = vunpack.c.l.b16 %v2828
        %v2923 = vunpack.c.l.b16 %v2829
        %v2924 = vunpack.c.l.b16 %v2854
        %v2925 = vunpack.c.l.b16 %v2857
        %v2926 = vunpack.c.l.b16 %v2892
        %v2927 = vunpack.c.l.b16 %v2893
        %v2928 = vunpack.c.l.b16 %v2760
        %v2929 = vunpack.c.l.b16 %v2767
        %v2930 = vunpack.c.l.b16 %v2830
        %v2931 = vunpack.c.l.b16 %v2831
        %v2932 = vunpack.c.l.b16 %v2860
        %v2933 = vunpack.c.l.b16 %v2863
        %v2934 = vunpack.c.l.b16 %v2894
        %v2935 = vunpack.c.l.b16 %v2895
        %v2936 = vunpack.c.l.b16 %v2774
        %v2937 = vunpack.c.l.b16 %v2781
        %v2938 = vunpack.c.l.b16 %v2832
        %v2939 = vunpack.c.l.b16 %v2833
        %v2940 = vunpack.c.l.b16 %v2866
        %v2941 = vunpack.c.l.b16 %v2869
        %v2942 = vunpack.c.l.b16 %v2896
        %v2943 = vunpack.c.l.b16 %v2897
        %v2944 = vunpack.c.l.b16 %v2788
        %v2945 = vunpack.c.l.b16 %v2795
        %v2946 = vunpack.c.l.b16 %v2834
        %v2947 = vunpack.c.l.b16 %v2835
        %v2948 = vunpack.c.l.b16 %v2872
        %v2949 = vunpack.c.l.b16 %v2875
        %v2950 = vunpack.c.l.b16 %v2898
        %v2951 = vunpack.c.l.b16 %v2899
        %v2952 = vunpack.c.l.b16 %v2802
        %v2953 = vunpack.c.l.b16 %v2809
        %v2954 = vunpack.c.l.b16 %v2836
        %v2955 = vunpack.c.l.b16 %v2837
        %v2956 = vunpack.c.l.b16 %v2878
        %v2957 = vunpack.c.l.b16 %v2881
        %v2958 = vunpack.c.l.b16 %v2900
        %v2959 = vunpack.c.l.b16 %v2901
        %v2960 = vunpack.c.l.b16 %v2816
        %v2961 = vunpack.c.l.b16 %v2823
        %v2962 = vunpack.c.l.b16 %v2838
        %v2963 = vunpack.c.l.b16 %v2839
        %v2964 = vunpack.c.l.b16 %v2884
        %v2965 = vunpack.c.l.b16 %v2887
        %v2966 = vunpack.c.l.b16 %v2902
        %v2967 = vunpack.c.l.b16 %v2903
        %v2968 = vld [vmem:[%s3] sm:$0xff]
        %v2969 = vld [vmem:[%s3 + $0x8] sm:$0xff]
        %v2970 = vld [vmem:[%s3 + $0x10] sm:$0xff]
        %v2971 = vld [vmem:[%s3 + $0x18] sm:$0xff]
        %v2972 = vld [vmem:[%s3 + $0x20] sm:$0xff]
        %v2973 = vld [vmem:[%s3 + $0x28] sm:$0xff]
        %v2974 = vld [vmem:[%s3 + $0x30] sm:$0xff]
        %v2975 = vld [vmem:[%s3 + $0x38] sm:$0xff]
        %v2976 = vld [vmem:[%s3 + $0x40] sm:$0xff]
        %v2977 = vld [vmem:[%s3 + $0x48] sm:$0xff]
        %v2978 = vld [vmem:[%s3 + $0x50] sm:$0xff]
        %v2979 = vld [vmem:[%s3 + $0x58] sm:$0xff]
        %v2980 = vld [vmem:[%s3 + $0x60] sm:$0xff]
        %v2981 = vld [vmem:[%s3 + $0x68] sm:$0xff]
        %v2982 = vld [vmem:[%s3 + $0x70] sm:$0xff]
        %v2983 = vld [vmem:[%s3 + $0x78] sm:$0xff]
        %v2984 = vld [vmem:[%s3 + $0x80] sm:$0xff]
        %v2985 = vld [vmem:[%s3 + $0x88] sm:$0xff]
        %v2986 = vld [vmem:[%s3 + $0x90] sm:$0xff]
        %v2987 = vld [vmem:[%s3 + $0x98] sm:$0xff]
        %v2988 = vld [vmem:[%s3 + $0xa0] sm:$0xff]
        %v2989 = vld [vmem:[%s3 + $0xa8] sm:$0xff]
        %v2990 = vld [vmem:[%s3 + $0xb0] sm:$0xff]
        %v2991 = vld [vmem:[%s3 + $0xb8] sm:$0xff]
        %v2992 = vld [vmem:[%s3 + $0xc0] sm:$0xff]
        %v2993 = vld [vmem:[%s3 + $0xc8] sm:$0xff]
        %v2994 = vld [vmem:[%s3 + $0xd0] sm:$0xff]
        %v2995 = vld [vmem:[%s3 + $0xd8] sm:$0xff]
        %v2996 = vld [vmem:[%s3 + $0xe0] sm:$0xff]
        %v2997 = vld [vmem:[%s3 + $0xe8] sm:$0xff]
        %v2998 = vld [vmem:[%s3 + $0xf0] sm:$0xff]
        %v2999 = vld [vmem:[%s3 + $0xf8] sm:$0xff]
        %v3000 = vld [vmem:[%s3 + $0x100] sm:$0xff]
        %v3001 = vld [vmem:[%s3 + $0x108] sm:$0xff]
        %v3002 = vld [vmem:[%s3 + $0x110] sm:$0xff]
        %v3003 = vld [vmem:[%s3 + $0x118] sm:$0xff]
        %v3004 = vld [vmem:[%s3 + $0x120] sm:$0xff]
        %v3005 = vld [vmem:[%s3 + $0x128] sm:$0xff]
        %v3006 = vld [vmem:[%s3 + $0x130] sm:$0xff]
        %v3007 = vld [vmem:[%s3 + $0x138] sm:$0xff]
        %v3008 = vld [vmem:[%s3 + $0x140] sm:$0xff]
        %v3009 = vld [vmem:[%s3 + $0x148] sm:$0xff]
        %v3010 = vld [vmem:[%s3 + $0x150] sm:$0xff]
        %v3011 = vld [vmem:[%s3 + $0x158] sm:$0xff]
        %v3012 = vld [vmem:[%s3 + $0x160] sm:$0xff]
        %v3013 = vld [vmem:[%s3 + $0x168] sm:$0xff]
        %v3014 = vld [vmem:[%s3 + $0x170] sm:$0xff]
        %v3015 = vld [vmem:[%s3 + $0x178] sm:$0xff]
        %v3016 = vld [vmem:[%s3 + $0x180] sm:$0xff]
        %v3017 = vld [vmem:[%s3 + $0x188] sm:$0xff]
        %v3018 = vld [vmem:[%s3 + $0x190] sm:$0xff]
        %v3019 = vld [vmem:[%s3 + $0x198] sm:$0xff]
        %v3020 = vld [vmem:[%s3 + $0x1a0] sm:$0xff]
        %v3021 = vld [vmem:[%s3 + $0x1a8] sm:$0xff]
        %v3022 = vld [vmem:[%s3 + $0x1b0] sm:$0xff]
        %v3023 = vld [vmem:[%s3 + $0x1b8] sm:$0xff]
        %v3024 = vld [vmem:[%s3 + $0x1c0] sm:$0xff]
        %v3025 = vld [vmem:[%s3 + $0x1c8] sm:$0xff]
        %v3026 = vld [vmem:[%s3 + $0x1d0] sm:$0xff]
        %v3027 = vld [vmem:[%s3 + $0x1d8] sm:$0xff]
        %v3028 = vld [vmem:[%s3 + $0x1e0] sm:$0xff]
        %v3029 = vld [vmem:[%s3 + $0x1e8] sm:$0xff]
        %v3030 = vld [vmem:[%s3 + $0x1f0] sm:$0xff]
        %v3031 = vld [vmem:[%s3 + $0x1f8] sm:$0xff]
        %v3032 = vld [vmem:[%s3 + $0x200] sm:$0xff]
        %v3033 = vld [vmem:[%s3 + $0x208] sm:$0xff]
        %v3034 = vld [vmem:[%s3 + $0x210] sm:$0xff]
        %v3035 = vld [vmem:[%s3 + $0x218] sm:$0xff]
        %v3036 = vld [vmem:[%s3 + $0x220] sm:$0xff]
        %v3037 = vld [vmem:[%s3 + $0x228] sm:$0xff]
        %v3038 = vld [vmem:[%s3 + $0x230] sm:$0xff]
        %v3039 = vld [vmem:[%s3 + $0x238] sm:$0xff]
        %v3040 = vld [vmem:[%s3 + $0x240] sm:$0xff]
        %v3041 = vld [vmem:[%s3 + $0x248] sm:$0xff]
        %v3042 = vld [vmem:[%s3 + $0x250] sm:$0xff]
        %v3043 = vld [vmem:[%s3 + $0x258] sm:$0xff]
        %v3044 = vld [vmem:[%s3 + $0x260] sm:$0xff]
        %v3045 = vld [vmem:[%s3 + $0x268] sm:$0xff]
        %v3046 = vld [vmem:[%s3 + $0x270] sm:$0xff]
        %v3047 = vld [vmem:[%s3 + $0x278] sm:$0xff]
        %v3048 = vld [vmem:[%s3 + $0x280] sm:$0xff]
        %v3049 = vld [vmem:[%s3 + $0x288] sm:$0xff]
        %v3050 = vld [vmem:[%s3 + $0x290] sm:$0xff]
        %v3051 = vld [vmem:[%s3 + $0x298] sm:$0xff]
        %v3052 = vld [vmem:[%s3 + $0x2a0] sm:$0xff]
        %v3053 = vld [vmem:[%s3 + $0x2a8] sm:$0xff]
        %v3054 = vld [vmem:[%s3 + $0x2b0] sm:$0xff]
        %v3055 = vld [vmem:[%s3 + $0x2b8] sm:$0xff]
        %v3056 = vld [vmem:[%s3 + $0x2c0] sm:$0xff]
        %v3057 = vld [vmem:[%s3 + $0x2c8] sm:$0xff]
        %v3058 = vld [vmem:[%s3 + $0x2d0] sm:$0xff]
        %v3059 = vld [vmem:[%s3 + $0x2d8] sm:$0xff]
        %v3060 = vld [vmem:[%s3 + $0x2e0] sm:$0xff]
        %v3061 = vld [vmem:[%s3 + $0x2e8] sm:$0xff]
        %v3062 = vld [vmem:[%s3 + $0x2f0] sm:$0xff]
        %v3063 = vld [vmem:[%s3 + $0x2f8] sm:$0xff]
        %v3064 = vld [vmem:[%s3 + $0x300] sm:$0xff]
        %v3065 = vld [vmem:[%s3 + $0x308] sm:$0xff]
        %v3066 = vld [vmem:[%s3 + $0x310] sm:$0xff]
        %v3067 = vld [vmem:[%s3 + $0x318] sm:$0xff]
        %v3068 = vld [vmem:[%s3 + $0x320] sm:$0xff]
        %v3069 = vld [vmem:[%s3 + $0x328] sm:$0xff]
        %v3070 = vld [vmem:[%s3 + $0x330] sm:$0xff]
        %v3071 = vld [vmem:[%s3 + $0x338] sm:$0xff]
        %v3072 = vld [vmem:[%s3 + $0x340] sm:$0xff]
        %v3073 = vld [vmem:[%s3 + $0x348] sm:$0xff]
        %v3074 = vld [vmem:[%s3 + $0x350] sm:$0xff]
        %v3075 = vld [vmem:[%s3 + $0x358] sm:$0xff]
        %v3076 = vld [vmem:[%s3 + $0x360] sm:$0xff]
        %v3077 = vld [vmem:[%s3 + $0x368] sm:$0xff]
        %v3078 = vld [vmem:[%s3 + $0x370] sm:$0xff]
        %v3079 = vld [vmem:[%s3 + $0x378] sm:$0xff]
        %v3080 = vld [vmem:[%s3 + $0x380] sm:$0xff]
        %v3081 = vld [vmem:[%s3 + $0x388] sm:$0xff]
        %v3082 = vld [vmem:[%s3 + $0x390] sm:$0xff]
        %v3083 = vld [vmem:[%s3 + $0x398] sm:$0xff]
        %v3084 = vld [vmem:[%s3 + $0x3a0] sm:$0xff]
        %v3085 = vld [vmem:[%s3 + $0x3a8] sm:$0xff]
        %v3086 = vld [vmem:[%s3 + $0x3b0] sm:$0xff]
        %v3087 = vld [vmem:[%s3 + $0x3b8] sm:$0xff]
        %v3088 = vld [vmem:[%s3 + $0x3c0] sm:$0xff]
        %v3089 = vld [vmem:[%s3 + $0x3c8] sm:$0xff]
        %v3090 = vld [vmem:[%s3 + $0x3d0] sm:$0xff]
        %v3091 = vld [vmem:[%s3 + $0x3d8] sm:$0xff]
        %v3092 = vld [vmem:[%s3 + $0x3e0] sm:$0xff]
        %v3093 = vld [vmem:[%s3 + $0x3e8] sm:$0xff]
        %v3094 = vld [vmem:[%s3 + $0x3f0] sm:$0xff]
        %v3095 = vld [vmem:[%s3 + $0x3f8] sm:$0xff]
        %v3096 = vld [vmem:[%s3 + $0x400] sm:$0xff]
        %v3097 = vld [vmem:[%s3 + $0x408] sm:$0xff]
        %v3098 = vld [vmem:[%s3 + $0x410] sm:$0xff]
        %v3099 = vld [vmem:[%s3 + $0x418] sm:$0xff]
        %v3100 = vld [vmem:[%s3 + $0x420] sm:$0xff]
        %v3101 = vld [vmem:[%s3 + $0x428] sm:$0xff]
        %v3102 = vld [vmem:[%s3 + $0x430] sm:$0xff]
        %v3103 = vld [vmem:[%s3 + $0x438] sm:$0xff]
        %v3104 = vld [vmem:[%s3 + $0x440] sm:$0xff]
        %v3105 = vld [vmem:[%s3 + $0x448] sm:$0xff]
        %v3106 = vld [vmem:[%s3 + $0x450] sm:$0xff]
        %v3107 = vld [vmem:[%s3 + $0x458] sm:$0xff]
        %v3108 = vld [vmem:[%s3 + $0x460] sm:$0xff]
        %v3109 = vld [vmem:[%s3 + $0x468] sm:$0xff]
        %v3110 = vld [vmem:[%s3 + $0x470] sm:$0xff]
        %v3111 = vld [vmem:[%s3 + $0x478] sm:$0xff]
        %v3112 = vld [vmem:[%s3 + $0x480] sm:$0xff]
        %v3113 = vld [vmem:[%s3 + $0x488] sm:$0xff]
        %v3114 = vld [vmem:[%s3 + $0x490] sm:$0xff]
        %v3115 = vld [vmem:[%s3 + $0x498] sm:$0xff]
        %v3116 = vld [vmem:[%s3 + $0x4a0] sm:$0xff]
        %v3117 = vld [vmem:[%s3 + $0x4a8] sm:$0xff]
        %v3118 = vld [vmem:[%s3 + $0x4b0] sm:$0xff]
        %v3119 = vld [vmem:[%s3 + $0x4b8] sm:$0xff]
        %v3120 = vld [vmem:[%s3 + $0x4c0] sm:$0xff]
        %v3121 = vld [vmem:[%s3 + $0x4c8] sm:$0xff]
        %v3122 = vld [vmem:[%s3 + $0x4d0] sm:$0xff]
        %v3123 = vld [vmem:[%s3 + $0x4d8] sm:$0xff]
        %v3124 = vld [vmem:[%s3 + $0x4e0] sm:$0xff]
        %v3125 = vld [vmem:[%s3 + $0x4e8] sm:$0xff]
        %v3126 = vld [vmem:[%s3 + $0x4f0] sm:$0xff]
        %v3127 = vld [vmem:[%s3 + $0x4f8] sm:$0xff]
        %v3128 = vpack.c.b16 %v2658, %v2656
        %v3129 = vpack.c.b16 %v2659, %v2657
        %v3130 = vpack.c.b16 %v2912, %v2904
        %v3131 = vpack.c.b16 %v2913, %v2905
        %v3132 = vpack.c.b16 %v2914, %v2906
        %v3133 = vpack.c.b16 %v2915, %v2907
        %v3134 = vpack.c.b16 %v2916, %v2908
        %v3135 = vpack.c.b16 %v2917, %v2909
        %v3136 = vpack.c.b16 %v2918, %v2910
        %v3137 = vpack.c.b16 %v2919, %v2911
        %v3138 = vpack.c.b16 %v2662, %v2660
        %v3139 = vpack.c.b16 %v2663, %v2661
        %v3140 = vpack.c.b16 %v2928, %v2920
        %v3141 = vpack.c.b16 %v2929, %v2921
        %v3142 = vpack.c.b16 %v2930, %v2922
        %v3143 = vpack.c.b16 %v2931, %v2923
        %v3144 = vpack.c.b16 %v2932, %v2924
        %v3145 = vpack.c.b16 %v2933, %v2925
        %v3146 = vpack.c.b16 %v2934, %v2926
        %v3147 = vpack.c.b16 %v2935, %v2927
        %v3148 = vpack.c.b16 %v2666, %v2664
        %v3149 = vpack.c.b16 %v2667, %v2665
        %v3150 = vpack.c.b16 %v2944, %v2936
        %v3151 = vpack.c.b16 %v2945, %v2937
        %v3152 = vpack.c.b16 %v2946, %v2938
        %v3153 = vpack.c.b16 %v2947, %v2939
        %v3154 = vpack.c.b16 %v2948, %v2940
        %v3155 = vpack.c.b16 %v2949, %v2941
        %v3156 = vpack.c.b16 %v2950, %v2942
        %v3157 = vpack.c.b16 %v2951, %v2943
        %v3158 = vpack.c.b16 %v2670, %v2668
        %v3159 = vpack.c.b16 %v2671, %v2669
        %v3160 = vpack.c.b16 %v2960, %v2952
        %v3161 = vpack.c.b16 %v2961, %v2953
        %v3162 = vpack.c.b16 %v2962, %v2954
        %v3163 = vpack.c.b16 %v2963, %v2955
        %v3164 = vpack.c.b16 %v2964, %v2956
        %v3165 = vpack.c.b16 %v2965, %v2957
        %v3166 = vpack.c.b16 %v2966, %v2958
        %v3167 = vpack.c.b16 %v2967, %v2959
        %v3368 = vunpack.c.l.b16 %v2968
        %v3369 = vunpack.c.h.b16 %v2968
        %v3370 = vunpack.c.l.b16 %v2969
        %v3371 = vunpack.c.h.b16 %v2969
        %v3372 = vunpack.c.l.b16 %v2970
        %v3373 = vunpack.c.h.b16 %v2970
        %v3374 = vunpack.c.l.b16 %v2971
        %v3375 = vunpack.c.h.b16 %v2971
        %v3376 = vunpack.c.l.b16 %v2972
        %v3377 = vunpack.c.h.b16 %v2972
        %v3378 = vunpack.c.l.b16 %v2973
        %v3379 = vunpack.c.h.b16 %v2973
        %v3380 = vunpack.c.l.b16 %v2974
        %v3381 = vunpack.c.h.b16 %v2974
        %v3382 = vunpack.c.l.b16 %v2975
        %v3383 = vunpack.c.h.b16 %v2975
        %v3384 = vunpack.c.l.b16 %v2976
        %v3385 = vunpack.c.h.b16 %v2976
        %v3386 = vunpack.c.l.b16 %v2977
        %v3387 = vunpack.c.h.b16 %v2977
        %v3388 = vunpack.c.l.b16 %v2978
        %v3389 = vunpack.c.h.b16 %v2978
        %v3390 = vunpack.c.l.b16 %v2979
        %v3391 = vunpack.c.h.b16 %v2979
        %v3392 = vunpack.c.l.b16 %v2980
        %v3393 = vunpack.c.h.b16 %v2980
        %v3394 = vunpack.c.l.b16 %v2981
        %v3395 = vunpack.c.h.b16 %v2981
        %v3396 = vunpack.c.l.b16 %v2982
        %v3397 = vunpack.c.h.b16 %v2982
        %v3398 = vunpack.c.l.b16 %v2983
        %v3399 = vunpack.c.h.b16 %v2983
        %v3400 = vunpack.c.l.b16 %v2984
        %v3401 = vunpack.c.h.b16 %v2984
        %v3402 = vunpack.c.l.b16 %v2985
        %v3403 = vunpack.c.h.b16 %v2985
        %v3404 = vunpack.c.l.b16 %v2986
        %v3405 = vunpack.c.h.b16 %v2986
        %v3406 = vunpack.c.l.b16 %v2987
        %v3407 = vunpack.c.h.b16 %v2987
        %v3408 = vunpack.c.l.b16 %v2988
        %v3409 = vunpack.c.h.b16 %v2988
        %v3410 = vunpack.c.l.b16 %v2989
        %v3411 = vunpack.c.h.b16 %v2989
        %v3412 = vunpack.c.l.b16 %v2990
        %v3413 = vunpack.c.h.b16 %v2990
        %v3414 = vunpack.c.l.b16 %v2991
        %v3415 = vunpack.c.h.b16 %v2991
        %v3416 = vunpack.c.l.b16 %v2992
        %v3417 = vunpack.c.h.b16 %v2992
        %v3418 = vunpack.c.l.b16 %v2993
        %v3419 = vunpack.c.h.b16 %v2993
        %v3420 = vunpack.c.l.b16 %v2994
        %v3421 = vunpack.c.h.b16 %v2994
        %v3422 = vunpack.c.l.b16 %v2995
        %v3423 = vunpack.c.h.b16 %v2995
        %v3424 = vunpack.c.l.b16 %v2996
        %v3425 = vunpack.c.h.b16 %v2996
        %v3426 = vunpack.c.l.b16 %v2997
        %v3427 = vunpack.c.h.b16 %v2997
        %v3428 = vunpack.c.l.b16 %v2998
        %v3429 = vunpack.c.h.b16 %v2998
        %v3430 = vunpack.c.l.b16 %v2999
        %v3431 = vunpack.c.h.b16 %v2999
        %v3432 = vunpack.c.l.b16 %v3000
        %v3433 = vunpack.c.h.b16 %v3000
        %v3434 = vunpack.c.l.b16 %v3001
        %v3435 = vunpack.c.h.b16 %v3001
        %v3436 = vunpack.c.l.b16 %v3002
        %v3437 = vunpack.c.h.b16 %v3002
        %v3438 = vunpack.c.l.b16 %v3003
        %v3439 = vunpack.c.h.b16 %v3003
        %v3440 = vunpack.c.l.b16 %v3004
        %v3441 = vunpack.c.h.b16 %v3004
        %v3442 = vunpack.c.l.b16 %v3005
        %v3443 = vunpack.c.h.b16 %v3005
        %v3444 = vunpack.c.l.b16 %v3006
        %v3445 = vunpack.c.h.b16 %v3006
        %v3446 = vunpack.c.l.b16 %v3007
        %v3447 = vunpack.c.h.b16 %v3007
        %v3448 = vunpack.c.l.b16 %v3008
        %v3449 = vunpack.c.h.b16 %v3008
        %v3450 = vunpack.c.l.b16 %v3009
        %v3451 = vunpack.c.h.b16 %v3009
        %v3452 = vunpack.c.l.b16 %v3010
        %v3453 = vunpack.c.h.b16 %v3010
        %v3454 = vunpack.c.l.b16 %v3011
        %v3455 = vunpack.c.h.b16 %v3011
        %v3456 = vunpack.c.l.b16 %v3012
        %v3457 = vunpack.c.h.b16 %v3012
        %v3458 = vunpack.c.l.b16 %v3013
        %v3459 = vunpack.c.h.b16 %v3013
        %v3460 = vunpack.c.l.b16 %v3014
        %v3461 = vunpack.c.h.b16 %v3014
        %v3462 = vunpack.c.l.b16 %v3015
        %v3463 = vunpack.c.h.b16 %v3015
        %v3464 = vunpack.c.l.b16 %v3016
        %v3465 = vunpack.c.h.b16 %v3016
        %v3466 = vunpack.c.l.b16 %v3017
        %v3467 = vunpack.c.h.b16 %v3017
        %v3468 = vunpack.c.l.b16 %v3018
        %v3469 = vunpack.c.h.b16 %v3018
        %v3470 = vunpack.c.l.b16 %v3019
        %v3471 = vunpack.c.h.b16 %v3019
        %v3472 = vunpack.c.l.b16 %v3020
        %v3473 = vunpack.c.h.b16 %v3020
        %v3474 = vunpack.c.l.b16 %v3021
        %v3475 = vunpack.c.h.b16 %v3021
        %v3476 = vunpack.c.l.b16 %v3022
        %v3477 = vunpack.c.h.b16 %v3022
        %v3478 = vunpack.c.l.b16 %v3023
        %v3479 = vunpack.c.h.b16 %v3023
        %v3480 = vunpack.c.l.b16 %v3024
        %v3481 = vunpack.c.h.b16 %v3024
        %v3482 = vunpack.c.l.b16 %v3025
        %v3483 = vunpack.c.h.b16 %v3025
        %v3484 = vunpack.c.l.b16 %v3026
        %v3485 = vunpack.c.h.b16 %v3026
        %v3486 = vunpack.c.l.b16 %v3027
        %v3487 = vunpack.c.h.b16 %v3027
        %v3488 = vunpack.c.l.b16 %v3028
        %v3489 = vunpack.c.h.b16 %v3028
        %v3490 = vunpack.c.l.b16 %v3029
        %v3491 = vunpack.c.h.b16 %v3029
        %v3492 = vunpack.c.l.b16 %v3030
        %v3493 = vunpack.c.h.b16 %v3030
        %v3494 = vunpack.c.l.b16 %v3031
        %v3495 = vunpack.c.h.b16 %v3031
        %v3496 = vunpack.c.l.b16 %v3032
        %v3497 = vunpack.c.h.b16 %v3032
        %v3498 = vunpack.c.l.b16 %v3033
        %v3499 = vunpack.c.h.b16 %v3033
        %v3500 = vunpack.c.l.b16 %v3034
        %v3501 = vunpack.c.h.b16 %v3034
        %v3502 = vunpack.c.l.b16 %v3035
        %v3503 = vunpack.c.h.b16 %v3035
        %v3504 = vunpack.c.l.b16 %v3036
        %v3505 = vunpack.c.h.b16 %v3036
        %v3506 = vunpack.c.l.b16 %v3037
        %v3507 = vunpack.c.h.b16 %v3037
        %v3508 = vunpack.c.l.b16 %v3038
        %v3509 = vunpack.c.h.b16 %v3038
        %v3510 = vunpack.c.l.b16 %v3039
        %v3511 = vunpack.c.h.b16 %v3039
        %v3512 = vunpack.c.l.b16 %v3040
        %v3513 = vunpack.c.h.b16 %v3040
        %v3514 = vunpack.c.l.b16 %v3041
        %v3515 = vunpack.c.h.b16 %v3041
        %v3516 = vunpack.c.l.b16 %v3042
        %v3517 = vunpack.c.h.b16 %v3042
        %v3518 = vunpack.c.l.b16 %v3043
        %v3519 = vunpack.c.h.b16 %v3043
        %v3520 = vunpack.c.l.b16 %v3044
        %v3521 = vunpack.c.h.b16 %v3044
        %v3522 = vunpack.c.l.b16 %v3045
        %v3523 = vunpack.c.h.b16 %v3045
        %v3524 = vunpack.c.l.b16 %v3046
        %v3525 = vunpack.c.h.b16 %v3046
        %v3526 = vunpack.c.l.b16 %v3047
        %v3527 = vunpack.c.h.b16 %v3047
        %v3528 = vunpack.c.l.b16 %v3048
        %v3529 = vunpack.c.h.b16 %v3048
        %v3530 = vunpack.c.l.b16 %v3049
        %v3531 = vunpack.c.h.b16 %v3049
        %v3532 = vunpack.c.l.b16 %v3050
        %v3533 = vunpack.c.h.b16 %v3050
        %v3534 = vunpack.c.l.b16 %v3051
        %v3535 = vunpack.c.h.b16 %v3051
        %v3536 = vunpack.c.l.b16 %v3052
        %v3537 = vunpack.c.h.b16 %v3052
        %v3538 = vunpack.c.l.b16 %v3053
        %v3539 = vunpack.c.h.b16 %v3053
        %v3540 = vunpack.c.l.b16 %v3054
        %v3541 = vunpack.c.h.b16 %v3054
        %v3542 = vunpack.c.l.b16 %v3055
        %v3543 = vunpack.c.h.b16 %v3055
        %v3544 = vunpack.c.l.b16 %v3056
        %v3545 = vunpack.c.h.b16 %v3056
        %v3546 = vunpack.c.l.b16 %v3057
        %v3547 = vunpack.c.h.b16 %v3057
        %v3548 = vunpack.c.l.b16 %v3058
        %v3549 = vunpack.c.h.b16 %v3058
        %v3550 = vunpack.c.l.b16 %v3059
        %v3551 = vunpack.c.h.b16 %v3059
        %v3552 = vunpack.c.l.b16 %v3060
        %v3553 = vunpack.c.h.b16 %v3060
        %v3554 = vunpack.c.l.b16 %v3061
        %v3555 = vunpack.c.h.b16 %v3061
        %v3556 = vunpack.c.l.b16 %v3062
        %v3557 = vunpack.c.h.b16 %v3062
        %v3558 = vunpack.c.l.b16 %v3063
        %v3559 = vunpack.c.h.b16 %v3063
        %v3560 = vunpack.c.l.b16 %v3064
        %v3561 = vunpack.c.h.b16 %v3064
        %v3562 = vunpack.c.l.b16 %v3065
        %v3563 = vunpack.c.h.b16 %v3065
        %v3564 = vunpack.c.l.b16 %v3066
        %v3565 = vunpack.c.h.b16 %v3066
        %v3566 = vunpack.c.l.b16 %v3067
        %v3567 = vunpack.c.h.b16 %v3067
        %v3568 = vunpack.c.l.b16 %v3068
        %v3569 = vunpack.c.h.b16 %v3068
        %v3570 = vunpack.c.l.b16 %v3069
        %v3571 = vunpack.c.h.b16 %v3069
        %v3572 = vunpack.c.l.b16 %v3070
        %v3573 = vunpack.c.h.b16 %v3070
        %v3574 = vunpack.c.l.b16 %v3071
        %v3575 = vunpack.c.h.b16 %v3071
        %v3576 = vunpack.c.l.b16 %v3072
        %v3577 = vunpack.c.h.b16 %v3072
        %v3578 = vunpack.c.l.b16 %v3073
        %v3579 = vunpack.c.h.b16 %v3073
        %v3580 = vunpack.c.l.b16 %v3074
        %v3581 = vunpack.c.h.b16 %v3074
        %v3582 = vunpack.c.l.b16 %v3075
        %v3583 = vunpack.c.h.b16 %v3075
        %v3584 = vunpack.c.l.b16 %v3076
        %v3585 = vunpack.c.h.b16 %v3076
        %v3586 = vunpack.c.l.b16 %v3077
        %v3587 = vunpack.c.h.b16 %v3077
        %v3588 = vunpack.c.l.b16 %v3078
        %v3589 = vunpack.c.h.b16 %v3078
        %v3590 = vunpack.c.l.b16 %v3079
        %v3591 = vunpack.c.h.b16 %v3079
        %v3592 = vunpack.c.l.b16 %v3080
        %v3593 = vunpack.c.h.b16 %v3080
        %v3594 = vunpack.c.l.b16 %v3081
        %v3595 = vunpack.c.h.b16 %v3081
        %v3596 = vunpack.c.l.b16 %v3082
        %v3597 = vunpack.c.h.b16 %v3082
        %v3598 = vunpack.c.l.b16 %v3083
        %v3599 = vunpack.c.h.b16 %v3083
        %v3600 = vunpack.c.l.b16 %v3084
        %v3601 = vunpack.c.h.b16 %v3084
        %v3602 = vunpack.c.l.b16 %v3085
        %v3603 = vunpack.c.h.b16 %v3085
        %v3604 = vunpack.c.l.b16 %v3086
        %v3605 = vunpack.c.h.b16 %v3086
        %v3606 = vunpack.c.l.b16 %v3087
        %v3607 = vunpack.c.h.b16 %v3087
        %v3608 = vunpack.c.l.b16 %v3088
        %v3609 = vunpack.c.h.b16 %v3088
        %v3610 = vunpack.c.l.b16 %v3089
        %v3611 = vunpack.c.h.b16 %v3089
        %v3612 = vunpack.c.l.b16 %v3090
        %v3613 = vunpack.c.h.b16 %v3090
        %v3614 = vunpack.c.l.b16 %v3091
        %v3615 = vunpack.c.h.b16 %v3091
        %v3616 = vunpack.c.l.b16 %v3092
        %v3617 = vunpack.c.h.b16 %v3092
        %v3618 = vunpack.c.l.b16 %v3093
        %v3619 = vunpack.c.h.b16 %v3093
        %v3620 = vunpack.c.l.b16 %v3094
        %v3621 = vunpack.c.h.b16 %v3094
        %v3622 = vunpack.c.l.b16 %v3095
        %v3623 = vunpack.c.h.b16 %v3095
        %v3624 = vunpack.c.l.b16 %v3096
        %v3625 = vunpack.c.h.b16 %v3096
        %v3626 = vunpack.c.l.b16 %v3097
        %v3627 = vunpack.c.h.b16 %v3097
        %v3628 = vunpack.c.l.b16 %v3098
        %v3629 = vunpack.c.h.b16 %v3098
        %v3630 = vunpack.c.l.b16 %v3099
        %v3631 = vunpack.c.h.b16 %v3099
        %v3632 = vunpack.c.l.b16 %v3100
        %v3633 = vunpack.c.h.b16 %v3100
        %v3634 = vunpack.c.l.b16 %v3101
        %v3635 = vunpack.c.h.b16 %v3101
        %v3636 = vunpack.c.l.b16 %v3102
        %v3637 = vunpack.c.h.b16 %v3102
        %v3638 = vunpack.c.l.b16 %v3103
        %v3639 = vunpack.c.h.b16 %v3103
        %v3640 = vunpack.c.l.b16 %v3104
        %v3641 = vunpack.c.h.b16 %v3104
        %v3642 = vunpack.c.l.b16 %v3105
        %v3643 = vunpack.c.h.b16 %v3105
        %v3644 = vunpack.c.l.b16 %v3106
        %v3645 = vunpack.c.h.b16 %v3106
        %v3646 = vunpack.c.l.b16 %v3107
        %v3647 = vunpack.c.h.b16 %v3107
        %v3648 = vunpack.c.l.b16 %v3108
        %v3649 = vunpack.c.h.b16 %v3108
        %v3650 = vunpack.c.l.b16 %v3109
        %v3651 = vunpack.c.h.b16 %v3109
        %v3652 = vunpack.c.l.b16 %v3110
        %v3653 = vunpack.c.h.b16 %v3110
        %v3654 = vunpack.c.l.b16 %v3111
        %v3655 = vunpack.c.h.b16 %v3111
        %v3656 = vunpack.c.l.b16 %v3112
        %v3657 = vunpack.c.h.b16 %v3112
        %v3658 = vunpack.c.l.b16 %v3113
        %v3659 = vunpack.c.h.b16 %v3113
        %v3660 = vunpack.c.l.b16 %v3114
        %v3661 = vunpack.c.h.b16 %v3114
        %v3662 = vunpack.c.l.b16 %v3115
        %v3663 = vunpack.c.h.b16 %v3115
        %v3664 = vunpack.c.l.b16 %v3116
        %v3665 = vunpack.c.h.b16 %v3116
        %v3666 = vunpack.c.l.b16 %v3117
        %v3667 = vunpack.c.h.b16 %v3117
        %v3668 = vunpack.c.l.b16 %v3118
        %v3669 = vunpack.c.h.b16 %v3118
        %v3670 = vunpack.c.l.b16 %v3119
        %v3671 = vunpack.c.h.b16 %v3119
        %v3672 = vunpack.c.l.b16 %v3120
        %v3673 = vunpack.c.h.b16 %v3120
        %v3674 = vunpack.c.l.b16 %v3121
        %v3675 = vunpack.c.h.b16 %v3121
        %v3676 = vunpack.c.l.b16 %v3122
        %v3677 = vunpack.c.h.b16 %v3122
        %v3678 = vunpack.c.l.b16 %v3123
        %v3679 = vunpack.c.h.b16 %v3123
        %v3680 = vunpack.c.l.b16 %v3124
        %v3681 = vunpack.c.h.b16 %v3124
        %v3682 = vunpack.c.l.b16 %v3125
        %v3683 = vunpack.c.h.b16 %v3125
        %v3684 = vunpack.c.l.b16 %v3126
        %v3685 = vunpack.c.h.b16 %v3126
        %v3686 = vunpack.c.l.b16 %v3127
        %v3687 = vunpack.c.h.b16 %v3127
        %v3688 = vpack.c.b16 %v3370, %v3368
        %v3689 = vpack.c.b16 %v3371, %v3369
        %v3690 = vpack.c.b16 %v3374, %v3372
        %v3691 = vpack.c.b16 %v3375, %v3373
        %v3692 = vpack.c.b16 %v3378, %v3376
        %v3693 = vpack.c.b16 %v3379, %v3377
        %v3694 = vpack.c.b16 %v3382, %v3380
        %v3695 = vpack.c.b16 %v3383, %v3381
        %v3696 = vpack.c.b16 %v3386, %v3384
        %v3697 = vpack.c.b16 %v3387, %v3385
        %v3698 = vpack.c.b16 %v3390, %v3388
        %v3699 = vpack.c.b16 %v3391, %v3389
        %v3700 = vpack.c.b16 %v3394, %v3392
        %v3701 = vpack.c.b16 %v3395, %v3393
        %v3702 = vpack.c.b16 %v3398, %v3396
        %v3703 = vpack.c.b16 %v3399, %v3397
        %v3704 = vpack.c.b16 %v3402, %v3400
        %v3705 = vpack.c.b16 %v3403, %v3401
        %v3706 = vpack.c.b16 %v3406, %v3404
        %v3707 = vpack.c.b16 %v3407, %v3405
        %v3708 = vpack.c.b16 %v3410, %v3408
        %v3709 = vpack.c.b16 %v3411, %v3409
        %v3710 = vpack.c.b16 %v3414, %v3412
        %v3711 = vpack.c.b16 %v3415, %v3413
        %v3712 = vpack.c.b16 %v3418, %v3416
        %v3713 = vpack.c.b16 %v3419, %v3417
        %v3714 = vpack.c.b16 %v3422, %v3420
        %v3715 = vpack.c.b16 %v3423, %v3421
        %v3716 = vpack.c.b16 %v3426, %v3424
        %v3717 = vpack.c.b16 %v3427, %v3425
        %v3718 = vpack.c.b16 %v3430, %v3428
        %v3719 = vpack.c.b16 %v3431, %v3429
        %v3720 = vpack.c.b16 %v3434, %v3432
        %v3721 = vpack.c.b16 %v3435, %v3433
        %v3722 = vpack.c.b16 %v3438, %v3436
        %v3723 = vpack.c.b16 %v3439, %v3437
        %v3724 = vpack.c.b16 %v3442, %v3440
        %v3725 = vpack.c.b16 %v3443, %v3441
        %v3726 = vpack.c.b16 %v3446, %v3444
        %v3727 = vpack.c.b16 %v3447, %v3445
        %v3728 = vpack.c.b16 %v3450, %v3448
        %v3729 = vpack.c.b16 %v3451, %v3449
        %v3730 = vpack.c.b16 %v3454, %v3452
        %v3731 = vpack.c.b16 %v3455, %v3453
        %v3732 = vpack.c.b16 %v3458, %v3456
        %v3733 = vpack.c.b16 %v3459, %v3457
        %v3734 = vpack.c.b16 %v3462, %v3460
        %v3735 = vpack.c.b16 %v3463, %v3461
        %v3736 = vpack.c.b16 %v3466, %v3464
        %v3737 = vpack.c.b16 %v3467, %v3465
        %v3738 = vpack.c.b16 %v3470, %v3468
        %v3739 = vpack.c.b16 %v3471, %v3469
        %v3740 = vpack.c.b16 %v3474, %v3472
        %v3741 = vpack.c.b16 %v3475, %v3473
        %v3742 = vpack.c.b16 %v3478, %v3476
        %v3743 = vpack.c.b16 %v3479, %v3477
        %v3744 = vpack.c.b16 %v3482, %v3480
        %v3745 = vpack.c.b16 %v3483, %v3481
        %v3746 = vpack.c.b16 %v3486, %v3484
        %v3747 = vpack.c.b16 %v3487, %v3485
        %v3748 = vpack.c.b16 %v3490, %v3488
        %v3749 = vpack.c.b16 %v3491, %v3489
        %v3750 = vpack.c.b16 %v3494, %v3492
        %v3751 = vpack.c.b16 %v3495, %v3493
        %v3752 = vpack.c.b16 %v3498, %v3496
        %v3753 = vpack.c.b16 %v3499, %v3497
        %v3754 = vpack.c.b16 %v3502, %v3500
        %v3755 = vpack.c.b16 %v3503, %v3501
        %v3756 = vpack.c.b16 %v3506, %v3504
        %v3757 = vpack.c.b16 %v3507, %v3505
        %v3758 = vpack.c.b16 %v3510, %v3508
        %v3759 = vpack.c.b16 %v3511, %v3509
        %v3760 = vpack.c.b16 %v3514, %v3512
        %v3761 = vpack.c.b16 %v3515, %v3513
        %v3762 = vpack.c.b16 %v3518, %v3516
        %v3763 = vpack.c.b16 %v3519, %v3517
        %v3764 = vpack.c.b16 %v3522, %v3520
        %v3765 = vpack.c.b16 %v3523, %v3521
        %v3766 = vpack.c.b16 %v3526, %v3524
        %v3767 = vpack.c.b16 %v3527, %v3525
        %v3768 = vpack.c.b16 %v3530, %v3528
        %v3769 = vpack.c.b16 %v3531, %v3529
        %v3770 = vpack.c.b16 %v3534, %v3532
        %v3771 = vpack.c.b16 %v3535, %v3533
        %v3772 = vpack.c.b16 %v3538, %v3536
        %v3773 = vpack.c.b16 %v3539, %v3537
        %v3774 = vpack.c.b16 %v3542, %v3540
        %v3775 = vpack.c.b16 %v3543, %v3541
        %v3776 = vpack.c.b16 %v3546, %v3544
        %v3777 = vpack.c.b16 %v3547, %v3545
        %v3778 = vpack.c.b16 %v3550, %v3548
        %v3779 = vpack.c.b16 %v3551, %v3549
        %v3780 = vpack.c.b16 %v3554, %v3552
        %v3781 = vpack.c.b16 %v3555, %v3553
        %v3782 = vpack.c.b16 %v3558, %v3556
        %v3783 = vpack.c.b16 %v3559, %v3557
        %v3784 = vpack.c.b16 %v3562, %v3560
        %v3785 = vpack.c.b16 %v3563, %v3561
        %v3786 = vpack.c.b16 %v3566, %v3564
        %v3787 = vpack.c.b16 %v3567, %v3565
        %v3788 = vpack.c.b16 %v3570, %v3568
        %v3789 = vpack.c.b16 %v3571, %v3569
        %v3790 = vpack.c.b16 %v3574, %v3572
        %v3791 = vpack.c.b16 %v3575, %v3573
        %v3792 = vpack.c.b16 %v3578, %v3576
        %v3793 = vpack.c.b16 %v3579, %v3577
        %v3794 = vpack.c.b16 %v3582, %v3580
        %v3795 = vpack.c.b16 %v3583, %v3581
        %v3796 = vpack.c.b16 %v3586, %v3584
        %v3797 = vpack.c.b16 %v3587, %v3585
        %v3798 = vpack.c.b16 %v3590, %v3588
        %v3799 = vpack.c.b16 %v3591, %v3589
        %v3800 = vpack.c.b16 %v3594, %v3592
        %v3801 = vpack.c.b16 %v3595, %v3593
        %v3802 = vpack.c.b16 %v3598, %v3596
        %v3803 = vpack.c.b16 %v3599, %v3597
        %v3804 = vpack.c.b16 %v3602, %v3600
        %v3805 = vpack.c.b16 %v3603, %v3601
        %v3806 = vpack.c.b16 %v3606, %v3604
        %v3807 = vpack.c.b16 %v3607, %v3605
        %v3808 = vpack.c.b16 %v3610, %v3608
        %v3809 = vpack.c.b16 %v3611, %v3609
        %v3810 = vpack.c.b16 %v3614, %v3612
        %v3811 = vpack.c.b16 %v3615, %v3613
        %v3812 = vpack.c.b16 %v3618, %v3616
        %v3813 = vpack.c.b16 %v3619, %v3617
        %v3814 = vpack.c.b16 %v3622, %v3620
        %v3815 = vpack.c.b16 %v3623, %v3621
        %v3816 = vpack.c.b16 %v3626, %v3624
        %v3817 = vpack.c.b16 %v3627, %v3625
        %v3818 = vpack.c.b16 %v3630, %v3628
        %v3819 = vpack.c.b16 %v3631, %v3629
        %v3820 = vpack.c.b16 %v3634, %v3632
        %v3821 = vpack.c.b16 %v3635, %v3633
        %v3822 = vpack.c.b16 %v3638, %v3636
        %v3823 = vpack.c.b16 %v3639, %v3637
        %v3824 = vpack.c.b16 %v3642, %v3640
        %v3825 = vpack.c.b16 %v3643, %v3641
        %v3826 = vpack.c.b16 %v3646, %v3644
        %v3827 = vpack.c.b16 %v3647, %v3645
        %v3828 = vpack.c.b16 %v3650, %v3648
        %v3829 = vpack.c.b16 %v3651, %v3649
        %v3830 = vpack.c.b16 %v3654, %v3652
        %v3831 = vpack.c.b16 %v3655, %v3653
        %v3832 = vpack.c.b16 %v3658, %v3656
        %v3833 = vpack.c.b16 %v3659, %v3657
        %v3834 = vpack.c.b16 %v3662, %v3660
        %v3835 = vpack.c.b16 %v3663, %v3661
        %v3836 = vpack.c.b16 %v3666, %v3664
        %v3837 = vpack.c.b16 %v3667, %v3665
        %v3838 = vpack.c.b16 %v3670, %v3668
        %v3839 = vpack.c.b16 %v3671, %v3669
        %v3840 = vpack.c.b16 %v3674, %v3672
        %v3841 = vpack.c.b16 %v3675, %v3673
        %v3842 = vpack.c.b16 %v3678, %v3676
        %v3843 = vpack.c.b16 %v3679, %v3677
        %v3844 = vpack.c.b16 %v3682, %v3680
        %v3845 = vpack.c.b16 %v3683, %v3681
        %v3846 = vpack.c.b16 %v3686, %v3684
        %v3847 = vpack.c.b16 %v3687, %v3685
        %4008 = vmatpush.bf16.msra.mxu0 %v3702
        %4009 = vmatpush.bf16.msra.mxu0 %v3700
        %4010 = vmatpush.bf16.msra.mxu0 %v3698
        %4011 = vmatpush.bf16.msra.mxu0 %v3696
        %4012 = vmatpush.bf16.msra.mxu0 %v3694
        %4013 = vmatpush.bf16.msra.mxu0 %v3692
        %4014 = vmatpush.bf16.msra.mxu0 %v3690
        %4015 = vmatpush.bf16.msra.mxu0 %v3688
        %4016 = vmatmul.bf16.gmra.mxu0 %v3128
        %v4017 = vpop.f32.mrf.mxu0
        %v4018 = vadd.f32 0.0, %v4017
        %v4019 = vpop.f32.mrf.mxu0
        %v4020 = vadd.f32 0.0, %v4019
        %4021 = vmatmul.bf16.gmra.mxu0 %v3138
        %v4022 = vpop.f32.mrf.mxu0
        %v4023 = vadd.f32 0.0, %v4022
        %v4024 = vpop.f32.mrf.mxu0
        %v4025 = vadd.f32 0.0, %v4024
        %4026 = vmatmul.bf16.gmra.mxu0 %v3148
        %v4027 = vpop.f32.mrf.mxu0
        %v4028 = vadd.f32 0.0, %v4027
        %v4029 = vpop.f32.mrf.mxu0
        %v4030 = vadd.f32 0.0, %v4029
        %4031 = vmatmul.bf16.gmra.mxu0 %v3158
        %v4032 = vpop.f32.mrf.mxu0
        %v4033 = vadd.f32 0.0, %v4032
        %v4034 = vpop.f32.mrf.mxu0
        %v4035 = vadd.f32 0.0, %v4034
        %4036 = vdwg.mxu0
        %4037 = vmatpush.bf16.msra.mxu0 %v3718
        %4038 = vmatpush.bf16.msra.mxu0 %v3716
        %4039 = vmatpush.bf16.msra.mxu0 %v3714
        %4040 = vmatpush.bf16.msra.mxu0 %v3712
        %4041 = vmatpush.bf16.msra.mxu0 %v3710
        %4042 = vmatpush.bf16.msra.mxu0 %v3708
        %4043 = vmatpush.bf16.msra.mxu0 %v3706
        %4044 = vmatpush.bf16.msra.mxu0 %v3704
        %4045 = vmatmul.bf16.gmra.mxu0 %v3129
        %v4046 = vpop.f32.mrf.mxu0
        %v4047 = vadd.f32 %v4018, %v4046
        %v4048 = vpop.f32.mrf.mxu0
        %v4049 = vadd.f32 %v4020, %v4048
        %4050 = vmatmul.bf16.gmra.mxu0 %v3139
        %v4051 = vpop.f32.mrf.mxu0
        %v4052 = vadd.f32 %v4023, %v4051
        %v4053 = vpop.f32.mrf.mxu0
        %v4054 = vadd.f32 %v4025, %v4053
        %4055 = vmatmul.bf16.gmra.mxu0 %v3149
        %v4056 = vpop.f32.mrf.mxu0
        %v4057 = vadd.f32 %v4028, %v4056
        %v4058 = vpop.f32.mrf.mxu0
        %v4059 = vadd.f32 %v4030, %v4058
        %4060 = vmatmul.bf16.gmra.mxu0 %v3159
        %v4061 = vpop.f32.mrf.mxu0
        %v4062 = vadd.f32 %v4033, %v4061
        %v4063 = vpop.f32.mrf.mxu0
        %v4064 = vadd.f32 %v4035, %v4063
        %4065 = vdwg.mxu0
        %4066 = vmatpush.bf16.msra.mxu0 %v3734
        %4067 = vmatpush.bf16.msra.mxu0 %v3732
        %4068 = vmatpush.bf16.msra.mxu0 %v3730
        %4069 = vmatpush.bf16.msra.mxu0 %v3728
        %4070 = vmatpush.bf16.msra.mxu0 %v3726
        %4071 = vmatpush.bf16.msra.mxu0 %v3724
        %4072 = vmatpush.bf16.msra.mxu0 %v3722
        %4073 = vmatpush.bf16.msra.mxu0 %v3720
        %4074 = vmatmul.bf16.gmra.mxu0 %v3130
        %v4075 = vpop.f32.mrf.mxu0
        %v4076 = vadd.f32 %v4047, %v4075
        %v4077 = vpop.f32.mrf.mxu0
        %v4078 = vadd.f32 %v4049, %v4077
        %4079 = vmatmul.bf16.gmra.mxu0 %v3140
        %v4080 = vpop.f32.mrf.mxu0
        %v4081 = vadd.f32 %v4052, %v4080
        %v4082 = vpop.f32.mrf.mxu0
        %v4083 = vadd.f32 %v4054, %v4082
        %4084 = vmatmul.bf16.gmra.mxu0 %v3150
        %v4085 = vpop.f32.mrf.mxu0
        %v4086 = vadd.f32 %v4057, %v4085
        %v4087 = vpop.f32.mrf.mxu0
        %v4088 = vadd.f32 %v4059, %v4087
        %4089 = vmatmul.bf16.gmra.mxu0 %v3160
        %v4090 = vpop.f32.mrf.mxu0
        %v4091 = vadd.f32 %v4062, %v4090
        %v4092 = vpop.f32.mrf.mxu0
        %v4093 = vadd.f32 %v4064, %v4092
        %4094 = vdwg.mxu0
        %4095 = vmatpush.bf16.msra.mxu0 %v3750
        %4096 = vmatpush.bf16.msra.mxu0 %v3748
        %4097 = vmatpush.bf16.msra.mxu0 %v3746
        %4098 = vmatpush.bf16.msra.mxu0 %v3744
        %4099 = vmatpush.bf16.msra.mxu0 %v3742
        %4100 = vmatpush.bf16.msra.mxu0 %v3740
        %4101 = vmatpush.bf16.msra.mxu0 %v3738
        %4102 = vmatpush.bf16.msra.mxu0 %v3736
        %4103 = vmatmul.bf16.gmra.mxu0 %v3131
        %v4104 = vpop.f32.mrf.mxu0
        %v4105 = vadd.f32 %v4076, %v4104
        %v4106 = vpop.f32.mrf.mxu0
        %v4107 = vadd.f32 %v4078, %v4106
        %4108 = vmatmul.bf16.gmra.mxu0 %v3141
        %v4109 = vpop.f32.mrf.mxu0
        %v4110 = vadd.f32 %v4081, %v4109
        %v4111 = vpop.f32.mrf.mxu0
        %v4112 = vadd.f32 %v4083, %v4111
        %4113 = vmatmul.bf16.gmra.mxu0 %v3151
        %v4114 = vpop.f32.mrf.mxu0
        %v4115 = vadd.f32 %v4086, %v4114
        %v4116 = vpop.f32.mrf.mxu0
        %v4117 = vadd.f32 %v4088, %v4116
        %4118 = vmatmul.bf16.gmra.mxu0 %v3161
        %v4119 = vpop.f32.mrf.mxu0
        %v4120 = vadd.f32 %v4091, %v4119
        %v4121 = vpop.f32.mrf.mxu0
        %v4122 = vadd.f32 %v4093, %v4121
        %4123 = vdwg.mxu0
        %4124 = vmatpush.bf16.msra.mxu0 %v3766
        %4125 = vmatpush.bf16.msra.mxu0 %v3764
        %4126 = vmatpush.bf16.msra.mxu0 %v3762
        %4127 = vmatpush.bf16.msra.mxu0 %v3760
        %4128 = vmatpush.bf16.msra.mxu0 %v3758
        %4129 = vmatpush.bf16.msra.mxu0 %v3756
        %4130 = vmatpush.bf16.msra.mxu0 %v3754
        %4131 = vmatpush.bf16.msra.mxu0 %v3752
        %4132 = vmatmul.bf16.gmra.mxu0 %v3132
        %v4133 = vpop.f32.mrf.mxu0
        %v4134 = vadd.f32 %v4105, %v4133
        %v4135 = vpop.f32.mrf.mxu0
        %v4136 = vadd.f32 %v4107, %v4135
        %4137 = vmatmul.bf16.gmra.mxu0 %v3142
        %v4138 = vpop.f32.mrf.mxu0
        %v4139 = vadd.f32 %v4110, %v4138
        %v4140 = vpop.f32.mrf.mxu0
        %v4141 = vadd.f32 %v4112, %v4140
        %4142 = vmatmul.bf16.gmra.mxu0 %v3152
        %v4143 = vpop.f32.mrf.mxu0
        %v4144 = vadd.f32 %v4115, %v4143
        %v4145 = vpop.f32.mrf.mxu0
        %v4146 = vadd.f32 %v4117, %v4145
        %4147 = vmatmul.bf16.gmra.mxu0 %v3162
        %v4148 = vpop.f32.mrf.mxu0
        %v4149 = vadd.f32 %v4120, %v4148
        %v4150 = vpop.f32.mrf.mxu0
        %v4151 = vadd.f32 %v4122, %v4150
        %4152 = vdwg.mxu0
        %4153 = vmatpush.bf16.msra.mxu0 %v3782
        %4154 = vmatpush.bf16.msra.mxu0 %v3780
        %4155 = vmatpush.bf16.msra.mxu0 %v3778
        %4156 = vmatpush.bf16.msra.mxu0 %v3776
        %4157 = vmatpush.bf16.msra.mxu0 %v3774
        %4158 = vmatpush.bf16.msra.mxu0 %v3772
        %4159 = vmatpush.bf16.msra.mxu0 %v3770
        %4160 = vmatpush.bf16.msra.mxu0 %v3768
        %4161 = vmatmul.bf16.gmra.mxu0 %v3133
        %v4162 = vpop.f32.mrf.mxu0
        %v4163 = vadd.f32 %v4134, %v4162
        %v4164 = vpop.f32.mrf.mxu0
        %v4165 = vadd.f32 %v4136, %v4164
        %4166 = vmatmul.bf16.gmra.mxu0 %v3143
        %v4167 = vpop.f32.mrf.mxu0
        %v4168 = vadd.f32 %v4139, %v4167
        %v4169 = vpop.f32.mrf.mxu0
        %v4170 = vadd.f32 %v4141, %v4169
        %4171 = vmatmul.bf16.gmra.mxu0 %v3153
        %v4172 = vpop.f32.mrf.mxu0
        %v4173 = vadd.f32 %v4144, %v4172
        %v4174 = vpop.f32.mrf.mxu0
        %v4175 = vadd.f32 %v4146, %v4174
        %4176 = vmatmul.bf16.gmra.mxu0 %v3163
        %v4177 = vpop.f32.mrf.mxu0
        %v4178 = vadd.f32 %v4149, %v4177
        %v4179 = vpop.f32.mrf.mxu0
        %v4180 = vadd.f32 %v4151, %v4179
        %4181 = vdwg.mxu0
        %4182 = vmatpush.bf16.msra.mxu0 %v3798
        %4183 = vmatpush.bf16.msra.mxu0 %v3796
        %4184 = vmatpush.bf16.msra.mxu0 %v3794
        %4185 = vmatpush.bf16.msra.mxu0 %v3792
        %4186 = vmatpush.bf16.msra.mxu0 %v3790
        %4187 = vmatpush.bf16.msra.mxu0 %v3788
        %4188 = vmatpush.bf16.msra.mxu0 %v3786
        %4189 = vmatpush.bf16.msra.mxu0 %v3784
        %4190 = vmatmul.bf16.gmra.mxu0 %v3134
        %v4191 = vpop.f32.mrf.mxu0
        %v4192 = vadd.f32 %v4163, %v4191
        %v4193 = vpop.f32.mrf.mxu0
        %v4194 = vadd.f32 %v4165, %v4193
        %4195 = vmatmul.bf16.gmra.mxu0 %v3144
        %v4196 = vpop.f32.mrf.mxu0
        %v4197 = vadd.f32 %v4168, %v4196
        %v4198 = vpop.f32.mrf.mxu0
        %v4199 = vadd.f32 %v4170, %v4198
        %4200 = vmatmul.bf16.gmra.mxu0 %v3154
        %v4201 = vpop.f32.mrf.mxu0
        %v4202 = vadd.f32 %v4173, %v4201
        %v4203 = vpop.f32.mrf.mxu0
        %v4204 = vadd.f32 %v4175, %v4203
        %4205 = vmatmul.bf16.gmra.mxu0 %v3164
        %v4206 = vpop.f32.mrf.mxu0
        %v4207 = vadd.f32 %v4178, %v4206
        %v4208 = vpop.f32.mrf.mxu0
        %v4209 = vadd.f32 %v4180, %v4208
        %4210 = vdwg.mxu0
        %4211 = vmatpush.bf16.msra.mxu0 %v3814
        %4212 = vmatpush.bf16.msra.mxu0 %v3812
        %4213 = vmatpush.bf16.msra.mxu0 %v3810
        %4214 = vmatpush.bf16.msra.mxu0 %v3808
        %4215 = vmatpush.bf16.msra.mxu0 %v3806
        %4216 = vmatpush.bf16.msra.mxu0 %v3804
        %4217 = vmatpush.bf16.msra.mxu0 %v3802
        %4218 = vmatpush.bf16.msra.mxu0 %v3800
        %4219 = vmatmul.bf16.gmra.mxu0 %v3135
        %v4220 = vpop.f32.mrf.mxu0
        %v4221 = vadd.f32 %v4192, %v4220
        %v4222 = vpop.f32.mrf.mxu0
        %v4223 = vadd.f32 %v4194, %v4222
        %4224 = vmatmul.bf16.gmra.mxu0 %v3145
        %v4225 = vpop.f32.mrf.mxu0
        %v4226 = vadd.f32 %v4197, %v4225
        %v4227 = vpop.f32.mrf.mxu0
        %v4228 = vadd.f32 %v4199, %v4227
        %4229 = vmatmul.bf16.gmra.mxu0 %v3155
        %v4230 = vpop.f32.mrf.mxu0
        %v4231 = vadd.f32 %v4202, %v4230
        %v4232 = vpop.f32.mrf.mxu0
        %v4233 = vadd.f32 %v4204, %v4232
        %4234 = vmatmul.bf16.gmra.mxu0 %v3165
        %v4235 = vpop.f32.mrf.mxu0
        %v4236 = vadd.f32 %v4207, %v4235
        %v4237 = vpop.f32.mrf.mxu0
        %v4238 = vadd.f32 %v4209, %v4237
        %4239 = vdwg.mxu0
        %4240 = vmatpush.bf16.msra.mxu0 %v3830
        %4241 = vmatpush.bf16.msra.mxu0 %v3828
        %4242 = vmatpush.bf16.msra.mxu0 %v3826
        %4243 = vmatpush.bf16.msra.mxu0 %v3824
        %4244 = vmatpush.bf16.msra.mxu0 %v3822
        %4245 = vmatpush.bf16.msra.mxu0 %v3820
        %4246 = vmatpush.bf16.msra.mxu0 %v3818
        %4247 = vmatpush.bf16.msra.mxu0 %v3816
        %4248 = vmatmul.bf16.gmra.mxu0 %v3136
        %v4249 = vpop.f32.mrf.mxu0
        %v4250 = vadd.f32 %v4221, %v4249
        %v4251 = vpop.f32.mrf.mxu0
        %v4252 = vadd.f32 %v4223, %v4251
        %4253 = vmatmul.bf16.gmra.mxu0 %v3146
        %v4254 = vpop.f32.mrf.mxu0
        %v4255 = vadd.f32 %v4226, %v4254
        %v4256 = vpop.f32.mrf.mxu0
        %v4257 = vadd.f32 %v4228, %v4256
        %4258 = vmatmul.bf16.gmra.mxu0 %v3156
        %v4259 = vpop.f32.mrf.mxu0
        %v4260 = vadd.f32 %v4231, %v4259
        %v4261 = vpop.f32.mrf.mxu0
        %v4262 = vadd.f32 %v4233, %v4261
        %4263 = vmatmul.bf16.gmra.mxu0 %v3166
        %v4264 = vpop.f32.mrf.mxu0
        %v4265 = vadd.f32 %v4236, %v4264
        %v4266 = vpop.f32.mrf.mxu0
        %v4267 = vadd.f32 %v4238, %v4266
        %4268 = vdwg.mxu0
        %4269 = vmatpush.bf16.msra.mxu0 %v3846
        %4270 = vmatpush.bf16.msra.mxu0 %v3844
        %4271 = vmatpush.bf16.msra.mxu0 %v3842
        %4272 = vmatpush.bf16.msra.mxu0 %v3840
        %4273 = vmatpush.bf16.msra.mxu0 %v3838
        %4274 = vmatpush.bf16.msra.mxu0 %v3836
        %4275 = vmatpush.bf16.msra.mxu0 %v3834
        %4276 = vmatpush.bf16.msra.mxu0 %v3832
        %4277 = vmatmul.bf16.gmra.mxu0 %v3137
        %v4278 = vpop.f32.mrf.mxu0
        %v4279 = vadd.f32 %v4250, %v4278
        %v4280 = vpop.f32.mrf.mxu0
        %v4281 = vadd.f32 %v4252, %v4280
        %4282 = vmatmul.bf16.gmra.mxu0 %v3147
        %v4283 = vpop.f32.mrf.mxu0
        %v4284 = vadd.f32 %v4255, %v4283
        %v4285 = vpop.f32.mrf.mxu0
        %v4286 = vadd.f32 %v4257, %v4285
        %4287 = vmatmul.bf16.gmra.mxu0 %v3157
        %v4288 = vpop.f32.mrf.mxu0
        %v4289 = vadd.f32 %v4260, %v4288
        %v4290 = vpop.f32.mrf.mxu0
        %v4291 = vadd.f32 %v4262, %v4290
        %4292 = vmatmul.bf16.gmra.mxu0 %v3167
        %v4293 = vpop.f32.mrf.mxu0
        %v4294 = vadd.f32 %v4265, %v4293
        %v4295 = vpop.f32.mrf.mxu0
        %v4296 = vadd.f32 %v4267, %v4295
        %4297 = vdwg.mxu0
        %4298 = vmatpush.bf16.msra.mxu0 %v3703
        %4299 = vmatpush.bf16.msra.mxu0 %v3701
        %4300 = vmatpush.bf16.msra.mxu0 %v3699
        %4301 = vmatpush.bf16.msra.mxu0 %v3697
        %4302 = vmatpush.bf16.msra.mxu0 %v3695
        %4303 = vmatpush.bf16.msra.mxu0 %v3693
        %4304 = vmatpush.bf16.msra.mxu0 %v3691
        %4305 = vmatpush.bf16.msra.mxu0 %v3689
        %4306 = vmatmul.bf16.gmra.mxu0 %v3128
        %v4307 = vpop.f32.mrf.mxu0
        %v4308 = vadd.f32 0.0, %v4307
        %v4309 = vpop.f32.mrf.mxu0
        %v4310 = vadd.f32 0.0, %v4309
        %4311 = vmatmul.bf16.gmra.mxu0 %v3138
        %v4312 = vpop.f32.mrf.mxu0
        %v4313 = vadd.f32 0.0, %v4312
        %v4314 = vpop.f32.mrf.mxu0
        %v4315 = vadd.f32 0.0, %v4314
        %4316 = vmatmul.bf16.gmra.mxu0 %v3148
        %v4317 = vpop.f32.mrf.mxu0
        %v4318 = vadd.f32 0.0, %v4317
        %v4319 = vpop.f32.mrf.mxu0
        %v4320 = vadd.f32 0.0, %v4319
        %4321 = vmatmul.bf16.gmra.mxu0 %v3158
        %v4322 = vpop.f32.mrf.mxu0
        %v4323 = vadd.f32 0.0, %v4322
        %v4324 = vpop.f32.mrf.mxu0
        %v4325 = vadd.f32 0.0, %v4324
        %4326 = vdwg.mxu0
        %4327 = vmatpush.bf16.msra.mxu0 %v3719
        %4328 = vmatpush.bf16.msra.mxu0 %v3717
        %4329 = vmatpush.bf16.msra.mxu0 %v3715
        %4330 = vmatpush.bf16.msra.mxu0 %v3713
        %4331 = vmatpush.bf16.msra.mxu0 %v3711
        %4332 = vmatpush.bf16.msra.mxu0 %v3709
        %4333 = vmatpush.bf16.msra.mxu0 %v3707
        %4334 = vmatpush.bf16.msra.mxu0 %v3705
        %4335 = vmatmul.bf16.gmra.mxu0 %v3129
        %v4336 = vpop.f32.mrf.mxu0
        %v4337 = vadd.f32 %v4308, %v4336
        %v4338 = vpop.f32.mrf.mxu0
        %v4339 = vadd.f32 %v4310, %v4338
        %4340 = vmatmul.bf16.gmra.mxu0 %v3139
        %v4341 = vpop.f32.mrf.mxu0
        %v4342 = vadd.f32 %v4313, %v4341
        %v4343 = vpop.f32.mrf.mxu0
        %v4344 = vadd.f32 %v4315, %v4343
        %4345 = vmatmul.bf16.gmra.mxu0 %v3149
        %v4346 = vpop.f32.mrf.mxu0
        %v4347 = vadd.f32 %v4318, %v4346
        %v4348 = vpop.f32.mrf.mxu0
        %v4349 = vadd.f32 %v4320, %v4348
        %4350 = vmatmul.bf16.gmra.mxu0 %v3159
        %v4351 = vpop.f32.mrf.mxu0
        %v4352 = vadd.f32 %v4323, %v4351
        %v4353 = vpop.f32.mrf.mxu0
        %v4354 = vadd.f32 %v4325, %v4353
        %4355 = vdwg.mxu0
        %4356 = vmatpush.bf16.msra.mxu0 %v3735
        %4357 = vmatpush.bf16.msra.mxu0 %v3733
        %4358 = vmatpush.bf16.msra.mxu0 %v3731
        %4359 = vmatpush.bf16.msra.mxu0 %v3729
        %4360 = vmatpush.bf16.msra.mxu0 %v3727
        %4361 = vmatpush.bf16.msra.mxu0 %v3725
        %4362 = vmatpush.bf16.msra.mxu0 %v3723
        %4363 = vmatpush.bf16.msra.mxu0 %v3721
        %4364 = vmatmul.bf16.gmra.mxu0 %v3130
        %v4365 = vpop.f32.mrf.mxu0
        %v4366 = vadd.f32 %v4337, %v4365
        %v4367 = vpop.f32.mrf.mxu0
        %v4368 = vadd.f32 %v4339, %v4367
        %4369 = vmatmul.bf16.gmra.mxu0 %v3140
        %v4370 = vpop.f32.mrf.mxu0
        %v4371 = vadd.f32 %v4342, %v4370
        %v4372 = vpop.f32.mrf.mxu0
        %v4373 = vadd.f32 %v4344, %v4372
        %4374 = vmatmul.bf16.gmra.mxu0 %v3150
        %v4375 = vpop.f32.mrf.mxu0
        %v4376 = vadd.f32 %v4347, %v4375
        %v4377 = vpop.f32.mrf.mxu0
        %v4378 = vadd.f32 %v4349, %v4377
        %4379 = vmatmul.bf16.gmra.mxu0 %v3160
        %v4380 = vpop.f32.mrf.mxu0
        %v4381 = vadd.f32 %v4352, %v4380
        %v4382 = vpop.f32.mrf.mxu0
        %v4383 = vadd.f32 %v4354, %v4382
        %4384 = vdwg.mxu0
        %4385 = vmatpush.bf16.msra.mxu0 %v3751
        %4386 = vmatpush.bf16.msra.mxu0 %v3749
        %4387 = vmatpush.bf16.msra.mxu0 %v3747
        %4388 = vmatpush.bf16.msra.mxu0 %v3745
        %4389 = vmatpush.bf16.msra.mxu0 %v3743
        %4390 = vmatpush.bf16.msra.mxu0 %v3741
        %4391 = vmatpush.bf16.msra.mxu0 %v3739
        %4392 = vmatpush.bf16.msra.mxu0 %v3737
        %4393 = vmatmul.bf16.gmra.mxu0 %v3131
        %v4394 = vpop.f32.mrf.mxu0
        %v4395 = vadd.f32 %v4366, %v4394
        %v4396 = vpop.f32.mrf.mxu0
        %v4397 = vadd.f32 %v4368, %v4396
        %4398 = vmatmul.bf16.gmra.mxu0 %v3141
        %v4399 = vpop.f32.mrf.mxu0
        %v4400 = vadd.f32 %v4371, %v4399
        %v4401 = vpop.f32.mrf.mxu0
        %v4402 = vadd.f32 %v4373, %v4401
        %4403 = vmatmul.bf16.gmra.mxu0 %v3151
        %v4404 = vpop.f32.mrf.mxu0
        %v4405 = vadd.f32 %v4376, %v4404
        %v4406 = vpop.f32.mrf.mxu0
        %v4407 = vadd.f32 %v4378, %v4406
        %4408 = vmatmul.bf16.gmra.mxu0 %v3161
        %v4409 = vpop.f32.mrf.mxu0
        %v4410 = vadd.f32 %v4381, %v4409
        %v4411 = vpop.f32.mrf.mxu0
        %v4412 = vadd.f32 %v4383, %v4411
        %4413 = vdwg.mxu0
        %4414 = vmatpush.bf16.msra.mxu0 %v3767
        %4415 = vmatpush.bf16.msra.mxu0 %v3765
        %4416 = vmatpush.bf16.msra.mxu0 %v3763
        %4417 = vmatpush.bf16.msra.mxu0 %v3761
        %4418 = vmatpush.bf16.msra.mxu0 %v3759
        %4419 = vmatpush.bf16.msra.mxu0 %v3757
        %4420 = vmatpush.bf16.msra.mxu0 %v3755
        %4421 = vmatpush.bf16.msra.mxu0 %v3753
        %4422 = vmatmul.bf16.gmra.mxu0 %v3132
        %v4423 = vpop.f32.mrf.mxu0
        %v4424 = vadd.f32 %v4395, %v4423
        %v4425 = vpop.f32.mrf.mxu0
        %v4426 = vadd.f32 %v4397, %v4425
        %4427 = vmatmul.bf16.gmra.mxu0 %v3142
        %v4428 = vpop.f32.mrf.mxu0
        %v4429 = vadd.f32 %v4400, %v4428
        %v4430 = vpop.f32.mrf.mxu0
        %v4431 = vadd.f32 %v4402, %v4430
        %4432 = vmatmul.bf16.gmra.mxu0 %v3152
        %v4433 = vpop.f32.mrf.mxu0
        %v4434 = vadd.f32 %v4405, %v4433
        %v4435 = vpop.f32.mrf.mxu0
        %v4436 = vadd.f32 %v4407, %v4435
        %4437 = vmatmul.bf16.gmra.mxu0 %v3162
        %v4438 = vpop.f32.mrf.mxu0
        %v4439 = vadd.f32 %v4410, %v4438
        %v4440 = vpop.f32.mrf.mxu0
        %v4441 = vadd.f32 %v4412, %v4440
        %4442 = vdwg.mxu0
        %4443 = vmatpush.bf16.msra.mxu0 %v3783
        %4444 = vmatpush.bf16.msra.mxu0 %v3781
        %4445 = vmatpush.bf16.msra.mxu0 %v3779
        %4446 = vmatpush.bf16.msra.mxu0 %v3777
        %4447 = vmatpush.bf16.msra.mxu0 %v3775
        %4448 = vmatpush.bf16.msra.mxu0 %v3773
        %4449 = vmatpush.bf16.msra.mxu0 %v3771
        %4450 = vmatpush.bf16.msra.mxu0 %v3769
        %4451 = vmatmul.bf16.gmra.mxu0 %v3133
        %v4452 = vpop.f32.mrf.mxu0
        %v4453 = vadd.f32 %v4424, %v4452
        %v4454 = vpop.f32.mrf.mxu0
        %v4455 = vadd.f32 %v4426, %v4454
        %4456 = vmatmul.bf16.gmra.mxu0 %v3143
        %v4457 = vpop.f32.mrf.mxu0
        %v4458 = vadd.f32 %v4429, %v4457
        %v4459 = vpop.f32.mrf.mxu0
        %v4460 = vadd.f32 %v4431, %v4459
        %4461 = vmatmul.bf16.gmra.mxu0 %v3153
        %v4462 = vpop.f32.mrf.mxu0
        %v4463 = vadd.f32 %v4434, %v4462
        %v4464 = vpop.f32.mrf.mxu0
        %v4465 = vadd.f32 %v4436, %v4464
        %4466 = vmatmul.bf16.gmra.mxu0 %v3163
        %v4467 = vpop.f32.mrf.mxu0
        %v4468 = vadd.f32 %v4439, %v4467
        %v4469 = vpop.f32.mrf.mxu0
        %v4470 = vadd.f32 %v4441, %v4469
        %4471 = vdwg.mxu0
        %4472 = vmatpush.bf16.msra.mxu0 %v3799
        %4473 = vmatpush.bf16.msra.mxu0 %v3797
        %4474 = vmatpush.bf16.msra.mxu0 %v3795
        %4475 = vmatpush.bf16.msra.mxu0 %v3793
        %4476 = vmatpush.bf16.msra.mxu0 %v3791
        %4477 = vmatpush.bf16.msra.mxu0 %v3789
        %4478 = vmatpush.bf16.msra.mxu0 %v3787
        %4479 = vmatpush.bf16.msra.mxu0 %v3785
        %4480 = vmatmul.bf16.gmra.mxu0 %v3134
        %v4481 = vpop.f32.mrf.mxu0
        %v4482 = vadd.f32 %v4453, %v4481
        %v4483 = vpop.f32.mrf.mxu0
        %v4484 = vadd.f32 %v4455, %v4483
        %4485 = vmatmul.bf16.gmra.mxu0 %v3144
        %v4486 = vpop.f32.mrf.mxu0
        %v4487 = vadd.f32 %v4458, %v4486
        %v4488 = vpop.f32.mrf.mxu0
        %v4489 = vadd.f32 %v4460, %v4488
        %4490 = vmatmul.bf16.gmra.mxu0 %v3154
        %v4491 = vpop.f32.mrf.mxu0
        %v4492 = vadd.f32 %v4463, %v4491
        %v4493 = vpop.f32.mrf.mxu0
        %v4494 = vadd.f32 %v4465, %v4493
        %4495 = vmatmul.bf16.gmra.mxu0 %v3164
        %v4496 = vpop.f32.mrf.mxu0
        %v4497 = vadd.f32 %v4468, %v4496
        %v4498 = vpop.f32.mrf.mxu0
        %v4499 = vadd.f32 %v4470, %v4498
        %4500 = vdwg.mxu0
        %4501 = vmatpush.bf16.msra.mxu0 %v3815
        %4502 = vmatpush.bf16.msra.mxu0 %v3813
        %4503 = vmatpush.bf16.msra.mxu0 %v3811
        %4504 = vmatpush.bf16.msra.mxu0 %v3809
        %4505 = vmatpush.bf16.msra.mxu0 %v3807
        %4506 = vmatpush.bf16.msra.mxu0 %v3805
        %4507 = vmatpush.bf16.msra.mxu0 %v3803
        %4508 = vmatpush.bf16.msra.mxu0 %v3801
        %4509 = vmatmul.bf16.gmra.mxu0 %v3135
        %v4510 = vpop.f32.mrf.mxu0
        %v4511 = vadd.f32 %v4482, %v4510
        %v4512 = vpop.f32.mrf.mxu0
        %v4513 = vadd.f32 %v4484, %v4512
        %4514 = vmatmul.bf16.gmra.mxu0 %v3145
        %v4515 = vpop.f32.mrf.mxu0
        %v4516 = vadd.f32 %v4487, %v4515
        %v4517 = vpop.f32.mrf.mxu0
        %v4518 = vadd.f32 %v4489, %v4517
        %4519 = vmatmul.bf16.gmra.mxu0 %v3155
        %v4520 = vpop.f32.mrf.mxu0
        %v4521 = vadd.f32 %v4492, %v4520
        %v4522 = vpop.f32.mrf.mxu0
        %v4523 = vadd.f32 %v4494, %v4522
        %4524 = vmatmul.bf16.gmra.mxu0 %v3165
        %v4525 = vpop.f32.mrf.mxu0
        %v4526 = vadd.f32 %v4497, %v4525
        %v4527 = vpop.f32.mrf.mxu0
        %v4528 = vadd.f32 %v4499, %v4527
        %4529 = vdwg.mxu0
        %4530 = vmatpush.bf16.msra.mxu0 %v3831
        %4531 = vmatpush.bf16.msra.mxu0 %v3829
        %4532 = vmatpush.bf16.msra.mxu0 %v3827
        %4533 = vmatpush.bf16.msra.mxu0 %v3825
        %4534 = vmatpush.bf16.msra.mxu0 %v3823
        %4535 = vmatpush.bf16.msra.mxu0 %v3821
        %4536 = vmatpush.bf16.msra.mxu0 %v3819
        %4537 = vmatpush.bf16.msra.mxu0 %v3817
        %4538 = vmatmul.bf16.gmra.mxu0 %v3136
        %v4539 = vpop.f32.mrf.mxu0
        %v4540 = vadd.f32 %v4511, %v4539
        %v4541 = vpop.f32.mrf.mxu0
        %v4542 = vadd.f32 %v4513, %v4541
        %4543 = vmatmul.bf16.gmra.mxu0 %v3146
        %v4544 = vpop.f32.mrf.mxu0
        %v4545 = vadd.f32 %v4516, %v4544
        %v4546 = vpop.f32.mrf.mxu0
        %v4547 = vadd.f32 %v4518, %v4546
        %4548 = vmatmul.bf16.gmra.mxu0 %v3156
        %v4549 = vpop.f32.mrf.mxu0
        %v4550 = vadd.f32 %v4521, %v4549
        %v4551 = vpop.f32.mrf.mxu0
        %v4552 = vadd.f32 %v4523, %v4551
        %4553 = vmatmul.bf16.gmra.mxu0 %v3166
        %v4554 = vpop.f32.mrf.mxu0
        %v4555 = vadd.f32 %v4526, %v4554
        %v4556 = vpop.f32.mrf.mxu0
        %v4557 = vadd.f32 %v4528, %v4556
        %4558 = vdwg.mxu0
        %4559 = vmatpush.bf16.msra.mxu0 %v3847
        %4560 = vmatpush.bf16.msra.mxu0 %v3845
        %4561 = vmatpush.bf16.msra.mxu0 %v3843
        %4562 = vmatpush.bf16.msra.mxu0 %v3841
        %4563 = vmatpush.bf16.msra.mxu0 %v3839
        %4564 = vmatpush.bf16.msra.mxu0 %v3837
        %4565 = vmatpush.bf16.msra.mxu0 %v3835
        %4566 = vmatpush.bf16.msra.mxu0 %v3833
        %4567 = vmatmul.bf16.gmra.mxu0 %v3137
        %v4568 = vpop.f32.mrf.mxu0
        %v4569 = vadd.f32 %v4540, %v4568
        %v4570 = vpop.f32.mrf.mxu0
        %v4571 = vadd.f32 %v4542, %v4570
        %4572 = vmatmul.bf16.gmra.mxu0 %v3147
        %v4573 = vpop.f32.mrf.mxu0
        %v4574 = vadd.f32 %v4545, %v4573
        %v4575 = vpop.f32.mrf.mxu0
        %v4576 = vadd.f32 %v4547, %v4575
        %4577 = vmatmul.bf16.gmra.mxu0 %v3157
        %v4578 = vpop.f32.mrf.mxu0
        %v4579 = vadd.f32 %v4550, %v4578
        %v4580 = vpop.f32.mrf.mxu0
        %v4581 = vadd.f32 %v4552, %v4580
        %4582 = vmatmul.bf16.gmra.mxu0 %v3167
        %v4583 = vpop.f32.mrf.mxu0
        %v4584 = vadd.f32 %v4555, %v4583
        %v4585 = vpop.f32.mrf.mxu0
        %v4586 = vadd.f32 %v4557, %v4585
        %4587 = vdwg.mxu0
        %v4588 = vmax.f32 %v4279, %v4569
        %v4589 = vmax.f32 %v4281, %v4571
        %v4590 = vmax.f32 %v4284, %v4574
        %v4591 = vmax.f32 %v4286, %v4576
        %v4592 = vmax.f32 %v4289, %v4579
        %v4593 = vmax.f32 %v4291, %v4581
        %v4594 = vmax.f32 %v4294, %v4584
        %v4595 = vmax.f32 %v4296, %v4586
        %v4604 = vrot.slane %v4588, 1
        %v4605 = vrot.slane %v4589, 1
        %v4606 = vrot.slane %v4590, 1
        %v4607 = vrot.slane %v4591, 1
        %v4608 = vrot.slane %v4592, 1
        %v4609 = vrot.slane %v4593, 1
        %v4610 = vrot.slane %v4594, 1
        %v4611 = vrot.slane %v4595, 1
        %v4620 = vmax.f32 %v4588, %v4604
        %v4621 = vmax.f32 %v4589, %v4605
        %v4622 = vmax.f32 %v4590, %v4606
        %v4623 = vmax.f32 %v4591, %v4607
        %v4624 = vmax.f32 %v4592, %v4608
        %v4625 = vmax.f32 %v4593, %v4609
        %v4626 = vmax.f32 %v4594, %v4610
        %v4627 = vmax.f32 %v4595, %v4611
        %v4636 = vrot.slane %v4621, 7
        %vm4637 = vcmask 1041409
        %v4638 = vsel %vm4637, %v4636, %v4620
        %v4639 = vrot.slane %v4622, 6
        %vm4640 = vcmask 1042434
        %v4641 = vsel %vm4640, %v4639, %v4638
        %v4642 = vrot.slane %v4623, 5
        %vm4643 = vcmask 1043459
        %v4644 = vsel %vm4643, %v4642, %v4641
        %v4645 = vrot.slane %v4624, 4
        %vm4646 = vcmask 1044484
        %v4647 = vsel %vm4646, %v4645, %v4644
        %v4648 = vrot.slane %v4625, 3
        %vm4649 = vcmask 1045509
        %v4650 = vsel %vm4649, %v4648, %v4647
        %v4651 = vrot.slane %v4626, 2
        %vm4652 = vcmask 1046534
        %v4653 = vsel %vm4652, %v4651, %v4650
        %v4654 = vrot.slane %v4627, 1
        %vm4655 = vcmask 1047559
        %v4656 = vsel %vm4655, %v4654, %v4653
        %v4658 = vrot.slane %v4620, 2
        %v4659 = vrot.slane %v4621, 1
        %v4660 = vsel %vm4637, %v4659, %v4658
        %v4661 = vsel %vm4640, %v4622, %v4660
        %v4662 = vrot.slane %v4623, 7
        %v4663 = vsel %vm4643, %v4662, %v4661
        %v4664 = vrot.slane %v4624, 6
        %v4665 = vsel %vm4646, %v4664, %v4663
        %v4666 = vrot.slane %v4625, 5
        %v4667 = vsel %vm4649, %v4666, %v4665
        %v4668 = vrot.slane %v4626, 4
        %v4669 = vsel %vm4652, %v4668, %v4667
        %v4670 = vrot.slane %v4627, 3
        %v4671 = vsel %vm4655, %v4670, %v4669
        %v4673 = vrot.slane %v4620, 4
        %v4674 = vrot.slane %v4621, 3
        %v4675 = vsel %vm4637, %v4674, %v4673
        %v4676 = vrot.slane %v4622, 2
        %v4677 = vsel %vm4640, %v4676, %v4675
        %v4678 = vrot.slane %v4623, 1
        %v4679 = vsel %vm4643, %v4678, %v4677
        %v4680 = vsel %vm4646, %v4624, %v4679
        %v4681 = vrot.slane %v4625, 7
        %v4682 = vsel %vm4649, %v4681, %v4680
        %v4683 = vrot.slane %v4626, 6
        %v4684 = vsel %vm4652, %v4683, %v4682
        %v4685 = vrot.slane %v4627, 5
        %v4686 = vsel %vm4655, %v4685, %v4684
        %v4688 = vrot.slane %v4620, 6
        %v4689 = vrot.slane %v4621, 5
        %v4690 = vsel %vm4637, %v4689, %v4688
        %v4691 = vrot.slane %v4622, 4
        %v4692 = vsel %vm4640, %v4691, %v4690
        %v4693 = vrot.slane %v4623, 3
        %v4694 = vsel %vm4643, %v4693, %v4692
        %v4695 = vrot.slane %v4624, 2
        %v4696 = vsel %vm4646, %v4695, %v4694
        %v4697 = vrot.slane %v4625, 1
        %v4698 = vsel %vm4649, %v4697, %v4696
        %v4699 = vsel %vm4652, %v4626, %v4698
        %v4700 = vrot.slane %v4627, 7
        %v4701 = vsel %vm4655, %v4700, %v4699
        %v4703 = vld [vmem:[%s4] sm:$0xf]
        %v4705 = vperm.slane %v4703, 0
        %v4706 = vperm.slane %v4703, 1
        %v4707 = vperm.slane %v4703, 2
        %v4708 = vperm.slane %v4703, 3
        %v4713 = vadd.f32 %v4656, %v4705
        %v4714 = vadd.f32 %v4671, %v4706
        %v4715 = vadd.f32 %v4686, %v4707
        %v4716 = vadd.f32 %v4701, %v4708
        %v4717 = vmax.f32 %v4713, 0.0
        %v4718 = vmax.f32 %v4714, 0.0
        %v4719 = vmax.f32 %v4715, 0.0
        %v4720 = vmax.f32 %v4716, 0.0
        %v4721 = vld [vmem:[%s5] sm:$0xff]
        %v4722 = vld [vmem:[%s5 + $0x8] sm:$0xff]
        %v4723 = vld [vmem:[%s5 + $0x10] sm:$0xff]
        %v4724 = vld [vmem:[%s5 + $0x18] sm:$0xff]
        %v4725 = vld [vmem:[%s5 + $0x20] sm:$0xff]
        %v4726 = vld [vmem:[%s5 + $0x28] sm:$0xff]
        %v4727 = vld [vmem:[%s5 + $0x30] sm:$0xff]
        %v4728 = vld [vmem:[%s5 + $0x38] sm:$0xff]
        %v4729 = vld [vmem:[%s5 + $0x40] sm:$0xff]
        %v4730 = vld [vmem:[%s5 + $0x48] sm:$0xff]
        %v4731 = vld [vmem:[%s5 + $0x50] sm:$0xff]
        %v4732 = vld [vmem:[%s5 + $0x58] sm:$0xff]
        %v4733 = vld [vmem:[%s5 + $0x60] sm:$0xff]
        %v4734 = vld [vmem:[%s5 + $0x68] sm:$0xff]
        %v4735 = vld [vmem:[%s5 + $0x70] sm:$0xff]
        %v4736 = vld [vmem:[%s5 + $0x78] sm:$0xff]
        %v4737 = vld [vmem:[%s5 + $0x80] sm:$0xff]
        %v4738 = vld [vmem:[%s5 + $0x88] sm:$0xff]
        %v4739 = vld [vmem:[%s5 + $0x90] sm:$0xff]
        %v4740 = vld [vmem:[%s5 + $0x98] sm:$0xff]
        %v4741 = vld [vmem:[%s5 + $0xa0] sm:$0xff]
        %v4742 = vld [vmem:[%s5 + $0xa8] sm:$0xff]
        %v4743 = vld [vmem:[%s5 + $0xb0] sm:$0xff]
        %v4744 = vld [vmem:[%s5 + $0xb8] sm:$0xff]
        %v4745 = vld [vmem:[%s5 + $0xc0] sm:$0xff]
        %v4746 = vld [vmem:[%s5 + $0xc8] sm:$0xff]
        %v4747 = vld [vmem:[%s5 + $0xd0] sm:$0xff]
        %v4748 = vld [vmem:[%s5 + $0xd8] sm:$0xff]
        %v4749 = vld [vmem:[%s5 + $0xe0] sm:$0xff]
        %v4750 = vld [vmem:[%s5 + $0xe8] sm:$0xff]
        %v4751 = vld [vmem:[%s5 + $0xf0] sm:$0xff]
        %v4752 = vld [vmem:[%s5 + $0xf8] sm:$0xff]
        %v4753 = vld [vmem:[%s5 + $0x100] sm:$0xff]
        %v4754 = vld [vmem:[%s5 + $0x108] sm:$0xff]
        %v4755 = vld [vmem:[%s5 + $0x110] sm:$0xff]
        %v4756 = vld [vmem:[%s5 + $0x118] sm:$0xff]
        %v4757 = vld [vmem:[%s5 + $0x120] sm:$0xff]
        %v4758 = vld [vmem:[%s5 + $0x128] sm:$0xff]
        %v4759 = vld [vmem:[%s5 + $0x130] sm:$0xff]
        %v4760 = vld [vmem:[%s5 + $0x138] sm:$0xff]
        %v4761 = vld [vmem:[%s5 + $0x140] sm:$0xff]
        %v4762 = vld [vmem:[%s5 + $0x148] sm:$0xff]
        %v4763 = vld [vmem:[%s5 + $0x150] sm:$0xff]
        %v4764 = vld [vmem:[%s5 + $0x158] sm:$0xff]
        %v4765 = vld [vmem:[%s5 + $0x160] sm:$0xff]
        %v4766 = vld [vmem:[%s5 + $0x168] sm:$0xff]
        %v4767 = vld [vmem:[%s5 + $0x170] sm:$0xff]
        %v4768 = vld [vmem:[%s5 + $0x178] sm:$0xff]
        %v4769 = vld [vmem:[%s5 + $0x180] sm:$0xff]
        %v4770 = vld [vmem:[%s5 + $0x188] sm:$0xff]
        %v4771 = vld [vmem:[%s5 + $0x190] sm:$0xff]
        %v4772 = vld [vmem:[%s5 + $0x198] sm:$0xff]
        %v4773 = vld [vmem:[%s5 + $0x1a0] sm:$0xff]
        %v4774 = vld [vmem:[%s5 + $0x1a8] sm:$0xff]
        %v4775 = vld [vmem:[%s5 + $0x1b0] sm:$0xff]
        %v4776 = vld [vmem:[%s5 + $0x1b8] sm:$0xff]
        %v4777 = vld [vmem:[%s5 + $0x1c0] sm:$0xff]
        %v4778 = vld [vmem:[%s5 + $0x1c8] sm:$0xff]
        %v4779 = vld [vmem:[%s5 + $0x1d0] sm:$0xff]
        %v4780 = vld [vmem:[%s5 + $0x1d8] sm:$0xff]
        %v4781 = vld [vmem:[%s5 + $0x1e0] sm:$0xff]
        %v4782 = vld [vmem:[%s5 + $0x1e8] sm:$0xff]
        %v4783 = vld [vmem:[%s5 + $0x1f0] sm:$0xff]
        %v4784 = vld [vmem:[%s5 + $0x1f8] sm:$0xff]
        %v4785 = vld [vmem:[%s6] sm:$0x1]
        %v4787 = vperm.slane %v4785, 0
        %4789 = vmatpush.msra.mxu0 %v4736
        %4790 = vmatpush.msra.mxu0 %v4735
        %4791 = vmatpush.msra.mxu0 %v4734
        %4792 = vmatpush.msra.mxu0 %v4733
        %4793 = vmatpush.msra.mxu0 %v4732
        %4794 = vmatpush.msra.mxu0 %v4731
        %4795 = vmatpush.msra.mxu0 %v4730
        %4796 = vmatpush.msra.mxu0 %v4729
        %4797 = vmatpush.msra.mxu0 %v4728
        %4798 = vmatpush.msra.mxu0 %v4727
        %4799 = vmatpush.msra.mxu0 %v4726
        %4800 = vmatpush.msra.mxu0 %v4725
        %4801 = vmatpush.msra.mxu0 %v4724
        %4802 = vmatpush.msra.mxu0 %v4723
        %4803 = vmatpush.msra.mxu0 %v4722
        %4804 = vmatpush.msra.mxu0 %v4721
        %4805 = vmatmul.f32.gmra.mxu0 %v4717
        %v4806 = vpop.f32.mrf.mxu0
        %v4807 = vadd.f32 %v4787, %v4806
        %4808 = vdwg.mxu0
        %4809 = vmatpush.msra.mxu0 %v4752
        %4810 = vmatpush.msra.mxu0 %v4751
        %4811 = vmatpush.msra.mxu0 %v4750
        %4812 = vmatpush.msra.mxu0 %v4749
        %4813 = vmatpush.msra.mxu0 %v4748
        %4814 = vmatpush.msra.mxu0 %v4747
        %4815 = vmatpush.msra.mxu0 %v4746
        %4816 = vmatpush.msra.mxu0 %v4745
        %4817 = vmatpush.msra.mxu0 %v4744
        %4818 = vmatpush.msra.mxu0 %v4743
        %4819 = vmatpush.msra.mxu0 %v4742
        %4820 = vmatpush.msra.mxu0 %v4741
        %4821 = vmatpush.msra.mxu0 %v4740
        %4822 = vmatpush.msra.mxu0 %v4739
        %4823 = vmatpush.msra.mxu0 %v4738
        %4824 = vmatpush.msra.mxu0 %v4737
        %4825 = vmatmul.f32.gmra.mxu0 %v4718
        %v4826 = vpop.f32.mrf.mxu0
        %v4827 = vadd.f32 %v4807, %v4826
        %4828 = vdwg.mxu0
        %4829 = vmatpush.msra.mxu0 %v4768
        %4830 = vmatpush.msra.mxu0 %v4767
        %4831 = vmatpush.msra.mxu0 %v4766
        %4832 = vmatpush.msra.mxu0 %v4765
        %4833 = vmatpush.msra.mxu0 %v4764
        %4834 = vmatpush.msra.mxu0 %v4763
        %4835 = vmatpush.msra.mxu0 %v4762
        %4836 = vmatpush.msra.mxu0 %v4761
        %4837 = vmatpush.msra.mxu0 %v4760
        %4838 = vmatpush.msra.mxu0 %v4759
        %4839 = vmatpush.msra.mxu0 %v4758
        %4840 = vmatpush.msra.mxu0 %v4757
        %4841 = vmatpush.msra.mxu0 %v4756
        %4842 = vmatpush.msra.mxu0 %v4755
        %4843 = vmatpush.msra.mxu0 %v4754
        %4844 = vmatpush.msra.mxu0 %v4753
        %4845 = vmatmul.f32.gmra.mxu0 %v4719
        %v4846 = vpop.f32.mrf.mxu0
        %v4847 = vadd.f32 %v4827, %v4846
        %4848 = vdwg.mxu0
        %4849 = vmatpush.msra.mxu0 %v4784
        %4850 = vmatpush.msra.mxu0 %v4783
        %4851 = vmatpush.msra.mxu0 %v4782
        %4852 = vmatpush.msra.mxu0 %v4781
        %4853 = vmatpush.msra.mxu0 %v4780
        %4854 = vmatpush.msra.mxu0 %v4779
        %4855 = vmatpush.msra.mxu0 %v4778
        %4856 = vmatpush.msra.mxu0 %v4777
        %4857 = vmatpush.msra.mxu0 %v4776
        %4858 = vmatpush.msra.mxu0 %v4775
        %4859 = vmatpush.msra.mxu0 %v4774
        %4860 = vmatpush.msra.mxu0 %v4773
        %4861 = vmatpush.msra.mxu0 %v4772
        %4862 = vmatpush.msra.mxu0 %v4771
        %4863 = vmatpush.msra.mxu0 %v4770
        %4864 = vmatpush.msra.mxu0 %v4769
        %4865 = vmatmul.f32.gmra.mxu0 %v4720
        %v4866 = vpop.f32.mrf.mxu0
        %v4867 = vadd.f32 %v4847, %v4866
        %4868 = vdwg.mxu0
        %vm4869 = vcmask 80896
        %4870 = vst.msk [vmem:[%s274] sm:$0xff] %vm4869, %v4867
        %s4871 = sand.u32 %s181, 1
        %s4872 = scalar_lea.sflag [#allocation3], %s4871
        %s4873 = sand.u32 %s181, 1
        %s4874 = smul.addr %s4873, 8
        %s4875 = scalar_lea.vmem [#allocation2], %s4874
        // Predicated region
        $region49: #{cnn_forward.1} parent=47 // pred_check
          %p4876 = pneg %p191
        $region50: #{cnn_forward.1} parent=47 // pred_check_branch
          %4878 = sbr.rel (%p4876) target = $region52
        $region51: #{cnn_forward.1} parent=47 // pred_region
          %4880 = vsyncadd %s4872, 0
          %s4881 = smul.addr %s21, 8
          %s4882 = scalar_lea.hbm %s7, %s4881
          %s4884 = sshll.u32 %s4875, 4
          %s4885 = int_to_ptr.vmem [resolvable:$true] %s4884
          %s4886 = sshll.u32 %s4882, 4
          %s4887 = int_to_ptr.hbm [resolvable:$true] %s4886
          %4889 = dma.vmem_to_hbm [thread:$0]  %s4885, 128, %s4887, %s4872
        $region52: #{cnn_forward.1} parent=47 // pred_fallthru
          _
      $region48: #{cnn_forward.1} parent=5 // pred_fallthru
        _
      %p4890 = scmp.le.s32.totalorder 2, %s16
      // Predicated region
      $region53: #{cnn_forward.1} parent=5 // pred_check
        %p4891 = pneg %p4890
      $region54: #{cnn_forward.1} parent=5 // pred_check_branch
        %4893 = sbr.rel (%p4891) target = $region56
      $region55: #{cnn_forward.1} parent=5 // pred_region
        %s4894 = ssub.s32 %s16, 2
        // Predicated region
        $region57: #{cnn_forward.1} parent=55 // pred_check
          %p4895 = pneg %p197
        $region58: #{cnn_forward.1} parent=55 // pred_check_branch
          %4897 = sbr.rel (%p4895) target = $region60
        $region59: #{cnn_forward.1} parent=55 // pred_region
          %s4898 = sand.u32 %s182, 1
          %s4899 = scalar_lea.sflag [#allocation3], %s4898
          %s4900 = sand.u32 %s182, 1
          %s4901 = smul.addr %s4900, 8
          %s4902 = scalar_lea.vmem [#allocation2], %s4901
          %4904 = dma.done %s4899, 128
        $region60: #{cnn_forward.1} parent=55 // pred_fallthru
          _
      $region56: #{cnn_forward.1} parent=5 // pred_fallthru
        _
    $region6: #{cnn_forward.1} parent=1 // loop_footer
      %s20 = sadd.s32 1, %s16
    $region7: #{cnn_forward.1} parent=1 // loop_footer_branch
      %15 = sbr.rel target = $region3
    $region8: #{cnn_forward.1} parent=1 // loop_exit
      _
    %4905 = vsyncpa [#allocation3], 1
    %s4906 = scalar_lea.sflag [#allocation3], 1
    %4907 = vsyncpa %s4906, 1

</llo_original>
